<compile_context>
chip_gen: v7x
topology: tpu7x:2x2x1
jax: 0.10.0
libtpu: 0.0.40
codegen_flags: <defaults>
</compile_context>

<pallas_src>
import numpy as np
import jax
import jax.numpy as jnp
from jax import lax
from jax.experimental import pallas as pl
from jax.experimental.pallas import tpu as pltpu


# ---------------- constant 0/1 max-pool selectors (exact) ---------------------
def _row_selectors(h):
    """RS[a][i_out, i_in] = 1  iff  i_in == 2*i_out + a   (a in {0,1})."""
    out = np.zeros((2, h // 2, h), np.float32)
    idx = np.arange(h // 2)
    for a in range(2):
        out[a, idx, 2 * idx + a] = 1.0
    return out


def _col_selectors(w, c):
    """CS[b][j_in*c + ch, j_out*c + ch] = 1  iff  j_in == 2*j_out + b."""
    sel = np.zeros((2, w, w // 2), np.float32)
    idx = np.arange(w // 2)
    for b in range(2):
        sel[b, 2 * idx + b, idx] = 1.0
    eye = np.eye(c, dtype=np.float32)
    return np.stack([np.kron(sel[b], eye) for b in range(2)])


# ---------------- fused conv1+pool -> conv2+pool -> linear+logsoftmax ---------
def make_fused_kernel(h, w, cin, c1, c2):
    h2, w2 = h // 2, w // 2
    h4 = h // 4

    def kernel(x_ref, w1_ref, b1_ref, w2_ref, b2_ref,
               rs1_ref, cs1_ref, rs2_ref, cs2_ref, wh_ref, bl_ref,
               o_ref, s1_ref, s2_ref):
        f32 = jnp.float32

        # Zero-padded halo scratches (zero border == conv padding=1).  Interiors
        # are fully overwritten each step; re-zeroing is only a few vregs and
        # keeps the kernel megacore-safe.
        s1_ref[...] = jnp.zeros_like(s1_ref)
        s2_ref[...] = jnp.zeros_like(s2_ref)
        s1_ref[1:1 + h, cin:cin + w * cin] = x_ref[...]

        # ---- Conv2d(cin->c1, 3x3, pad=1): 9 accumulating MXU dots ------------
        acc1 = jnp.zeros((h, w * c1), f32)
        for t in range(9):
            dh, dw = t // 3, t % 3
            sh = s1_ref[dh:dh + h, dw * cin:(dw + w) * cin]          # (h, w*cin)
            acc1 = acc1 + jnp.dot(sh, w1_ref[t], preferred_element_type=f32)
        y1 = jnp.maximum(acc1 + b1_ref[...], 0.0)                    # (h, w*c1)

        # ---- MaxPool2d(2): exact selection matmuls, all channels at once -----
        r1 = jnp.maximum(jnp.dot(rs1_ref[0], y1, preferred_element_type=f32),
                         jnp.dot(rs1_ref[1], y1, preferred_element_type=f32))
        p1 = jnp.maximum(jnp.dot(r1, cs1_ref[0], preferred_element_type=f32),
                         jnp.dot(r1, cs1_ref[1], preferred_element_type=f32))

        s2_ref[1:1 + h2, c1:c1 + w2 * c1] = p1                       # (h2, w2*c1)

        # ---- Conv2d(c1->c2, 3x3, pad=1) ---------------------------------------
        acc2 = jnp.zeros((h2, w2 * c2), f32)
        for t in range(9):
            dh, dw = t // 3, t % 3
            sh = s2_ref[dh:dh + h2, dw * c1:(dw + w2) * c1]          # (h2, w2*c1)
            acc2 = acc2 + jnp.dot(sh, w2_ref[t], preferred_element_type=f32)
        y2 = jnp.maximum(acc2 + b2_ref[...], 0.0)                    # (h2, w2*c2)

        # ---- MaxPool2d(2) ------------------------------------------------------
        r2 = jnp.maximum(jnp.dot(rs2_ref[0], y2, preferred_element_type=f32),
                         jnp.dot(rs2_ref[1], y2, preferred_element_type=f32))
        p2 = jnp.maximum(jnp.dot(r2, cs2_ref[0], preferred_element_type=f32),
                         jnp.dot(r2, cs2_ref[1], preferred_element_type=f32))
        # p2: (h4, w4*c2) with p2[i, j*c2 + co] == pooled[co, i, j]

        # ---- fused Linear(->10) + LogSoftmax (head weight pre-permuted to the
        #      activation layout -> no in-kernel flatten/relayout) --------------
        logits = bl_ref[...]                                         # (1, 10)
        for i in range(h4):
            logits = logits + jnp.dot(p2[i:i + 1, :], wh_ref[i],
                                      preferred_element_type=f32)
        m = jnp.max(logits, axis=-1, keepdims=True)
        lse = jnp.log(jnp.sum(jnp.exp(logits - m), axis=-1, keepdims=True))
        o_ref[...] = logits - m - lse                                # LogSoftmax dim=1

    return kernel


def _const_spec(arr):
    zero = (0,) * arr.ndim
    return pl.BlockSpec(arr.shape, lambda i: zero)


# ---------------- wrapper -------------------------------------------------------
@jax.jit
def project_network_forward(x, w1, b1, w2, b2, wl, bl):
    """x: (N, Cin, H, W) float32 NCHW — same convention as the PyTorch module."""
    n, cin, h, w = x.shape
    c1, c2 = w1.shape[0], w2.shape[0]
    hp2, wp2 = h // 2, w // 2
    hp4, wp4 = h // 4, w // 4
    n_out = wl.shape[0]
    f32 = jnp.float32

    # ----- layout plumbing (tiny XLA glue) -------------------------------------
    # activations as (rows = H, lanes = W*C, channel minor)
    x_il = jnp.transpose(x, (0, 2, 3, 1)).reshape(n, h, w * cin)

    # conv taps as block-diagonal kron(I_W, tap) tiles -> one MXU dot per tap
    w1t = jnp.transpose(w1, (2, 3, 1, 0)).reshape(9, cin, c1)       # [tap, ci, co]
    w2t = jnp.transpose(w2, (2, 3, 1, 0)).reshape(9, c1, c2)
    w1big = jnp.einsum('jk,tab->tjakb', jnp.eye(w, dtype=f32), w1t
                       ).reshape(9, w * cin, w * c1)
    w2big = jnp.einsum('jk,tab->tjakb', jnp.eye(wp2, dtype=f32), w2t
                       ).reshape(9, wp2 * c1, wp2 * c2)
    b1row = jnp.tile(b1.astype(f32), (w,)).reshape(1, w * c1)
    b2row = jnp.tile(b2.astype(f32), (wp2,)).reshape(1, wp2 * c2)

    # linear weight permuted from torch (co, i, j) flatten order to (i, j*c2+co)
    wh = jnp.transpose(wl.reshape(n_out, c2, hp4, wp4), (2, 3, 1, 0)
                       ).reshape(hp4, wp4 * c2, n_out).astype(f32)
    blrow = bl.reshape(1, n_out).astype(f32)

    # constant 0/1 max-pool selectors (baked at trace time)
    rs1 = jnp.asarray(_row_selectors(h))          # (2, h/2, h)
    cs1 = jnp.asarray(_col_selectors(w, c1))      # (2, w*c1,  w/2*c1)
    rs2 = jnp.asarray(_row_selectors(hp2))        # (2, h/4, h/2)
    cs2 = jnp.asarray(_col_selectors(wp2, c2))    # (2, w/2*c2, w/4*c2)

    # one sample per grid step (>= 2 steps keeps both v7x TensorCores busy at
    # N=2; for large N a batch-blocked variant would amortize per-step overhead)
    out3 = pl.pallas_call(
        make_fused_kernel(h, w, cin, c1, c2),
        grid=(n,),
        in_specs=[
            pl.BlockSpec((None, h, w * cin), lambda i: (i, 0, 0)),
            _const_spec(w1big), _const_spec(b1row),
            _const_spec(w2big), _const_spec(b2row),
            _const_spec(rs1), _const_spec(cs1),
            _const_spec(rs2), _const_spec(cs2),
            _const_spec(wh), _const_spec(blrow),
        ],
        out_specs=pl.BlockSpec((None, 1, n_out), lambda i: (i, 0, 0)),
        out_shape=jax.ShapeDtypeStruct((n, 1, n_out), f32),
        scratch_shapes=[
            pltpu.VMEM((h + 2, (w + 2) * cin), f32),        # conv1 halo
            pltpu.VMEM((hp2 + 2, (wp2 + 2) * c1), f32),     # conv2 halo
        ],
        compiler_params=pltpu.CompilerParams(dimension_semantics=("parallel",)),
    )(x_il, w1big, b1row, w2big, b2row, rs1, cs1, rs2, cs2, wh, blrow)
    return out3.reshape(n, n_out)


# ---------------- pure-JAX reference (correctness check) -----------------------
def reference_forward(x, w1, b1, w2, b2, wl, bl):
    dn = ('NCHW', 'OIHW', 'NCHW')
    hp = lax.Precision.HIGHEST
    y = lax.conv_general_dilated(x, w1, (1, 1), ((1, 1), (1, 1)),
                                 dimension_numbers=dn, precision=hp)
    y = jnp.maximum(y + b1[None, :, None, None], 0.0)
    y = lax.reduce_window(y, -jnp.inf, lax.max, (1, 1, 2, 2), (1, 1, 2, 2), 'VALID')
    y = lax.conv_general_dilated(y, w2, (1, 1), ((1, 1), (1, 1)),
                                 dimension_numbers=dn, precision=hp)
    y = jnp.maximum(y + b2[None, :, None, None], 0.0)
    y = lax.reduce_window(y, -jnp.inf, lax.max, (1, 1, 2, 2), (1, 1, 2, 2), 'VALID')
    f = y.reshape(y.shape[0], -1)
    logits = jnp.dot(f, wl.T, precision=hp) + bl
    return jax.nn.log_softmax(logits, axis=-1)


if __name__ == "__main__":
    N, CIN, S = 2, 4, 16      # batch=2, input_channels=4, input_size=16
    # NOTE: the original module's nn.Linear in_features expression
    # (input_size*input_size/4*16) is inconsistent with the flattened conv
    # output (and is a float).  The forward actually produces 16*(S//4)**2
    # features, which is what we implement.
    feat = 16 * (S // 4) ** 2

    key = jax.random.PRNGKey(0)
    kx, k1, k2, k3, k4, k5, k6 = jax.random.split(key, 7)
    x  = jax.random.normal(kx, (N, CIN, S, S), jnp.float32)
    w1 = jax.random.normal(k1, (8, CIN, 3, 3), jnp.float32) * 0.10   # Conv2d OIHW
    b1 = jax.random.normal(k2, (8,), jnp.float32) * 0.10
    w2 = jax.random.normal(k3, (16, 8, 3, 3), jnp.float32) * 0.05
    b2 = jax.random.normal(k4, (16,), jnp.float32) * 0.05
    wl = jax.random.normal(k5, (10, feat), jnp.float32) * 0.05       # Linear (out, in)
    bl = jax.random.normal(k6, (10,), jnp.float32) * 0.05

    out = project_network_forward(x, w1, b1, w2, b2, wl, bl)
    out = jax.block_until_ready(out)

    ref = reference_forward(x, w1, b1, w2, b2, wl, bl)
    assert out.shape == (N, 10)
    np.testing.assert_allclose(np.asarray(out), np.asarray(ref),
                               atol=2e-3, rtol=2e-3)
    print("KERNEL_OK")
</pallas_src>

<mosaic_0001>
module attributes {stable_mosaic.version = 11 : i64} {
  func.func @kernel(%arg0: i32, %arg1: memref<1x16x64xf32, #tpu.memory_space<vmem>>, %arg2: memref<9x64x128xf32, #tpu.memory_space<vmem>>, %arg3: memref<1x128xf32, #tpu.memory_space<vmem>>, %arg4: memref<9x64x128xf32, #tpu.memory_space<vmem>>, %arg5: memref<1x128xf32, #tpu.memory_space<vmem>>, %arg6: memref<2x8x16xf32, #tpu.memory_space<vmem>>, %arg7: memref<2x128x64xf32, #tpu.memory_space<vmem>>, %arg8: memref<2x4x8xf32, #tpu.memory_space<vmem>>, %arg9: memref<2x128x64xf32, #tpu.memory_space<vmem>>, %arg10: memref<4x64x10xf32, #tpu.memory_space<vmem>>, %arg11: memref<1x10xf32, #tpu.memory_space<vmem>>, %arg12: memref<1x1x10xf32, #tpu.memory_space<vmem>>, %arg13: memref<18x72xf32, #tpu.memory_space<vmem>>, %arg14: memref<10x80xf32, #tpu.memory_space<vmem>>) attributes {dimension_semantics = [#tpu.dimension_semantics<parallel>], iteration_bounds = array<i64: 2>, scalar_prefetch = 0 : i64, scratch_operands = 2 : i64, tpu.core_type = #tpu.core_type<tc>, window_params = [{transform_indices = @transform_0, window_bounds = array<i64: 1, 16, 64>}, {pipeline_mode = #tpu.pipeline_mode<synchronous>, transform_indices = @transform_1, window_bounds = array<i64: 9, 64, 128>}, {pipeline_mode = #tpu.pipeline_mode<synchronous>, transform_indices = @transform_2, window_bounds = array<i64: 1, 128>}, {pipeline_mode = #tpu.pipeline_mode<synchronous>, transform_indices = @transform_3, window_bounds = array<i64: 9, 64, 128>}, {pipeline_mode = #tpu.pipeline_mode<synchronous>, transform_indices = @transform_4, window_bounds = array<i64: 1, 128>}, {pipeline_mode = #tpu.pipeline_mode<synchronous>, transform_indices = @transform_5, window_bounds = array<i64: 2, 8, 16>}, {pipeline_mode = #tpu.pipeline_mode<synchronous>, transform_indices = @transform_6, window_bounds = array<i64: 2, 128, 64>}, {pipeline_mode = #tpu.pipeline_mode<synchronous>, transform_indices = @transform_7, window_bounds = array<i64: 2, 4, 8>}, {pipeline_mode = #tpu.pipeline_mode<synchronous>, transform_indices = @transform_8, window_bounds = array<i64: 2, 128, 64>}, {pipeline_mode = #tpu.pipeline_mode<synchronous>, transform_indices = @transform_9, window_bounds = array<i64: 4, 64, 10>}, {pipeline_mode = #tpu.pipeline_mode<synchronous>, transform_indices = @transform_10, window_bounds = array<i64: 1, 10>}, {transform_indices = @transform_11, window_bounds = array<i64: 1, 1, 10>}]} {
    %cst = arith.constant 0.000000e+00 : f32
    %0 = vector.broadcast %cst : f32 to vector<18x72xf32>
    %c0 = arith.constant 0 : index
    %c0_0 = arith.constant 0 : index
    %1 = vector.load %arg13[%c0, %c0_0] : memref<18x72xf32, #tpu.memory_space<vmem>>, vector<18x72xf32>
    tpu.vector_store %arg13[%c0, %c0_0], %0 {strides = array<i32>} : memref<18x72xf32, #tpu.memory_space<vmem>>, vector<18x72xf32>,
    %cst_1 = arith.constant 0.000000e+00 : f32
    %2 = vector.broadcast %cst_1 : f32 to vector<10x80xf32>
    %c0_2 = arith.constant 0 : index
    %c0_3 = arith.constant 0 : index
    %3 = vector.load %arg14[%c0_2, %c0_3] : memref<10x80xf32, #tpu.memory_space<vmem>>, vector<10x80xf32>
    tpu.vector_store %arg14[%c0_2, %c0_3], %2 {strides = array<i32>} : memref<10x80xf32, #tpu.memory_space<vmem>>, vector<10x80xf32>,
    %c0_4 = arith.constant 0 : index
    %c0_5 = arith.constant 0 : index
    %c0_6 = arith.constant 0 : index
    %4 = vector.load %arg1[%c0_4, %c0_5, %c0_6] : memref<1x16x64xf32, #tpu.memory_space<vmem>>, vector<1x16x64xf32>
    %5 = vector.shape_cast %4 : vector<1x16x64xf32> to vector<16x64xf32>
    %c1 = arith.constant 1 : index
    %c4 = arith.constant 4 : index
    %6 = vector.load %arg13[%c1, %c4] : memref<18x72xf32, #tpu.memory_space<vmem>>, vector<16x64xf32>
    tpu.vector_store %arg13[%c1, %c4], %5 {strides = array<i32>} : memref<18x72xf32, #tpu.memory_space<vmem>>, vector<16x64xf32>,
    %cst_7 = arith.constant 0.000000e+00 : f32
    %7 = vector.broadcast %cst_7 : f32 to vector<16x128xf32>
    %c0_8 = arith.constant 0 : index
    %c0_9 = arith.constant 0 : index
    %8 = vector.load %arg13[%c0_8, %c0_9] : memref<18x72xf32, #tpu.memory_space<vmem>>, vector<16x64xf32>
    %c0_10 = arith.constant 0 : index
    %c0_11 = arith.constant 0 : index
    %c0_12 = arith.constant 0 : index
    %9 = vector.load %arg2[%c0_10, %c0_11, %c0_12] : memref<9x64x128xf32, #tpu.memory_space<vmem>>, vector<1x64x128xf32>
    %10 = vector.shape_cast %9 : vector<1x64x128xf32> to vector<64x128xf32>
    %cst_13 = arith.constant dense<0.000000e+00> : vector<16x128xf32>
    %11 = tpu.matmul %8, %10, %cst_13 {dimension_numbers = #tpu.dot_dimension_numbers<[1], [0], [0], [1], [0, 0, 1, 1], [], []>} : vector<16x64xf32>, vector<64x128xf32>, vector<16x128xf32> -> vector<16x128xf32>
    %12 = arith.addf %7, %11 : vector<16x128xf32>
    %c0_14 = arith.constant 0 : index
    %c4_15 = arith.constant 4 : index
    %13 = vector.load %arg13[%c0_14, %c4_15] : memref<18x72xf32, #tpu.memory_space<vmem>>, vector<16x64xf32>
    %c1_16 = arith.constant 1 : index
    %c0_17 = arith.constant 0 : index
    %c0_18 = arith.constant 0 : index
    %14 = vector.load %arg2[%c1_16, %c0_17, %c0_18] : memref<9x64x128xf32, #tpu.memory_space<vmem>>, vector<1x64x128xf32>
    %15 = vector.shape_cast %14 : vector<1x64x128xf32> to vector<64x128xf32>
    %cst_19 = arith.constant dense<0.000000e+00> : vector<16x128xf32>
    %16 = tpu.matmul %13, %15, %cst_19 {dimension_numbers = #tpu.dot_dimension_numbers<[1], [0], [0], [1], [0, 0, 1, 1], [], []>} : vector<16x64xf32>, vector<64x128xf32>, vector<16x128xf32> -> vector<16x128xf32>
    %17 = arith.addf %12, %16 : vector<16x128xf32>
    %c0_20 = arith.constant 0 : index
    %c8 = arith.constant 8 : index
    %18 = vector.load %arg13[%c0_20, %c8] : memref<18x72xf32, #tpu.memory_space<vmem>>, vector<16x64xf32>
    %c2 = arith.constant 2 : index
    %c0_21 = arith.constant 0 : index
    %c0_22 = arith.constant 0 : index
    %19 = vector.load %arg2[%c2, %c0_21, %c0_22] : memref<9x64x128xf32, #tpu.memory_space<vmem>>, vector<1x64x128xf32>
    %20 = vector.shape_cast %19 : vector<1x64x128xf32> to vector<64x128xf32>
    %cst_23 = arith.constant dense<0.000000e+00> : vector<16x128xf32>
    %21 = tpu.matmul %18, %20, %cst_23 {dimension_numbers = #tpu.dot_dimension_numbers<[1], [0], [0], [1], [0, 0, 1, 1], [], []>} : vector<16x64xf32>, vector<64x128xf32>, vector<16x128xf32> -> vector<16x128xf32>
    %22 = arith.addf %17, %21 : vector<16x128xf32>
    %c1_24 = arith.constant 1 : index
    %c0_25 = arith.constant 0 : index
    %23 = vector.load %arg13[%c1_24, %c0_25] : memref<18x72xf32, #tpu.memory_space<vmem>>, vector<16x64xf32>
    %c3 = arith.constant 3 : index
    %c0_26 = arith.constant 0 : index
    %c0_27 = arith.constant 0 : index
    %24 = vector.load %arg2[%c3, %c0_26, %c0_27] : memref<9x64x128xf32, #tpu.memory_space<vmem>>, vector<1x64x128xf32>
    %25 = vector.shape_cast %24 : vector<1x64x128xf32> to vector<64x128xf32>
    %cst_28 = arith.constant dense<0.000000e+00> : vector<16x128xf32>
    %26 = tpu.matmul %23, %25, %cst_28 {dimension_numbers = #tpu.dot_dimension_numbers<[1], [0], [0], [1], [0, 0, 1, 1], [], []>} : vector<16x64xf32>, vector<64x128xf32>, vector<16x128xf32> -> vector<16x128xf32>
    %27 = arith.addf %22, %26 : vector<16x128xf32>
    %c1_29 = arith.constant 1 : index
    %c4_30 = arith.constant 4 : index
    %28 = vector.load %arg13[%c1_29, %c4_30] : memref<18x72xf32, #tpu.memory_space<vmem>>, vector<16x64xf32>
    %c4_31 = arith.constant 4 : index
    %c0_32 = arith.constant 0 : index
    %c0_33 = arith.constant 0 : index
    %29 = vector.load %arg2[%c4_31, %c0_32, %c0_33] : memref<9x64x128xf32, #tpu.memory_space<vmem>>, vector<1x64x128xf32>
    %30 = vector.shape_cast %29 : vector<1x64x128xf32> to vector<64x128xf32>
    %cst_34 = arith.constant dense<0.000000e+00> : vector<16x128xf32>
    %31 = tpu.matmul %28, %30, %cst_34 {dimension_numbers = #tpu.dot_dimension_numbers<[1], [0], [0], [1], [0, 0, 1, 1], [], []>} : vector<16x64xf32>, vector<64x128xf32>, vector<16x128xf32> -> vector<16x128xf32>
    %32 = arith.addf %27, %31 : vector<16x128xf32>
    %c1_35 = arith.constant 1 : index
    %c8_36 = arith.constant 8 : index
    %33 = vector.load %arg13[%c1_35, %c8_36] : memref<18x72xf32, #tpu.memory_space<vmem>>, vector<16x64xf32>
    %c5 = arith.constant 5 : index
    %c0_37 = arith.constant 0 : index
    %c0_38 = arith.constant 0 : index
    %34 = vector.load %arg2[%c5, %c0_37, %c0_38] : memref<9x64x128xf32, #tpu.memory_space<vmem>>, vector<1x64x128xf32>
    %35 = vector.shape_cast %34 : vector<1x64x128xf32> to vector<64x128xf32>
    %cst_39 = arith.constant dense<0.000000e+00> : vector<16x128xf32>
    %36 = tpu.matmul %33, %35, %cst_39 {dimension_numbers = #tpu.dot_dimension_numbers<[1], [0], [0], [1], [0, 0, 1, 1], [], []>} : vector<16x64xf32>, vector<64x128xf32>, vector<16x128xf32> -> vector<16x128xf32>
    %37 = arith.addf %32, %36 : vector<16x128xf32>
    %c2_40 = arith.constant 2 : index
    %c0_41 = arith.constant 0 : index
    %38 = vector.load %arg13[%c2_40, %c0_41] : memref<18x72xf32, #tpu.memory_space<vmem>>, vector<16x64xf32>
    %c6 = arith.constant 6 : index
    %c0_42 = arith.constant 0 : index
    %c0_43 = arith.constant 0 : index
    %39 = vector.load %arg2[%c6, %c0_42, %c0_43] : memref<9x64x128xf32, #tpu.memory_space<vmem>>, vector<1x64x128xf32>
    %40 = vector.shape_cast %39 : vector<1x64x128xf32> to vector<64x128xf32>
    %cst_44 = arith.constant dense<0.000000e+00> : vector<16x128xf32>
    %41 = tpu.matmul %38, %40, %cst_44 {dimension_numbers = #tpu.dot_dimension_numbers<[1], [0], [0], [1], [0, 0, 1, 1], [], []>} : vector<16x64xf32>, vector<64x128xf32>, vector<16x128xf32> -> vector<16x128xf32>
    %42 = arith.addf %37, %41 : vector<16x128xf32>
    %c2_45 = arith.constant 2 : index
    %c4_46 = arith.constant 4 : index
    %43 = vector.load %arg13[%c2_45, %c4_46] : memref<18x72xf32, #tpu.memory_space<vmem>>, vector<16x64xf32>
    %c7 = arith.constant 7 : index
    %c0_47 = arith.constant 0 : index
    %c0_48 = arith.constant 0 : index
    %44 = vector.load %arg2[%c7, %c0_47, %c0_48] : memref<9x64x128xf32, #tpu.memory_space<vmem>>, vector<1x64x128xf32>
    %45 = vector.shape_cast %44 : vector<1x64x128xf32> to vector<64x128xf32>
    %cst_49 = arith.constant dense<0.000000e+00> : vector<16x128xf32>
    %46 = tpu.matmul %43, %45, %cst_49 {dimension_numbers = #tpu.dot_dimension_numbers<[1], [0], [0], [1], [0, 0, 1, 1], [], []>} : vector<16x64xf32>, vector<64x128xf32>, vector<16x128xf32> -> vector<16x128xf32>
    %47 = arith.addf %42, %46 : vector<16x128xf32>
    %c2_50 = arith.constant 2 : index
    %c8_51 = arith.constant 8 : index
    %48 = vector.load %arg13[%c2_50, %c8_51] : memref<18x72xf32, #tpu.memory_space<vmem>>, vector<16x64xf32>
    %c8_52 = arith.constant 8 : index
    %c0_53 = arith.constant 0 : index
    %c0_54 = arith.constant 0 : index
    %49 = vector.load %arg2[%c8_52, %c0_53, %c0_54] : memref<9x64x128xf32, #tpu.memory_space<vmem>>, vector<1x64x128xf32>
    %50 = vector.shape_cast %49 : vector<1x64x128xf32> to vector<64x128xf32>
    %cst_55 = arith.constant dense<0.000000e+00> : vector<16x128xf32>
    %51 = tpu.matmul %48, %50, %cst_55 {dimension_numbers = #tpu.dot_dimension_numbers<[1], [0], [0], [1], [0, 0, 1, 1], [], []>} : vector<16x64xf32>, vector<64x128xf32>, vector<16x128xf32> -> vector<16x128xf32>
    %52 = arith.addf %47, %51 : vector<16x128xf32>
    %c0_56 = arith.constant 0 : index
    %c0_57 = arith.constant 0 : index
    %53 = vector.load %arg3[%c0_56, %c0_57] : memref<1x128xf32, #tpu.memory_space<vmem>>, vector<1x128xf32>
    %54 = vector.broadcast %53 : vector<1x128xf32> to vector<16x128xf32>
    %55 = arith.addf %52, %54 : vector<16x128xf32>
    %cst_58 = arith.constant 0.000000e+00 : f32
    %56 = vector.broadcast %cst_58 : f32 to vector<16x128xf32>
    %57 = arith.maximumf %55, %56 : vector<16x128xf32>
    %c0_59 = arith.constant 0 : index
    %c0_60 = arith.constant 0 : index
    %c0_61 = arith.constant 0 : index
    %58 = vector.load %arg6[%c0_59, %c0_60, %c0_61] : memref<2x8x16xf32, #tpu.memory_space<vmem>>, vector<1x8x16xf32>
    %59 = vector.shape_cast %58 : vector<1x8x16xf32> to vector<8x16xf32>
    %cst_62 = arith.constant dense<0.000000e+00> : vector<8x128xf32>
    %60 = tpu.matmul %59, %57, %cst_62 {dimension_numbers = #tpu.dot_dimension_numbers<[1], [0], [0], [1], [0, 0, 1, 1], [], []>} : vector<8x16xf32>, vector<16x128xf32>, vector<8x128xf32> -> vector<8x128xf32>
    %c1_63 = arith.constant 1 : index
    %c0_64 = arith.constant 0 : index
    %c0_65 = arith.constant 0 : index
    %61 = vector.load %arg6[%c1_63, %c0_64, %c0_65] : memref<2x8x16xf32, #tpu.memory_space<vmem>>, vector<1x8x16xf32>
    %62 = vector.shape_cast %61 : vector<1x8x16xf32> to vector<8x16xf32>
    %cst_66 = arith.constant dense<0.000000e+00> : vector<8x128xf32>
    %63 = tpu.matmul %62, %57, %cst_66 {dimension_numbers = #tpu.dot_dimension_numbers<[1], [0], [0], [1], [0, 0, 1, 1], [], []>} : vector<8x16xf32>, vector<16x128xf32>, vector<8x128xf32> -> vector<8x128xf32>
    %64 = arith.maximumf %60, %63 : vector<8x128xf32>
    %c0_67 = arith.constant 0 : index
    %c0_68 = arith.constant 0 : index
    %c0_69 = arith.constant 0 : index
    %65 = vector.load %arg7[%c0_67, %c0_68, %c0_69] : memref<2x128x64xf32, #tpu.memory_space<vmem>>, vector<1x128x64xf32>
    %66 = vector.shape_cast %65 : vector<1x128x64xf32> to vector<128x64xf32>
    %cst_70 = arith.constant dense<0.000000e+00> : vector<8x64xf32>
    %67 = tpu.matmul %64, %66, %cst_70 {dimension_numbers = #tpu.dot_dimension_numbers<[1], [0], [0], [1], [0, 0, 1, 1], [], []>} : vector<8x128xf32>, vector<128x64xf32>, vector<8x64xf32> -> vector<8x64xf32>
    %c1_71 = arith.constant 1 : index
    %c0_72 = arith.constant 0 : index
    %c0_73 = arith.constant 0 : index
    %68 = vector.load %arg7[%c1_71, %c0_72, %c0_73] : memref<2x128x64xf32, #tpu.memory_space<vmem>>, vector<1x128x64xf32>
    %69 = vector.shape_cast %68 : vector<1x128x64xf32> to vector<128x64xf32>
    %cst_74 = arith.constant dense<0.000000e+00> : vector<8x64xf32>
    %70 = tpu.matmul %64, %69, %cst_74 {dimension_numbers = #tpu.dot_dimension_numbers<[1], [0], [0], [1], [0, 0, 1, 1], [], []>} : vector<8x128xf32>, vector<128x64xf32>, vector<8x64xf32> -> vector<8x64xf32>
    %71 = arith.maximumf %67, %70 : vector<8x64xf32>
    %c1_75 = arith.constant 1 : index
    %c8_76 = arith.constant 8 : index
    %72 = vector.load %arg14[%c1_75, %c8_76] : memref<10x80xf32, #tpu.memory_space<vmem>>, vector<8x64xf32>
    tpu.vector_store %arg14[%c1_75, %c8_76], %71 {strides = array<i32>} : memref<10x80xf32, #tpu.memory_space<vmem>>, vector<8x64xf32>,
    %cst_77 = arith.constant 0.000000e+00 : f32
    %73 = vector.broadcast %cst_77 : f32 to vector<8x128xf32>
    %c0_78 = arith.constant 0 : index
    %c0_79 = arith.constant 0 : index
    %74 = vector.load %arg14[%c0_78, %c0_79] : memref<10x80xf32, #tpu.memory_space<vmem>>, vector<8x64xf32>
    %c0_80 = arith.constant 0 : index
    %c0_81 = arith.constant 0 : index
    %c0_82 = arith.constant 0 : index
    %75 = vector.load %arg4[%c0_80, %c0_81, %c0_82] : memref<9x64x128xf32, #tpu.memory_space<vmem>>, vector<1x64x128xf32>
    %76 = vector.shape_cast %75 : vector<1x64x128xf32> to vector<64x128xf32>
    %cst_83 = arith.constant dense<0.000000e+00> : vector<8x128xf32>
    %77 = tpu.matmul %74, %76, %cst_83 {dimension_numbers = #tpu.dot_dimension_numbers<[1], [0], [0], [1], [0, 0, 1, 1], [], []>} : vector<8x64xf32>, vector<64x128xf32>, vector<8x128xf32> -> vector<8x128xf32>
    %78 = arith.addf %73, %77 : vector<8x128xf32>
    %c0_84 = arith.constant 0 : index
    %c8_85 = arith.constant 8 : index
    %79 = vector.load %arg14[%c0_84, %c8_85] : memref<10x80xf32, #tpu.memory_space<vmem>>, vector<8x64xf32>
    %c1_86 = arith.constant 1 : index
    %c0_87 = arith.constant 0 : index
    %c0_88 = arith.constant 0 : index
    %80 = vector.load %arg4[%c1_86, %c0_87, %c0_88] : memref<9x64x128xf32, #tpu.memory_space<vmem>>, vector<1x64x128xf32>
    %81 = vector.shape_cast %80 : vector<1x64x128xf32> to vector<64x128xf32>
    %cst_89 = arith.constant dense<0.000000e+00> : vector<8x128xf32>
    %82 = tpu.matmul %79, %81, %cst_89 {dimension_numbers = #tpu.dot_dimension_numbers<[1], [0], [0], [1], [0, 0, 1, 1], [], []>} : vector<8x64xf32>, vector<64x128xf32>, vector<8x128xf32> -> vector<8x128xf32>
    %83 = arith.addf %78, %82 : vector<8x128xf32>
    %c0_90 = arith.constant 0 : index
    %c16 = arith.constant 16 : index
    %84 = vector.load %arg14[%c0_90, %c16] : memref<10x80xf32, #tpu.memory_space<vmem>>, vector<8x64xf32>
    %c2_91 = arith.constant 2 : index
    %c0_92 = arith.constant 0 : index
    %c0_93 = arith.constant 0 : index
    %85 = vector.load %arg4[%c2_91, %c0_92, %c0_93] : memref<9x64x128xf32, #tpu.memory_space<vmem>>, vector<1x64x128xf32>
    %86 = vector.shape_cast %85 : vector<1x64x128xf32> to vector<64x128xf32>
    %cst_94 = arith.constant dense<0.000000e+00> : vector<8x128xf32>
    %87 = tpu.matmul %84, %86, %cst_94 {dimension_numbers = #tpu.dot_dimension_numbers<[1], [0], [0], [1], [0, 0, 1, 1], [], []>} : vector<8x64xf32>, vector<64x128xf32>, vector<8x128xf32> -> vector<8x128xf32>
    %88 = arith.addf %83, %87 : vector<8x128xf32>
    %c1_95 = arith.constant 1 : index
    %c0_96 = arith.constant 0 : index
    %89 = vector.load %arg14[%c1_95, %c0_96] : memref<10x80xf32, #tpu.memory_space<vmem>>, vector<8x64xf32>
    %c3_97 = arith.constant 3 : index
    %c0_98 = arith.constant 0 : index
    %c0_99 = arith.constant 0 : index
    %90 = vector.load %arg4[%c3_97, %c0_98, %c0_99] : memref<9x64x128xf32, #tpu.memory_space<vmem>>, vector<1x64x128xf32>
    %91 = vector.shape_cast %90 : vector<1x64x128xf32> to vector<64x128xf32>
    %cst_100 = arith.constant dense<0.000000e+00> : vector<8x128xf32>
    %92 = tpu.matmul %89, %91, %cst_100 {dimension_numbers = #tpu.dot_dimension_numbers<[1], [0], [0], [1], [0, 0, 1, 1], [], []>} : vector<8x64xf32>, vector<64x128xf32>, vector<8x128xf32> -> vector<8x128xf32>
    %93 = arith.addf %88, %92 : vector<8x128xf32>
    %c1_101 = arith.constant 1 : index
    %c8_102 = arith.constant 8 : index
    %94 = vector.load %arg14[%c1_101, %c8_102] : memref<10x80xf32, #tpu.memory_space<vmem>>, vector<8x64xf32>
    %c4_103 = arith.constant 4 : index
    %c0_104 = arith.constant 0 : index
    %c0_105 = arith.constant 0 : index
    %95 = vector.load %arg4[%c4_103, %c0_104, %c0_105] : memref<9x64x128xf32, #tpu.memory_space<vmem>>, vector<1x64x128xf32>
    %96 = vector.shape_cast %95 : vector<1x64x128xf32> to vector<64x128xf32>
    %cst_106 = arith.constant dense<0.000000e+00> : vector<8x128xf32>
    %97 = tpu.matmul %94, %96, %cst_106 {dimension_numbers = #tpu.dot_dimension_numbers<[1], [0], [0], [1], [0, 0, 1, 1], [], []>} : vector<8x64xf32>, vector<64x128xf32>, vector<8x128xf32> -> vector<8x128xf32>
    %98 = arith.addf %93, %97 : vector<8x128xf32>
    %c1_107 = arith.constant 1 : index
    %c16_108 = arith.constant 16 : index
    %99 = vector.load %arg14[%c1_107, %c16_108] : memref<10x80xf32, #tpu.memory_space<vmem>>, vector<8x64xf32>
    %c5_109 = arith.constant 5 : index
    %c0_110 = arith.constant 0 : index
    %c0_111 = arith.constant 0 : index
    %100 = vector.load %arg4[%c5_109, %c0_110, %c0_111] : memref<9x64x128xf32, #tpu.memory_space<vmem>>, vector<1x64x128xf32>
    %101 = vector.shape_cast %100 : vector<1x64x128xf32> to vector<64x128xf32>
    %cst_112 = arith.constant dense<0.000000e+00> : vector<8x128xf32>
    %102 = tpu.matmul %99, %101, %cst_112 {dimension_numbers = #tpu.dot_dimension_numbers<[1], [0], [0], [1], [0, 0, 1, 1], [], []>} : vector<8x64xf32>, vector<64x128xf32>, vector<8x128xf32> -> vector<8x128xf32>
    %103 = arith.addf %98, %102 : vector<8x128xf32>
    %c2_113 = arith.constant 2 : index
    %c0_114 = arith.constant 0 : index
    %104 = vector.load %arg14[%c2_113, %c0_114] : memref<10x80xf32, #tpu.memory_space<vmem>>, vector<8x64xf32>
    %c6_115 = arith.constant 6 : index
    %c0_116 = arith.constant 0 : index
    %c0_117 = arith.constant 0 : index
    %105 = vector.load %arg4[%c6_115, %c0_116, %c0_117] : memref<9x64x128xf32, #tpu.memory_space<vmem>>, vector<1x64x128xf32>
    %106 = vector.shape_cast %105 : vector<1x64x128xf32> to vector<64x128xf32>
    %cst_118 = arith.constant dense<0.000000e+00> : vector<8x128xf32>
    %107 = tpu.matmul %104, %106, %cst_118 {dimension_numbers = #tpu.dot_dimension_numbers<[1], [0], [0], [1], [0, 0, 1, 1], [], []>} : vector<8x64xf32>, vector<64x128xf32>, vector<8x128xf32> -> vector<8x128xf32>
    %108 = arith.addf %103, %107 : vector<8x128xf32>
    %c2_119 = arith.constant 2 : index
    %c8_120 = arith.constant 8 : index
    %109 = vector.load %arg14[%c2_119, %c8_120] : memref<10x80xf32, #tpu.memory_space<vmem>>, vector<8x64xf32>
    %c7_121 = arith.constant 7 : index
    %c0_122 = arith.constant 0 : index
    %c0_123 = arith.constant 0 : index
    %110 = vector.load %arg4[%c7_121, %c0_122, %c0_123] : memref<9x64x128xf32, #tpu.memory_space<vmem>>, vector<1x64x128xf32>
    %111 = vector.shape_cast %110 : vector<1x64x128xf32> to vector<64x128xf32>
    %cst_124 = arith.constant dense<0.000000e+00> : vector<8x128xf32>
    %112 = tpu.matmul %109, %111, %cst_124 {dimension_numbers = #tpu.dot_dimension_numbers<[1], [0], [0], [1], [0, 0, 1, 1], [], []>} : vector<8x64xf32>, vector<64x128xf32>, vector<8x128xf32> -> vector<8x128xf32>
    %113 = arith.addf %108, %112 : vector<8x128xf32>
    %c2_125 = arith.constant 2 : index
    %c16_126 = arith.constant 16 : index
    %114 = vector.load %arg14[%c2_125, %c16_126] : memref<10x80xf32, #tpu.memory_space<vmem>>, vector<8x64xf32>
    %c8_127 = arith.constant 8 : index
    %c0_128 = arith.constant 0 : index
    %c0_129 = arith.constant 0 : index
    %115 = vector.load %arg4[%c8_127, %c0_128, %c0_129] : memref<9x64x128xf32, #tpu.memory_space<vmem>>, vector<1x64x128xf32>
    %116 = vector.shape_cast %115 : vector<1x64x128xf32> to vector<64x128xf32>
    %cst_130 = arith.constant dense<0.000000e+00> : vector<8x128xf32>
    %117 = tpu.matmul %114, %116, %cst_130 {dimension_numbers = #tpu.dot_dimension_numbers<[1], [0], [0], [1], [0, 0, 1, 1], [], []>} : vector<8x64xf32>, vector<64x128xf32>, vector<8x128xf32> -> vector<8x128xf32>
    %118 = arith.addf %113, %117 : vector<8x128xf32>
    %c0_131 = arith.constant 0 : index
    %c0_132 = arith.constant 0 : index
    %119 = vector.load %arg5[%c0_131, %c0_132] : memref<1x128xf32, #tpu.memory_space<vmem>>, vector<1x128xf32>
    %120 = vector.broadcast %119 : vector<1x128xf32> to vector<8x128xf32>
    %121 = arith.addf %118, %120 : vector<8x128xf32>
    %cst_133 = arith.constant 0.000000e+00 : f32
    %122 = vector.broadcast %cst_133 : f32 to vector<8x128xf32>
    %123 = arith.maximumf %121, %122 : vector<8x128xf32>
    %c0_134 = arith.constant 0 : index
    %c0_135 = arith.constant 0 : index
    %c0_136 = arith.constant 0 : index
    %124 = vector.load %arg8[%c0_134, %c0_135, %c0_136] : memref<2x4x8xf32, #tpu.memory_space<vmem>>, vector<1x4x8xf32>
    %125 = vector.shape_cast %124 : vector<1x4x8xf32> to vector<4x8xf32>
    %cst_137 = arith.constant dense<0.000000e+00> : vector<4x128xf32>
    %126 = tpu.matmul %125, %123, %cst_137 {dimension_numbers = #tpu.dot_dimension_numbers<[1], [0], [0], [1], [0, 0, 1, 1], [], []>} : vector<4x8xf32>, vector<8x128xf32>, vector<4x128xf32> -> vector<4x128xf32>
    %c1_138 = arith.constant 1 : index
    %c0_139 = arith.constant 0 : index
    %c0_140 = arith.constant 0 : index
    %127 = vector.load %arg8[%c1_138, %c0_139, %c0_140] : memref<2x4x8xf32, #tpu.memory_space<vmem>>, vector<1x4x8xf32>
    %128 = vector.shape_cast %127 : vector<1x4x8xf32> to vector<4x8xf32>
    %cst_141 = arith.constant dense<0.000000e+00> : vector<4x128xf32>
    %129 = tpu.matmul %128, %123, %cst_141 {dimension_numbers = #tpu.dot_dimension_numbers<[1], [0], [0], [1], [0, 0, 1, 1], [], []>} : vector<4x8xf32>, vector<8x128xf32>, vector<4x128xf32> -> vector<4x128xf32>
    %130 = arith.maximumf %126, %129 : vector<4x128xf32>
    %c0_142 = arith.constant 0 : index
    %c0_143 = arith.constant 0 : index
    %c0_144 = arith.constant 0 : index
    %131 = vector.load %arg9[%c0_142, %c0_143, %c0_144] : memref<2x128x64xf32, #tpu.memory_space<vmem>>, vector<1x128x64xf32>
    %132 = vector.shape_cast %131 : vector<1x128x64xf32> to vector<128x64xf32>
    %cst_145 = arith.constant dense<0.000000e+00> : vector<4x64xf32>
    %133 = tpu.matmul %130, %132, %cst_145 {dimension_numbers = #tpu.dot_dimension_numbers<[1], [0], [0], [1], [0, 0, 1, 1], [], []>} : vector<4x128xf32>, vector<128x64xf32>, vector<4x64xf32> -> vector<4x64xf32>
    %c1_146 = arith.constant 1 : index
    %c0_147 = arith.constant 0 : index
    %c0_148 = arith.constant 0 : index
    %134 = vector.load %arg9[%c1_146, %c0_147, %c0_148] : memref<2x128x64xf32, #tpu.memory_space<vmem>>, vector<1x128x64xf32>
    %135 = vector.shape_cast %134 : vector<1x128x64xf32> to vector<128x64xf32>
    %cst_149 = arith.constant dense<0.000000e+00> : vector<4x64xf32>
    %136 = tpu.matmul %130, %135, %cst_149 {dimension_numbers = #tpu.dot_dimension_numbers<[1], [0], [0], [1], [0, 0, 1, 1], [], []>} : vector<4x128xf32>, vector<128x64xf32>, vector<4x64xf32> -> vector<4x64xf32>
    %137 = arith.maximumf %133, %136 : vector<4x64xf32>
    %c0_150 = arith.constant 0 : index
    %c0_151 = arith.constant 0 : index
    %138 = vector.load %arg11[%c0_150, %c0_151] : memref<1x10xf32, #tpu.memory_space<vmem>>, vector<1x10xf32>
    %139 = vector.extract_strided_slice %137 {offsets = [0, 0], sizes = [1, 64], strides = [1, 1]} : vector<4x64xf32> to vector<1x64xf32>
    %c0_152 = arith.constant 0 : index
    %c0_153 = arith.constant 0 : index
    %c0_154 = arith.constant 0 : index
    %140 = vector.load %arg10[%c0_152, %c0_153, %c0_154] : memref<4x64x10xf32, #tpu.memory_space<vmem>>, vector<1x64x10xf32>
    %141 = vector.shape_cast %140 : vector<1x64x10xf32> to vector<64x10xf32>
    %cst_155 = arith.constant dense<0.000000e+00> : vector<1x10xf32>
    %142 = tpu.matmul %139, %141, %cst_155 {dimension_numbers = #tpu.dot_dimension_numbers<[1], [0], [0], [1], [0, 0, 1, 1], [], []>} : vector<1x64xf32>, vector<64x10xf32>, vector<1x10xf32> -> vector<1x10xf32>
    %143 = arith.addf %138, %142 : vector<1x10xf32>
    %144 = vector.extract_strided_slice %137 {offsets = [1, 0], sizes = [1, 64], strides = [1, 1]} : vector<4x64xf32> to vector<1x64xf32>
    %c1_156 = arith.constant 1 : index
    %c0_157 = arith.constant 0 : index
    %c0_158 = arith.constant 0 : index
    %145 = vector.load %arg10[%c1_156, %c0_157, %c0_158] : memref<4x64x10xf32, #tpu.memory_space<vmem>>, vector<1x64x10xf32>
    %146 = vector.shape_cast %145 : vector<1x64x10xf32> to vector<64x10xf32>
    %cst_159 = arith.constant dense<0.000000e+00> : vector<1x10xf32>
    %147 = tpu.matmul %144, %146, %cst_159 {dimension_numbers = #tpu.dot_dimension_numbers<[1], [0], [0], [1], [0, 0, 1, 1], [], []>} : vector<1x64xf32>, vector<64x10xf32>, vector<1x10xf32> -> vector<1x10xf32>
    %148 = arith.addf %143, %147 : vector<1x10xf32>
    %149 = vector.extract_strided_slice %137 {offsets = [2, 0], sizes = [1, 64], strides = [1, 1]} : vector<4x64xf32> to vector<1x64xf32>
    %c2_160 = arith.constant 2 : index
    %c0_161 = arith.constant 0 : index
    %c0_162 = arith.constant 0 : index
    %150 = vector.load %arg10[%c2_160, %c0_161, %c0_162] : memref<4x64x10xf32, #tpu.memory_space<vmem>>, vector<1x64x10xf32>
    %151 = vector.shape_cast %150 : vector<1x64x10xf32> to vector<64x10xf32>
    %cst_163 = arith.constant dense<0.000000e+00> : vector<1x10xf32>
    %152 = tpu.matmul %149, %151, %cst_163 {dimension_numbers = #tpu.dot_dimension_numbers<[1], [0], [0], [1], [0, 0, 1, 1], [], []>} : vector<1x64xf32>, vector<64x10xf32>, vector<1x10xf32> -> vector<1x10xf32>
    %153 = arith.addf %148, %152 : vector<1x10xf32>
    %154 = vector.extract_strided_slice %137 {offsets = [3, 0], sizes = [1, 64], strides = [1, 1]} : vector<4x64xf32> to vector<1x64xf32>
    %c3_164 = arith.constant 3 : index
    %c0_165 = arith.constant 0 : index
    %c0_166 = arith.constant 0 : index
    %155 = vector.load %arg10[%c3_164, %c0_165, %c0_166] : memref<4x64x10xf32, #tpu.memory_space<vmem>>, vector<1x64x10xf32>
    %156 = vector.shape_cast %155 : vector<1x64x10xf32> to vector<64x10xf32>
    %cst_167 = arith.constant dense<0.000000e+00> : vector<1x10xf32>
    %157 = tpu.matmul %154, %156, %cst_167 {dimension_numbers = #tpu.dot_dimension_numbers<[1], [0], [0], [1], [0, 0, 1, 1], [], []>} : vector<1x64xf32>, vector<64x10xf32>, vector<1x10xf32> -> vector<1x10xf32>
    %158 = arith.addf %153, %157 : vector<1x10xf32>
    %cst_168 = arith.constant dense<0xFF800000> : vector<1xf32>
    %159 = vector.multi_reduction <maximumf>, %158, %cst_168 [1] : vector<1x10xf32> to vector<1xf32>
    %160 = vector.shape_cast %159 : vector<1xf32> to vector<1x1xf32>
    %161 = vector.broadcast %160 : vector<1x1xf32> to vector<1x10xf32>
    %162 = arith.subf %158, %161 : vector<1x10xf32>
    %163 = math.exp %162 : vector<1x10xf32>
    %cst_169 = arith.constant dense<0.000000e+00> : vector<1xf32>
    %164 = vector.multi_reduction <add>, %163, %cst_169 [1] : vector<1x10xf32> to vector<1xf32>
    %165 = vector.shape_cast %164 : vector<1xf32> to vector<1x1xf32>
    %166 = math.log %165 : vector<1x1xf32>
    %167 = vector.broadcast %160 : vector<1x1xf32> to vector<1x10xf32>
    %168 = arith.subf %158, %167 : vector<1x10xf32>
    %169 = vector.broadcast %166 : vector<1x1xf32> to vector<1x10xf32>
    %170 = arith.subf %168, %169 : vector<1x10xf32>
    %c0_170 = arith.constant 0 : index
    %c0_171 = arith.constant 0 : index
    %c0_172 = arith.constant 0 : index
    %171 = vector.load %arg12[%c0_170, %c0_171, %c0_172] : memref<1x1x10xf32, #tpu.memory_space<vmem>>, vector<1x1x10xf32>
    %172 = vector.shape_cast %171 : vector<1x1x10xf32> to vector<1x10xf32>
    %173 = vector.shape_cast %170 : vector<1x10xf32> to vector<1x1x10xf32>
    tpu.vector_store %arg12[%c0_170, %c0_171, %c0_172], %173 {strides = array<i32>} : memref<1x1x10xf32, #tpu.memory_space<vmem>>, vector<1x1x10xf32>,
    return
  }
  func.func @transform_0(%arg0: i32) -> (i32, i32, i32) {
    %c0_i32 = arith.constant 0 : i32
    %c0_i32_0 = arith.constant 0 : i32
    %c0_i32_1 = arith.constant 0 : i32
    return %arg0, %c0_i32, %c0_i32_0 : i32, i32, i32
  }
  func.func @transform_1(%arg0: i32) -> (i32, i32, i32) {
    %c0_i32 = arith.constant 0 : i32
    %c0_i32_0 = arith.constant 0 : i32
    %c0_i32_1 = arith.constant 0 : i32
    %c0_i32_2 = arith.constant 0 : i32
    return %c0_i32, %c0_i32_0, %c0_i32_1 : i32, i32, i32
  }
  func.func @transform_2(%arg0: i32) -> (i32, i32) {
    %c0_i32 = arith.constant 0 : i32
    %c0_i32_0 = arith.constant 0 : i32
    %c0_i32_1 = arith.constant 0 : i32
    return %c0_i32, %c0_i32_0 : i32, i32
  }
  func.func @transform_3(%arg0: i32) -> (i32, i32, i32) {
    %c0_i32 = arith.constant 0 : i32
    %c0_i32_0 = arith.constant 0 : i32
    %c0_i32_1 = arith.constant 0 : i32
    %c0_i32_2 = arith.constant 0 : i32
    return %c0_i32, %c0_i32_0, %c0_i32_1 : i32, i32, i32
  }
  func.func @transform_4(%arg0: i32) -> (i32, i32) {
    %c0_i32 = arith.constant 0 : i32
    %c0_i32_0 = arith.constant 0 : i32
    %c0_i32_1 = arith.constant 0 : i32
    return %c0_i32, %c0_i32_0 : i32, i32
  }
  func.func @transform_5(%arg0: i32) -> (i32, i32, i32) {
    %c0_i32 = arith.constant 0 : i32
    %c0_i32_0 = arith.constant 0 : i32
    %c0_i32_1 = arith.constant 0 : i32
    %c0_i32_2 = arith.constant 0 : i32
    return %c0_i32, %c0_i32_0, %c0_i32_1 : i32, i32, i32
  }
  func.func @transform_6(%arg0: i32) -> (i32, i32, i32) {
    %c0_i32 = arith.constant 0 : i32
    %c0_i32_0 = arith.constant 0 : i32
    %c0_i32_1 = arith.constant 0 : i32
    %c0_i32_2 = arith.constant 0 : i32
    return %c0_i32, %c0_i32_0, %c0_i32_1 : i32, i32, i32
  }
  func.func @transform_7(%arg0: i32) -> (i32, i32, i32) {
    %c0_i32 = arith.constant 0 : i32
    %c0_i32_0 = arith.constant 0 : i32
    %c0_i32_1 = arith.constant 0 : i32
    %c0_i32_2 = arith.constant 0 : i32
    return %c0_i32, %c0_i32_0, %c0_i32_1 : i32, i32, i32
  }
  func.func @transform_8(%arg0: i32) -> (i32, i32, i32) {
    %c0_i32 = arith.constant 0 : i32
    %c0_i32_0 = arith.constant 0 : i32
    %c0_i32_1 = arith.constant 0 : i32
    %c0_i32_2 = arith.constant 0 : i32
    return %c0_i32, %c0_i32_0, %c0_i32_1 : i32, i32, i32
  }
  func.func @transform_9(%arg0: i32) -> (i32, i32, i32) {
    %c0_i32 = arith.constant 0 : i32
    %c0_i32_0 = arith.constant 0 : i32
    %c0_i32_1 = arith.constant 0 : i32
    %c0_i32_2 = arith.constant 0 : i32
    return %c0_i32, %c0_i32_0, %c0_i32_1 : i32, i32, i32
  }
  func.func @transform_10(%arg0: i32) -> (i32, i32) {
    %c0_i32 = arith.constant 0 : i32
    %c0_i32_0 = arith.constant 0 : i32
    %c0_i32_1 = arith.constant 0 : i32
    return %c0_i32, %c0_i32_0 : i32, i32
  }
  func.func @transform_11(%arg0: i32) -> (i32, i32, i32) {
    %c0_i32 = arith.constant 0 : i32
    %c0_i32_0 = arith.constant 0 : i32
    %c0_i32_1 = arith.constant 0 : i32
    return %arg0, %c0_i32, %c0_i32_0 : i32, i32, i32
  }
}

</mosaic_0001>

<llo_original>
// kernel: tile.13
$region0: #{tile.13}
  #allocation0 [shape = 's32[1]{0}', space=sflag, size = 0x4, scoped, tag = 'scoped memory for tile.13']
  %s0 = inlined_call_operand.vmem [shape: f32[8], index: 0, kind: input, shape index: {}]
  %s1 = inlined_call_operand.vmem [shape: f32[16,8], index: 1, kind: output, shape index: {}]
  // Predicated region
  $region2: #{tile.13} parent=0 // pred_check
    _
  $region3: #{tile.13} parent=0 // pred_check_branch
    %3 = sbr.rel (0) target = $region5
  $region4: #{tile.13} parent=0 // pred_region
    _
  $region5: #{tile.13} parent=0 // pred_fallthru
    _
  %v4 = vld [vmem:[%s0] ss:$0 sm:$0xff]
  %5 = vst [vmem:[%s1] sm:$0xff] %v4
  %s6 = scalar_lea.vmem %s1, 8
  %7 = vst [vmem:[%s6] sm:$0xff] %v4

// kernel: tile.14
$region0: #{tile.14}
  %s0 = inlined_call_operand.vmem [shape: f32[16,8], index: 0, kind: input, shape index: {}]
  %s1 = inlined_call_operand.vmem [shape: f32[1,128], index: 1, kind: output, shape index: {}]
  $region1: #{tile.14} parent=0
    #allocation0 [shape = 'u8[4096]{0}', space=vmem, size = 0x1000, scoped, tag = 'scoped mem for output reshape']
    %v2 = vld [vmem:[%s0] sm:$0x1]
    %vm3 = vcmask 64512
    %4 = vst.msk [vmem:[#allocation0] sm:$0x1] %vm3, %v2
    %s5 = scalar_lea.vmem %s0, 15
    %v6 = vld [vmem:[%s5] sm:$0x1]
    %7 = vrot.lane.b32.xlu0 %v6, 120
    %v8 = vpop.permute.xlu0 %7
    %vm9 = vcmask 1048512
    %10 = vst.msk [vmem:[#allocation0] sm:$0x1] %vm9, %v8
    %s11 = scalar_lea.vmem %s0, 14
    %v12 = vld [vmem:[%s11] sm:$0x1]
    %13 = vrot.lane.b32.xlu0 %v12, 112
    %v14 = vpop.permute.xlu0 %13
    %vm15 = vcmask 982912
    %16 = vst.msk [vmem:[#allocation0] sm:$0x1] %vm15, %v14
    %s17 = scalar_lea.vmem %s0, 13
    %v18 = vld [vmem:[%s17] sm:$0x1]
    %19 = vrot.lane.b32.xlu0 %v18, 104
    %v20 = vpop.permute.xlu0 %19
    %vm21 = vcmask 917312
    %22 = vst.msk [vmem:[#allocation0] sm:$0x1] %vm21, %v20
    %s23 = scalar_lea.vmem %s0, 12
    %v24 = vld [vmem:[%s23] sm:$0x1]
    %25 = vrot.lane.b32.xlu0 %v24, 96
    %v26 = vpop.permute.xlu0 %25
    %vm27 = vcmask 851712
    %28 = vst.msk [vmem:[#allocation0] sm:$0x1] %vm27, %v26
    %s29 = scalar_lea.vmem %s0, 11
    %v30 = vld [vmem:[%s29] sm:$0x1]
    %31 = vrot.lane.b32.xlu0 %v30, 88
    %v32 = vpop.permute.xlu0 %31
    %vm33 = vcmask 786112
    %34 = vst.msk [vmem:[#allocation0] sm:$0x1] %vm33, %v32
    %s35 = scalar_lea.vmem %s0, 10
    %v36 = vld [vmem:[%s35] sm:$0x1]
    %37 = vrot.lane.b32.xlu0 %v36, 80
    %v38 = vpop.permute.xlu0 %37
    %vm39 = vcmask 720512
    %40 = vst.msk [vmem:[#allocation0] sm:$0x1] %vm39, %v38
    %s41 = scalar_lea.vmem %s0, 9
    %v42 = vld [vmem:[%s41] sm:$0x1]
    %43 = vrot.lane.b32.xlu0 %v42, 72
    %v44 = vpop.permute.xlu0 %43
    %vm45 = vcmask 654912
    %46 = vst.msk [vmem:[#allocation0] sm:$0x1] %vm45, %v44
    %s47 = scalar_lea.vmem %s0, 8
    %v48 = vld [vmem:[%s47] sm:$0x1]
    %49 = vrot.lane.b32.xlu0 %v48, 64
    %v50 = vpop.permute.xlu0 %49
    %vm51 = vcmask 589312
    %52 = vst.msk [vmem:[#allocation0] sm:$0x1] %vm51, %v50
    %s53 = scalar_lea.vmem %s0, 7
    %v54 = vld [vmem:[%s53] sm:$0x1]
    %55 = vrot.lane.b32.xlu0 %v54, 56
    %v56 = vpop.permute.xlu0 %55
    %vm57 = vcmask 523712
    %58 = vst.msk [vmem:[#allocation0] sm:$0x1] %vm57, %v56
    %s59 = scalar_lea.vmem %s0, 6
    %v60 = vld [vmem:[%s59] sm:$0x1]
    %61 = vrot.lane.b32.xlu0 %v60, 48
    %v62 = vpop.permute.xlu0 %61
    %vm63 = vcmask 458112
    %64 = vst.msk [vmem:[#allocation0] sm:$0x1] %vm63, %v62
    %s65 = scalar_lea.vmem %s0, 5
    %v66 = vld [vmem:[%s65] sm:$0x1]
    %67 = vrot.lane.b32.xlu0 %v66, 40
    %v68 = vpop.permute.xlu0 %67
    %vm69 = vcmask 392512
    %70 = vst.msk [vmem:[#allocation0] sm:$0x1] %vm69, %v68
    %s71 = scalar_lea.vmem %s0, 4
    %v72 = vld [vmem:[%s71] sm:$0x1]
    %73 = vrot.lane.b32.xlu0 %v72, 32
    %v74 = vpop.permute.xlu0 %73
    %vm75 = vcmask 326912
    %76 = vst.msk [vmem:[#allocation0] sm:$0x1] %vm75, %v74
    %s77 = scalar_lea.vmem %s0, 3
    %v78 = vld [vmem:[%s77] sm:$0x1]
    %79 = vrot.lane.b32.xlu0 %v78, 24
    %v80 = vpop.permute.xlu0 %79
    %vm81 = vcmask 261312
    %82 = vst.msk [vmem:[#allocation0] sm:$0x1] %vm81, %v80
    %s83 = scalar_lea.vmem %s0, 2
    %v84 = vld [vmem:[%s83] sm:$0x1]
    %85 = vrot.lane.b32.xlu0 %v84, 16
    %v86 = vpop.permute.xlu0 %85
    %vm87 = vcmask 195712
    %88 = vst.msk [vmem:[#allocation0] sm:$0x1] %vm87, %v86
    %s89 = scalar_lea.vmem %s0, 1
    %v90 = vld [vmem:[%s89] sm:$0x1]
    %91 = vrot.lane.b32.xlu0 %v90, 8
    %v92 = vpop.permute.xlu0 %91
    %vm93 = vcmask 130112
    %94 = vst.msk [vmem:[#allocation0] sm:$0x1] %vm93, %v92
    %s96 = sshllo.u32 0, 1
    %v98 = vld [vmem:[#allocation0] sm:%s96]
    %s99 = sshllo.u32 0, 1
    %100 = vst [vmem:[%s1] sm:%s99] %v98

// kernel: tile.18
$region0: #{tile.18}
  #allocation0 [shape = 's32[1]{0}', space=sflag, size = 0x4, scoped, tag = 'scoped memory for tile.18']
  %s0 = inlined_call_operand.vmem [shape: f32[16], index: 0, kind: input, shape index: {}]
  %s1 = inlined_call_operand.vmem [shape: f32[8,16], index: 1, kind: output, shape index: {}]
  // Predicated region
  $region2: #{tile.18} parent=0 // pred_check
    _
  $region3: #{tile.18} parent=0 // pred_check_branch
    %3 = sbr.rel (0) target = $region5
  $region4: #{tile.18} parent=0 // pred_region
    _
  $region5: #{tile.18} parent=0 // pred_fallthru
    _
  %v4 = vld [vmem:[%s0] ss:$0 sm:$0xff]
  %5 = vst [vmem:[%s1] sm:$0xff] %v4

// kernel: tile.19
$region0: #{tile.19}
  %s0 = inlined_call_operand.vmem [shape: f32[8,16], index: 0, kind: input, shape index: {}]
  %s1 = inlined_call_operand.vmem [shape: f32[1,128], index: 1, kind: output, shape index: {}]
  $region1: #{tile.19} parent=0
    #allocation0 [shape = 'u8[4096]{0}', space=vmem, size = 0x1000, scoped, tag = 'scoped mem for output reshape']
    %v2 = vld [vmem:[%s0] sm:$0x1]
    %vm3 = vcmask 130048
    %4 = vst.msk [vmem:[#allocation0] sm:$0x1] %vm3, %v2
    %s5 = scalar_lea.vmem %s0, 7
    %v6 = vld [vmem:[%s5] sm:$0x1]
    %7 = vrot.lane.b32.xlu0 %v6, 112
    %v8 = vpop.permute.xlu0 %7
    %vm9 = vcmask 1048448
    %10 = vst.msk [vmem:[#allocation0] sm:$0x1] %vm9, %v8
    %s11 = scalar_lea.vmem %s0, 6
    %v12 = vld [vmem:[%s11] sm:$0x1]
    %13 = vrot.lane.b32.xlu0 %v12, 96
    %v14 = vpop.permute.xlu0 %13
    %vm15 = vcmask 917248
    %16 = vst.msk [vmem:[#allocation0] sm:$0x1] %vm15, %v14
    %s17 = scalar_lea.vmem %s0, 5
    %v18 = vld [vmem:[%s17] sm:$0x1]
    %19 = vrot.lane.b32.xlu0 %v18, 80
    %v20 = vpop.permute.xlu0 %19
    %vm21 = vcmask 786048
    %22 = vst.msk [vmem:[#allocation0] sm:$0x1] %vm21, %v20
    %s23 = scalar_lea.vmem %s0, 4
    %v24 = vld [vmem:[%s23] sm:$0x1]
    %25 = vrot.lane.b32.xlu0 %v24, 64
    %v26 = vpop.permute.xlu0 %25
    %vm27 = vcmask 654848
    %28 = vst.msk [vmem:[#allocation0] sm:$0x1] %vm27, %v26
    %s29 = scalar_lea.vmem %s0, 3
    %v30 = vld [vmem:[%s29] sm:$0x1]
    %31 = vrot.lane.b32.xlu0 %v30, 48
    %v32 = vpop.permute.xlu0 %31
    %vm33 = vcmask 523648
    %34 = vst.msk [vmem:[#allocation0] sm:$0x1] %vm33, %v32
    %s35 = scalar_lea.vmem %s0, 2
    %v36 = vld [vmem:[%s35] sm:$0x1]
    %37 = vrot.lane.b32.xlu0 %v36, 32
    %v38 = vpop.permute.xlu0 %37
    %vm39 = vcmask 392448
    %40 = vst.msk [vmem:[#allocation0] sm:$0x1] %vm39, %v38
    %s41 = scalar_lea.vmem %s0, 1
    %v42 = vld [vmem:[%s41] sm:$0x1]
    %43 = vrot.lane.b32.xlu0 %v42, 16
    %v44 = vpop.permute.xlu0 %43
    %vm45 = vcmask 261248
    %46 = vst.msk [vmem:[#allocation0] sm:$0x1] %vm45, %v44
    %s48 = sshllo.u32 0, 1
    %v50 = vld [vmem:[#allocation0] sm:%s48]
    %s51 = sshllo.u32 0, 1
    %52 = vst [vmem:[%s1] sm:%s51] %v50

// kernel: project_network_forward.1
$region0: #{project_network_forward.1}
  #allocation0 [shape = 'u32[]', space=smem, size = 0x4, offset = 0x4, fixed_abs, tag = 'smem constant byte address 0x4 - core index']
  #allocation1 [shape = 'u32[144,128]{1,0:T(1,128)}', space=vmem, size = 0x12000, scoped, tag = 'internal scratch']
  #allocation2 [shape = 'f32[18,72]{1,0:T(8,128)}', space=vmem, size = 0x3000, scoped, tag = 'scratch operand']
  #allocation3 [shape = 'f32[10,80]{1,0:T(8,128)}', space=vmem, size = 0x2000, scoped, tag = 'scratch operand']
  %s0 = inlined_call_operand.vmem [shape: f32[2,16,64], index: 0, kind: input, shape index: {}]
  %s1 = inlined_call_operand.vmem [shape: f32[9,64,128], index: 1, kind: input, shape index: {}]
  %s2 = inlined_call_operand.vmem [shape: f32[1,128], index: 2, kind: input, shape index: {}]
  %s3 = inlined_call_operand.vmem [shape: f32[9,64,128], index: 3, kind: input, shape index: {}]
  %s4 = inlined_call_operand.vmem [shape: f32[1,128], index: 4, kind: input, shape index: {}]
  %s5 = inlined_call_operand.vmem [shape: f32[2,8,16], index: 5, kind: input, shape index: {}]
  %s6 = inlined_call_operand.vmem [shape: f32[2,128,64], index: 6, kind: input, shape index: {}]
  %s7 = inlined_call_operand.vmem [shape: f32[2,4,8], index: 7, kind: input, shape index: {}]
  %s8 = inlined_call_operand.vmem [shape: f32[2,128,64], index: 8, kind: input, shape index: {}]
  %s9 = inlined_call_operand.vmem [shape: f32[4,64,10], index: 9, kind: input, shape index: {}]
  %s10 = inlined_call_operand.vmem [shape: f32[1,10], index: 10, kind: input, shape index: {}]
  %s11 = inlined_call_operand.hbm [shape: f32[2,1,10], index: 11, kind: output, shape index: {}]
  %s12 = sld [smem:[#allocation0]]
  $region77: #{project_network_forward.1} parent=0
    _
  %s14 = ssub.s32 1, %s12
  %s15 = scalar_select 0, %s14, %s12
  $region1: #{project_network_forward.1} parent=0
    #allocation4 [shape = 'u8[1024]{0}', space=vmem, size = 0x400, scoped, tag = 'output window, operand 0']
    #allocation5 [shape = 's32[2]{0}', space=sflag, size = 0x8, scoped, tag = 'scoped memory for project_network_forward.1']
    %16 = vsyncpa [#allocation5], 0
    %s17 = scalar_lea.sflag [#allocation5], 1
    %18 = vsyncpa %s17, 0
    loop: start=0, step=1, limit=4
    $region2: #{project_network_forward.1} parent=1 // loop_pre_header
      _
    $region3: #{project_network_forward.1} parent=1 // loop_header
      %s20 = sphi 0, %s24
      %p21 = scmp.ge.s32.totalorder %s20, 4
      %s30 = sphi 0, %s32
      %s33 = sphi 0, %s30
      %s34 = sphi 0, %s33
      %s50 = sphi 0, %s34
      %s54 = sphi 0, %s54
      %s56 = sphi 0, %s54
      %s57 = sphi 0, %s56
      %s71 = sphi 0, %s57
      %s75 = sphi 0, %s75
      %s77 = sphi 0, %s75
      %s78 = sphi 0, %s77
      %s92 = sphi 0, %s78
      %s96 = sphi 0, %s96
      %s98 = sphi 0, %s96
      %s99 = sphi 0, %s98
      %s113 = sphi 0, %s99
      %s117 = sphi 0, %s117
      %s119 = sphi 0, %s117
      %s120 = sphi 0, %s119
      %s134 = sphi 0, %s120
      %s138 = sphi 0, %s138
      %s140 = sphi 0, %s138
      %s141 = sphi 0, %s140
      %s155 = sphi 0, %s141
      %s159 = sphi 0, %s159
      %s161 = sphi 0, %s159
      %s162 = sphi 0, %s161
      %s176 = sphi 0, %s162
      %s180 = sphi 0, %s180
      %s182 = sphi 0, %s180
      %s183 = sphi 0, %s182
      %s197 = sphi 0, %s183
      %s201 = sphi 0, %s201
      %s203 = sphi 0, %s201
      %s204 = sphi 0, %s203
      %s218 = sphi 0, %s204
      %s222 = sphi 0, %s222
      %s224 = sphi 0, %s222
      %s225 = sphi 0, %s224
      %s239 = sphi 0, %s225
      %s243 = sphi 0, %s243
      %s245 = sphi 0, %s243
      %s246 = sphi 0, %s245
      %s260 = sphi 0, %s246
      %s266 = sphi 0, %s268
      %s269 = sphi 0, %s266
      %s270 = sphi 0, %s269
      %s286 = sphi 0, %s270
    $region4: #{project_network_forward.1} parent=1 // loop_header_branch
      %23 = sbr.rel (%p21) target = $region8
    $region5: #{project_network_forward.1} parent=1 // loop_body
      %s25 = ssub.s32 %s20, 1
      %s26 = ssub.s32 %s20, 2
      %s27 = sadd.s32 %s20, 1
      %s28 = ssub.s32 %s20, %s27
      %p29 = scmp.eq.s32.totalorder %s28, 0
      %s31 = sadd.s32 %s30, 1
      %s32 = scalar_select %p29, %s30, %s31
      %p35 = pneg %p29
      %p36 = scmp.eq.s32.totalorder %s20, 1
      %p37 = por %p35, %p36
      %p38 = scmp.ne.s32.totalorder %s30, %s33
      %p39 = scmp.eq.s32.totalorder %s20, 0
      %p40 = por %p38, %p39
      %p41 = scmp.ne.s32.totalorder %s30, %s33
      %p42 = scmp.eq.s32.totalorder %s25, 1
      %p43 = por %p41, %p42
      %p44 = scmp.ne.s32.totalorder %s33, %s34
      %p45 = scmp.eq.s32.totalorder %s25, 0
      %p46 = por %p44, %p45
      %p47 = scmp.ne.s32.totalorder %s33, %s34
      %p48 = scmp.eq.s32.totalorder %s26, 1
      %p49 = por %p47, %p48
      %p51 = scmp.ne.s32.totalorder %s34, %s50
      %p52 = scmp.eq.s32.totalorder %s26, 0
      %p53 = por %p51, %p52
      %s55 = sadd.s32 %s54, 1
      %p58 = scmp.eq.s32.totalorder %s20, 1
      %p59 = scmp.ne.s32.totalorder %s54, %s56
      %p60 = scmp.eq.s32.totalorder %s20, 0
      %p61 = por %p59, %p60
      %p62 = scmp.ne.s32.totalorder %s54, %s56
      %p63 = scmp.eq.s32.totalorder %s25, 1
      %p64 = por %p62, %p63
      %p65 = scmp.ne.s32.totalorder %s56, %s57
      %p66 = scmp.eq.s32.totalorder %s25, 0
      %p67 = por %p65, %p66
      %p68 = scmp.ne.s32.totalorder %s56, %s57
      %p69 = scmp.eq.s32.totalorder %s26, 1
      %p70 = por %p68, %p69
      %p72 = scmp.ne.s32.totalorder %s57, %s71
      %p73 = scmp.eq.s32.totalorder %s26, 0
      %p74 = por %p72, %p73
      %s76 = sadd.s32 %s75, 1
      %p79 = scmp.eq.s32.totalorder %s20, 1
      %p80 = scmp.ne.s32.totalorder %s75, %s77
      %p81 = scmp.eq.s32.totalorder %s20, 0
      %p82 = por %p80, %p81
      %p83 = scmp.ne.s32.totalorder %s75, %s77
      %p84 = scmp.eq.s32.totalorder %s25, 1
      %p85 = por %p83, %p84
      %p86 = scmp.ne.s32.totalorder %s77, %s78
      %p87 = scmp.eq.s32.totalorder %s25, 0
      %p88 = por %p86, %p87
      %p89 = scmp.ne.s32.totalorder %s77, %s78
      %p90 = scmp.eq.s32.totalorder %s26, 1
      %p91 = por %p89, %p90
      %p93 = scmp.ne.s32.totalorder %s78, %s92
      %p94 = scmp.eq.s32.totalorder %s26, 0
      %p95 = por %p93, %p94
      %s97 = sadd.s32 %s96, 1
      %p100 = scmp.eq.s32.totalorder %s20, 1
      %p101 = scmp.ne.s32.totalorder %s96, %s98
      %p102 = scmp.eq.s32.totalorder %s20, 0
      %p103 = por %p101, %p102
      %p104 = scmp.ne.s32.totalorder %s96, %s98
      %p105 = scmp.eq.s32.totalorder %s25, 1
      %p106 = por %p104, %p105
      %p107 = scmp.ne.s32.totalorder %s98, %s99
      %p108 = scmp.eq.s32.totalorder %s25, 0
      %p109 = por %p107, %p108
      %p110 = scmp.ne.s32.totalorder %s98, %s99
      %p111 = scmp.eq.s32.totalorder %s26, 1
      %p112 = por %p110, %p111
      %p114 = scmp.ne.s32.totalorder %s99, %s113
      %p115 = scmp.eq.s32.totalorder %s26, 0
      %p116 = por %p114, %p115
      %s118 = sadd.s32 %s117, 1
      %p121 = scmp.eq.s32.totalorder %s20, 1
      %p122 = scmp.ne.s32.totalorder %s117, %s119
      %p123 = scmp.eq.s32.totalorder %s20, 0
      %p124 = por %p122, %p123
      %p125 = scmp.ne.s32.totalorder %s117, %s119
      %p126 = scmp.eq.s32.totalorder %s25, 1
      %p127 = por %p125, %p126
      %p128 = scmp.ne.s32.totalorder %s119, %s120
      %p129 = scmp.eq.s32.totalorder %s25, 0
      %p130 = por %p128, %p129
      %p131 = scmp.ne.s32.totalorder %s119, %s120
      %p132 = scmp.eq.s32.totalorder %s26, 1
      %p133 = por %p131, %p132
      %p135 = scmp.ne.s32.totalorder %s120, %s134
      %p136 = scmp.eq.s32.totalorder %s26, 0
      %p137 = por %p135, %p136
      %s139 = sadd.s32 %s138, 1
      %p142 = scmp.eq.s32.totalorder %s20, 1
      %p143 = scmp.ne.s32.totalorder %s138, %s140
      %p144 = scmp.eq.s32.totalorder %s20, 0
      %p145 = por %p143, %p144
      %p146 = scmp.ne.s32.totalorder %s138, %s140
      %p147 = scmp.eq.s32.totalorder %s25, 1
      %p148 = por %p146, %p147
      %p149 = scmp.ne.s32.totalorder %s140, %s141
      %p150 = scmp.eq.s32.totalorder %s25, 0
      %p151 = por %p149, %p150
      %p152 = scmp.ne.s32.totalorder %s140, %s141
      %p153 = scmp.eq.s32.totalorder %s26, 1
      %p154 = por %p152, %p153
      %p156 = scmp.ne.s32.totalorder %s141, %s155
      %p157 = scmp.eq.s32.totalorder %s26, 0
      %p158 = por %p156, %p157
      %s160 = sadd.s32 %s159, 1
      %p163 = scmp.eq.s32.totalorder %s20, 1
      %p164 = scmp.ne.s32.totalorder %s159, %s161
      %p165 = scmp.eq.s32.totalorder %s20, 0
      %p166 = por %p164, %p165
      %p167 = scmp.ne.s32.totalorder %s159, %s161
      %p168 = scmp.eq.s32.totalorder %s25, 1
      %p169 = por %p167, %p168
      %p170 = scmp.ne.s32.totalorder %s161, %s162
      %p171 = scmp.eq.s32.totalorder %s25, 0
      %p172 = por %p170, %p171
      %p173 = scmp.ne.s32.totalorder %s161, %s162
      %p174 = scmp.eq.s32.totalorder %s26, 1
      %p175 = por %p173, %p174
      %p177 = scmp.ne.s32.totalorder %s162, %s176
      %p178 = scmp.eq.s32.totalorder %s26, 0
      %p179 = por %p177, %p178
      %s181 = sadd.s32 %s180, 1
      %p184 = scmp.eq.s32.totalorder %s20, 1
      %p185 = scmp.ne.s32.totalorder %s180, %s182
      %p186 = scmp.eq.s32.totalorder %s20, 0
      %p187 = por %p185, %p186
      %p188 = scmp.ne.s32.totalorder %s180, %s182
      %p189 = scmp.eq.s32.totalorder %s25, 1
      %p190 = por %p188, %p189
      %p191 = scmp.ne.s32.totalorder %s182, %s183
      %p192 = scmp.eq.s32.totalorder %s25, 0
      %p193 = por %p191, %p192
      %p194 = scmp.ne.s32.totalorder %s182, %s183
      %p195 = scmp.eq.s32.totalorder %s26, 1
      %p196 = por %p194, %p195
      %p198 = scmp.ne.s32.totalorder %s183, %s197
      %p199 = scmp.eq.s32.totalorder %s26, 0
      %p200 = por %p198, %p199
      %s202 = sadd.s32 %s201, 1
      %p205 = scmp.eq.s32.totalorder %s20, 1
      %p206 = scmp.ne.s32.totalorder %s201, %s203
      %p207 = scmp.eq.s32.totalorder %s20, 0
      %p208 = por %p206, %p207
      %p209 = scmp.ne.s32.totalorder %s201, %s203
      %p210 = scmp.eq.s32.totalorder %s25, 1
      %p211 = por %p209, %p210
      %p212 = scmp.ne.s32.totalorder %s203, %s204
      %p213 = scmp.eq.s32.totalorder %s25, 0
      %p214 = por %p212, %p213
      %p215 = scmp.ne.s32.totalorder %s203, %s204
      %p216 = scmp.eq.s32.totalorder %s26, 1
      %p217 = por %p215, %p216
      %p219 = scmp.ne.s32.totalorder %s204, %s218
      %p220 = scmp.eq.s32.totalorder %s26, 0
      %p221 = por %p219, %p220
      %s223 = sadd.s32 %s222, 1
      %p226 = scmp.eq.s32.totalorder %s20, 1
      %p227 = scmp.ne.s32.totalorder %s222, %s224
      %p228 = scmp.eq.s32.totalorder %s20, 0
      %p229 = por %p227, %p228
      %p230 = scmp.ne.s32.totalorder %s222, %s224
      %p231 = scmp.eq.s32.totalorder %s25, 1
      %p232 = por %p230, %p231
      %p233 = scmp.ne.s32.totalorder %s224, %s225
      %p234 = scmp.eq.s32.totalorder %s25, 0
      %p235 = por %p233, %p234
      %p236 = scmp.ne.s32.totalorder %s224, %s225
      %p237 = scmp.eq.s32.totalorder %s26, 1
      %p238 = por %p236, %p237
      %p240 = scmp.ne.s32.totalorder %s225, %s239
      %p241 = scmp.eq.s32.totalorder %s26, 0
      %p242 = por %p240, %p241
      %s244 = sadd.s32 %s243, 1
      %p247 = scmp.eq.s32.totalorder %s20, 1
      %p248 = scmp.ne.s32.totalorder %s243, %s245
      %p249 = scmp.eq.s32.totalorder %s20, 0
      %p250 = por %p248, %p249
      %p251 = scmp.ne.s32.totalorder %s243, %s245
      %p252 = scmp.eq.s32.totalorder %s25, 1
      %p253 = por %p251, %p252
      %p254 = scmp.ne.s32.totalorder %s245, %s246
      %p255 = scmp.eq.s32.totalorder %s25, 0
      %p256 = por %p254, %p255
      %p257 = scmp.ne.s32.totalorder %s245, %s246
      %p258 = scmp.eq.s32.totalorder %s26, 1
      %p259 = por %p257, %p258
      %p261 = scmp.ne.s32.totalorder %s246, %s260
      %p262 = scmp.eq.s32.totalorder %s26, 0
      %p263 = por %p261, %p262
      %s264 = ssub.s32 %s20, %s27
      %p265 = scmp.eq.s32.totalorder %s264, 0
      %s267 = sadd.s32 %s266, 1
      %s268 = scalar_select %p265, %s266, %s267
      %p271 = pneg %p265
      %p272 = scmp.eq.s32.totalorder %s20, 1
      %p273 = por %p271, %p272
      %p274 = scmp.ne.s32.totalorder %s266, %s269
      %p275 = scmp.eq.s32.totalorder %s20, 0
      %p276 = por %p274, %p275
      %p277 = scmp.ne.s32.totalorder %s266, %s269
      %p278 = scmp.eq.s32.totalorder %s25, 1
      %p279 = por %p277, %p278
      %p280 = scmp.ne.s32.totalorder %s269, %s270
      %p281 = scmp.eq.s32.totalorder %s25, 0
      %p282 = por %p280, %p281
      %p283 = scmp.ne.s32.totalorder %s269, %s270
      %p284 = scmp.eq.s32.totalorder %s26, 1
      %p285 = por %p283, %p284
      %p287 = scmp.ne.s32.totalorder %s270, %s286
      %p288 = scmp.eq.s32.totalorder %s26, 0
      %p289 = por %p287, %p288
      %p290 = scmp.le.s32.totalorder 1, %s20
      %p291 = scmp.lt.s32.totalorder %s20, 3
      %p292 = pnand %p290, %p291
      %p293 = pneg %p292
      // Predicated region
      $region9: #{project_network_forward.1} parent=5 // pred_check
        _
      $region10: #{project_network_forward.1} parent=5 // pred_check_branch
        %295 = sbr.rel (%p292) target = $region12
      $region11: #{project_network_forward.1} parent=5 // pred_region
        %s296 = ssub.s32 %s20, 1
        // Predicated region
        $region13: #{project_network_forward.1} parent=11 // pred_check
          %p297 = pneg %p67
        $region14: #{project_network_forward.1} parent=11 // pred_check_branch
          %299 = sbr.rel (%p297) target = $region16
        $region15: #{project_network_forward.1} parent=11 // pred_region
          _
        $region16: #{project_network_forward.1} parent=11 // pred_fallthru
          _
        // Predicated region
        $region17: #{project_network_forward.1} parent=11 // pred_check
          %p300 = pneg %p88
        $region18: #{project_network_forward.1} parent=11 // pred_check_branch
          %302 = sbr.rel (%p300) target = $region20
        $region19: #{project_network_forward.1} parent=11 // pred_region
          _
        $region20: #{project_network_forward.1} parent=11 // pred_fallthru
          _
        // Predicated region
        $region21: #{project_network_forward.1} parent=11 // pred_check
          %p303 = pneg %p109
        $region22: #{project_network_forward.1} parent=11 // pred_check_branch
          %305 = sbr.rel (%p303) target = $region24
        $region23: #{project_network_forward.1} parent=11 // pred_region
          _
        $region24: #{project_network_forward.1} parent=11 // pred_fallthru
          _
        // Predicated region
        $region25: #{project_network_forward.1} parent=11 // pred_check
          %p306 = pneg %p130
        $region26: #{project_network_forward.1} parent=11 // pred_check_branch
          %308 = sbr.rel (%p306) target = $region28
        $region27: #{project_network_forward.1} parent=11 // pred_region
          _
        $region28: #{project_network_forward.1} parent=11 // pred_fallthru
          _
        // Predicated region
        $region29: #{project_network_forward.1} parent=11 // pred_check
          %p309 = pneg %p151
        $region30: #{project_network_forward.1} parent=11 // pred_check_branch
          %311 = sbr.rel (%p309) target = $region32
        $region31: #{project_network_forward.1} parent=11 // pred_region
          _
        $region32: #{project_network_forward.1} parent=11 // pred_fallthru
          _
        // Predicated region
        $region33: #{project_network_forward.1} parent=11 // pred_check
          %p312 = pneg %p172
        $region34: #{project_network_forward.1} parent=11 // pred_check_branch
          %314 = sbr.rel (%p312) target = $region36
        $region35: #{project_network_forward.1} parent=11 // pred_region
          _
        $region36: #{project_network_forward.1} parent=11 // pred_fallthru
          _
        // Predicated region
        $region37: #{project_network_forward.1} parent=11 // pred_check
          %p315 = pneg %p193
        $region38: #{project_network_forward.1} parent=11 // pred_check_branch
          %317 = sbr.rel (%p315) target = $region40
        $region39: #{project_network_forward.1} parent=11 // pred_region
          _
        $region40: #{project_network_forward.1} parent=11 // pred_fallthru
          _
        // Predicated region
        $region41: #{project_network_forward.1} parent=11 // pred_check
          %p318 = pneg %p214
        $region42: #{project_network_forward.1} parent=11 // pred_check_branch
          %320 = sbr.rel (%p318) target = $region44
        $region43: #{project_network_forward.1} parent=11 // pred_region
          _
        $region44: #{project_network_forward.1} parent=11 // pred_fallthru
          _
        // Predicated region
        $region45: #{project_network_forward.1} parent=11 // pred_check
          %p321 = pneg %p235
        $region46: #{project_network_forward.1} parent=11 // pred_check_branch
          %323 = sbr.rel (%p321) target = $region48
        $region47: #{project_network_forward.1} parent=11 // pred_region
          _
        $region48: #{project_network_forward.1} parent=11 // pred_fallthru
          _
        // Predicated region
        $region49: #{project_network_forward.1} parent=11 // pred_check
          %p324 = pneg %p256
        $region50: #{project_network_forward.1} parent=11 // pred_check_branch
          %326 = sbr.rel (%p324) target = $region52
        $region51: #{project_network_forward.1} parent=11 // pred_region
          _
        $region52: #{project_network_forward.1} parent=11 // pred_fallthru
          _
      $region12: #{project_network_forward.1} parent=5 // pred_fallthru
        _
      %p327 = scmp.lt.s32.totalorder %s20, 2
      // Predicated region
      $region53: #{project_network_forward.1} parent=5 // pred_check
        %p328 = pneg %p327
      $region54: #{project_network_forward.1} parent=5 // pred_check_branch
        %330 = sbr.rel (%p328) target = $region56
      $region55: #{project_network_forward.1} parent=5 // pred_region
        // Predicated region
        $region57: #{project_network_forward.1} parent=55 // pred_check
          %p331 = pneg %p40
        $region58: #{project_network_forward.1} parent=55 // pred_check_branch
          %333 = sbr.rel (%p331) target = $region60
        $region59: #{project_network_forward.1} parent=55 // pred_region
          %p334 = scmp.lt.s32.totalorder %s20, 1
          %s335 = scalar_select %p334, %s20, 1
          %s336 = smul.addr %s335, 2
          %s337 = smul.addr %s336, 8
          %s338 = scalar_lea.vmem %s0, %s337
        $region60: #{project_network_forward.1} parent=55 // pred_fallthru
          _
      $region56: #{project_network_forward.1} parent=5 // pred_fallthru
        _
      %p339 = scmp.le.s32.totalorder 1, %s20
      %p340 = scmp.lt.s32.totalorder %s20, 3
      %p341 = pnand %p339, %p340
      %p342 = pneg %p341
      // Predicated region
      $region61: #{project_network_forward.1} parent=5 // pred_check
        _
      $region62: #{project_network_forward.1} parent=5 // pred_check_branch
        %344 = sbr.rel (%p341) target = $region64
      $region63: #{project_network_forward.1} parent=5 // pred_region
        %s345 = ssub.s32 %s20, 1
        %p346 = scmp.lt.s32.totalorder %s25, 1
        %s347 = scalar_select %p346, %s25, 1
        %s348 = smul.addr %s347, 2
        %s349 = smul.addr %s348, 8
        %s350 = scalar_lea.vmem %s0, %s349
        %p351 = pneg %p46
        %p352 = pneg %p43
        %p353 = pneg %p67
        %p354 = pneg %p64
        %p355 = pneg %p88
        %p356 = pneg %p85
        %p357 = pneg %p109
        %p358 = pneg %p106
        %p359 = pneg %p130
        %p360 = pneg %p127
        %p361 = pneg %p151
        %p362 = pneg %p148
        %p363 = pneg %p172
        %p364 = pneg %p169
        %p365 = pneg %p193
        %p366 = pneg %p190
        %p367 = pneg %p214
        %p368 = pneg %p211
        %p369 = pneg %p235
        %p370 = pneg %p232
        %p371 = pneg %p256
        %p372 = pneg %p253
        %p373 = pneg %p282
        %p374 = pneg %p279
        %s375 = sand.u32 %s269, 1
        %s376 = scalar_lea.sflag [#allocation5], %s375
        %s377 = sand.u32 %s269, 1
        %s378 = scalar_lea.vmem [#allocation4], %s377
        %p379 = scmp.lt.s32.totalorder %s25, 1
        %s380 = scalar_select %p379, %s25, 1
        %s381 = smul.addr %s380, 2
        %s382 = smul.addr %s381, 8
        %s383 = scalar_lea.vmem %s0, %s382
        %vm384 = vcmask 588800
        %385 = vst.msk [vmem:[#allocation2] sm:$0xff] %vm384, 0.0
        %386 = vst.msk [vmem:[#allocation2 + $0x8] sm:$0xff] %vm384, 0.0
        %vm387 = vcmask 582656
        %388 = vst.msk [vmem:[#allocation2 + $0x10] sm:$0x3] %vm387, 0.0
        %vm389 = vcmask 654336
        %390 = vst.msk [vmem:[#allocation3] sm:$0xff] %vm389, 0.0
        %vm391 = vcmask 648192
        %392 = vst.msk [vmem:[#allocation3 + $0x8] sm:$0x3] %vm391, 0.0
        %v393 = vld [vmem:[%s383] sm:$0xff]
        %v394 = vld [vmem:[%s383 + $0x8] sm:$0xff]
        %397 = vrot.lane.b32.xlu0 %v393, 4
        %v398 = vpop.permute.xlu0 %397
        %399 = vrot.lane.b32.xlu0 %v394, 4
        %v400 = vpop.permute.xlu0 %399
        %vm403 = vcmask 556064
        %404 = vst.msk [vmem:[#allocation2 + $0x1] sm:$0xff] %vm403, %v398
        %405 = vst.msk [vmem:[#allocation2 + $0x9] sm:$0xff] %vm403, %v400
        %v406 = vld [vmem:[#allocation2] sm:$0xff]
        %v407 = vld [vmem:[#allocation2 + $0x8] sm:$0xff]
        %v408 = vld [vmem:[%s1] sm:$0xff]
        %v409 = vld [vmem:[%s1 + $0x8] sm:$0xff]
        %v410 = vld [vmem:[%s1 + $0x10] sm:$0xff]
        %v411 = vld [vmem:[%s1 + $0x18] sm:$0xff]
        %v412 = vld [vmem:[%s1 + $0x20] sm:$0xff]
        %v413 = vld [vmem:[%s1 + $0x28] sm:$0xff]
        %v414 = vld [vmem:[%s1 + $0x30] sm:$0xff]
        %v415 = vld [vmem:[%s1 + $0x38] sm:$0xff]
        %s416 = scalar_lea.vmem %s1, 64
        %v417 = vld [vmem:[%s416] sm:$0xff]
        %v418 = vld [vmem:[%s416 + $0x8] sm:$0xff]
        %v419 = vld [vmem:[%s416 + $0x10] sm:$0xff]
        %v420 = vld [vmem:[%s416 + $0x18] sm:$0xff]
        %v421 = vld [vmem:[%s416 + $0x20] sm:$0xff]
        %v422 = vld [vmem:[%s416 + $0x28] sm:$0xff]
        %v423 = vld [vmem:[%s416 + $0x30] sm:$0xff]
        %v424 = vld [vmem:[%s416 + $0x38] sm:$0xff]
        %427 = vrot.lane.b32.xlu0 %v406, 124
        %v428 = vpop.permute.xlu0 %427
        %429 = vrot.lane.b32.xlu0 %v407, 124
        %v430 = vpop.permute.xlu0 %429
        %vm431 = vcmask 523264
        %v432 = vsel %vm431, %v428, 0
        %v434 = vsel %vm431, %v430, 0
        %436 = vmatprep.subr.mxu0 0.0
        %437 = vmatpush1.msra.mxu0 %v417
        %438 = vmatprep.subr.mxu0 0.0
        %439 = vmatpush1.msra.mxu0 %v418
        %440 = vmatprep.subr.mxu0 0.0
        %441 = vmatpush1.msra.mxu0 %v419
        %442 = vmatprep.subr.mxu0 0.0
        %443 = vmatpush1.msra.mxu0 %v420
        %444 = vmatprep.subr.mxu0 0.0
        %445 = vmatpush1.msra.mxu0 %v421
        %446 = vmatprep.subr.mxu0 0.0
        %447 = vmatpush1.msra.mxu0 %v422
        %448 = vmatprep.subr.mxu0 0.0
        %449 = vmatpush1.msra.mxu0 %v423
        %450 = vmatprep.subr.mxu0 0.0
        %451 = vmatpush1.msra.mxu0 %v424
        %452 = vmatprep.subr.mxu0 0.0
        %453 = vmatpush1.msra.mxu0 0.0
        %454 = vmatprep.subr.mxu0 0.0
        %455 = vmatpush1.msra.mxu0 0.0
        %456 = vmatprep.subr.mxu0 0.0
        %457 = vmatpush1.msra.mxu0 0.0
        %458 = vmatprep.subr.mxu0 0.0
        %459 = vmatpush1.msra.mxu0 0.0
        %460 = vmatprep.subr.mxu0 0.0
        %461 = vmatpush1.msra.mxu0 0.0
        %462 = vmatprep.subr.mxu0 0.0
        %463 = vmatpush1.msra.mxu0 0.0
        %464 = vmatprep.subr.mxu0 0.0
        %465 = vmatpush1.msra.mxu0 0.0
        %466 = vmatprep.subr.mxu0 0.0
        %467 = vmatpush1.msra.mxu0 0.0
        %468 = vmatprep.subr.mxu0 0.0
        %469 = vmatpush1.msra.mxu0 0.0
        %470 = vmatprep.subr.mxu0 0.0
        %471 = vmatpush1.msra.mxu0 0.0
        %472 = vmatprep.subr.mxu0 0.0
        %473 = vmatpush1.msra.mxu0 0.0
        %474 = vmatprep.subr.mxu0 0.0
        %475 = vmatpush1.msra.mxu0 0.0
        %476 = vmatprep.subr.mxu0 0.0
        %477 = vmatpush1.msra.mxu0 0.0
        %478 = vmatprep.subr.mxu0 0.0
        %479 = vmatpush1.msra.mxu0 0.0
        %480 = vmatprep.subr.mxu0 0.0
        %481 = vmatpush1.msra.mxu0 0.0
        %482 = vmatprep.subr.mxu0 0.0
        %483 = vmatpush1.msra.mxu0 0.0
        %484 = vmatprep.subr.mxu0 0.0
        %485 = vmatpush1.msra.mxu0 0.0
        %486 = vmatprep.subr.mxu0 0.0
        %487 = vmatpush1.msra.mxu0 0.0
        %488 = vmatprep.subr.mxu0 0.0
        %489 = vmatpush1.msra.mxu0 0.0
        %490 = vmatprep.subr.mxu0 0.0
        %491 = vmatpush1.msra.mxu0 0.0
        %492 = vmatprep.subr.mxu0 0.0
        %493 = vmatpush1.msra.mxu0 0.0
        %494 = vmatprep.subr.mxu0 0.0
        %495 = vmatpush1.msra.mxu0 0.0
        %496 = vmatprep.subr.mxu0 0.0
        %497 = vmatpush1.msra.mxu0 0.0
        %498 = vmatprep.subr.mxu0 0.0
        %499 = vmatpush1.msra.mxu0 0.0
        %500 = vmatprep.mubr.f32.mxu0 0.0
        %501 = vmatmul.mubr.f32.gmra.mrb[0].mxu0 %v432
        %v502 = vpop.f32.mrb[0].mxu0
        %v503 = vadd.f32 0.0, %v502
        %v504 = vpop.f32.mrb[0].mxu0
        %505 = vmatprep.mubr.f32.mxu0 0.0
        %506 = vmatmul.mubr.f32.gmra.mrb[0].mxu0 %v434
        %v507 = vpop.f32.mrb[0].mxu0
        %v508 = vadd.f32 0.0, %v507
        %v509 = vpop.f32.mrb[0].mxu0
        %510 = vdwg.mxu0
        %v511 = vsel %vm431, %v406, 0
        %v513 = vsel %vm431, %v407, 0
        %515 = vmatprep.subr.mxu0 0.0
        %516 = vmatpush1.msra.mxu0 %v408
        %517 = vmatprep.subr.mxu0 0.0
        %518 = vmatpush1.msra.mxu0 %v409
        %519 = vmatprep.subr.mxu0 0.0
        %520 = vmatpush1.msra.mxu0 %v410
        %521 = vmatprep.subr.mxu0 0.0
        %522 = vmatpush1.msra.mxu0 %v411
        %523 = vmatprep.subr.mxu0 0.0
        %524 = vmatpush1.msra.mxu0 %v412
        %525 = vmatprep.subr.mxu0 0.0
        %526 = vmatpush1.msra.mxu0 %v413
        %527 = vmatprep.subr.mxu0 0.0
        %528 = vmatpush1.msra.mxu0 %v414
        %529 = vmatprep.subr.mxu0 0.0
        %530 = vmatpush1.msra.mxu0 %v415
        %531 = vmatprep.subr.mxu0 0.0
        %532 = vmatpush1.msra.mxu0 0.0
        %533 = vmatprep.subr.mxu0 0.0
        %534 = vmatpush1.msra.mxu0 0.0
        %535 = vmatprep.subr.mxu0 0.0
        %536 = vmatpush1.msra.mxu0 0.0
        %537 = vmatprep.subr.mxu0 0.0
        %538 = vmatpush1.msra.mxu0 0.0
        %539 = vmatprep.subr.mxu0 0.0
        %540 = vmatpush1.msra.mxu0 0.0
        %541 = vmatprep.subr.mxu0 0.0
        %542 = vmatpush1.msra.mxu0 0.0
        %543 = vmatprep.subr.mxu0 0.0
        %544 = vmatpush1.msra.mxu0 0.0
        %545 = vmatprep.subr.mxu0 0.0
        %546 = vmatpush1.msra.mxu0 0.0
        %547 = vmatprep.subr.mxu0 0.0
        %548 = vmatpush1.msra.mxu0 0.0
        %549 = vmatprep.subr.mxu0 0.0
        %550 = vmatpush1.msra.mxu0 0.0
        %551 = vmatprep.subr.mxu0 0.0
        %552 = vmatpush1.msra.mxu0 0.0
        %553 = vmatprep.subr.mxu0 0.0
        %554 = vmatpush1.msra.mxu0 0.0
        %555 = vmatprep.subr.mxu0 0.0
        %556 = vmatpush1.msra.mxu0 0.0
        %557 = vmatprep.subr.mxu0 0.0
        %558 = vmatpush1.msra.mxu0 0.0
        %559 = vmatprep.subr.mxu0 0.0
        %560 = vmatpush1.msra.mxu0 0.0
        %561 = vmatprep.subr.mxu0 0.0
        %562 = vmatpush1.msra.mxu0 0.0
        %563 = vmatprep.subr.mxu0 0.0
        %564 = vmatpush1.msra.mxu0 0.0
        %565 = vmatprep.subr.mxu0 0.0
        %566 = vmatpush1.msra.mxu0 0.0
        %567 = vmatprep.subr.mxu0 0.0
        %568 = vmatpush1.msra.mxu0 0.0
        %569 = vmatprep.subr.mxu0 0.0
        %570 = vmatpush1.msra.mxu0 0.0
        %571 = vmatprep.subr.mxu0 0.0
        %572 = vmatpush1.msra.mxu0 0.0
        %573 = vmatprep.subr.mxu0 0.0
        %574 = vmatpush1.msra.mxu0 0.0
        %575 = vmatprep.subr.mxu0 0.0
        %576 = vmatpush1.msra.mxu0 0.0
        %577 = vmatprep.subr.mxu0 0.0
        %578 = vmatpush1.msra.mxu0 0.0
        %579 = vmatprep.mubr.f32.mxu0 0.0
        %580 = vmatmul.mubr.f32.gmra.mrb[0].mxu0 %v511
        %v581 = vpop.f32.mrb[0].mxu0
        %v582 = vadd.f32 %v503, %v581
        %v583 = vpop.f32.mrb[0].mxu0
        %584 = vmatprep.mubr.f32.mxu0 0.0
        %585 = vmatmul.mubr.f32.gmra.mrb[0].mxu0 %v513
        %v586 = vpop.f32.mrb[0].mxu0
        %v587 = vadd.f32 %v508, %v586
        %v588 = vpop.f32.mrb[0].mxu0
        %589 = vdwg.mxu0
        %s590 = scalar_lea.vmem %s1, 128
        %v591 = vld [vmem:[%s590] sm:$0xff]
        %v592 = vld [vmem:[%s590 + $0x8] sm:$0xff]
        %v593 = vld [vmem:[%s590 + $0x10] sm:$0xff]
        %v594 = vld [vmem:[%s590 + $0x18] sm:$0xff]
        %v595 = vld [vmem:[%s590 + $0x20] sm:$0xff]
        %v596 = vld [vmem:[%s590 + $0x28] sm:$0xff]
        %v597 = vld [vmem:[%s590 + $0x30] sm:$0xff]
        %v598 = vld [vmem:[%s590 + $0x38] sm:$0xff]
        %599 = vrot.lane.b32.xlu0 %v406, 120
        %v600 = vpop.permute.xlu0 %599
        %601 = vrot.lane.b32.xlu0 %v407, 120
        %v602 = vpop.permute.xlu0 %601
        %v603 = vsel %vm431, %v600, 0
        %v605 = vsel %vm431, %v602, 0
        %607 = vmatprep.subr.mxu0 0.0
        %608 = vmatpush1.msra.mxu0 %v591
        %609 = vmatprep.subr.mxu0 0.0
        %610 = vmatpush1.msra.mxu0 %v592
        %611 = vmatprep.subr.mxu0 0.0
        %612 = vmatpush1.msra.mxu0 %v593
        %613 = vmatprep.subr.mxu0 0.0
        %614 = vmatpush1.msra.mxu0 %v594
        %615 = vmatprep.subr.mxu0 0.0
        %616 = vmatpush1.msra.mxu0 %v595
        %617 = vmatprep.subr.mxu0 0.0
        %618 = vmatpush1.msra.mxu0 %v596
        %619 = vmatprep.subr.mxu0 0.0
        %620 = vmatpush1.msra.mxu0 %v597
        %621 = vmatprep.subr.mxu0 0.0
        %622 = vmatpush1.msra.mxu0 %v598
        %623 = vmatprep.subr.mxu0 0.0
        %624 = vmatpush1.msra.mxu0 0.0
        %625 = vmatprep.subr.mxu0 0.0
        %626 = vmatpush1.msra.mxu0 0.0
        %627 = vmatprep.subr.mxu0 0.0
        %628 = vmatpush1.msra.mxu0 0.0
        %629 = vmatprep.subr.mxu0 0.0
        %630 = vmatpush1.msra.mxu0 0.0
        %631 = vmatprep.subr.mxu0 0.0
        %632 = vmatpush1.msra.mxu0 0.0
        %633 = vmatprep.subr.mxu0 0.0
        %634 = vmatpush1.msra.mxu0 0.0
        %635 = vmatprep.subr.mxu0 0.0
        %636 = vmatpush1.msra.mxu0 0.0
        %637 = vmatprep.subr.mxu0 0.0
        %638 = vmatpush1.msra.mxu0 0.0
        %639 = vmatprep.subr.mxu0 0.0
        %640 = vmatpush1.msra.mxu0 0.0
        %641 = vmatprep.subr.mxu0 0.0
        %642 = vmatpush1.msra.mxu0 0.0
        %643 = vmatprep.subr.mxu0 0.0
        %644 = vmatpush1.msra.mxu0 0.0
        %645 = vmatprep.subr.mxu0 0.0
        %646 = vmatpush1.msra.mxu0 0.0
        %647 = vmatprep.subr.mxu0 0.0
        %648 = vmatpush1.msra.mxu0 0.0
        %649 = vmatprep.subr.mxu0 0.0
        %650 = vmatpush1.msra.mxu0 0.0
        %651 = vmatprep.subr.mxu0 0.0
        %652 = vmatpush1.msra.mxu0 0.0
        %653 = vmatprep.subr.mxu0 0.0
        %654 = vmatpush1.msra.mxu0 0.0
        %655 = vmatprep.subr.mxu0 0.0
        %656 = vmatpush1.msra.mxu0 0.0
        %657 = vmatprep.subr.mxu0 0.0
        %658 = vmatpush1.msra.mxu0 0.0
        %659 = vmatprep.subr.mxu0 0.0
        %660 = vmatpush1.msra.mxu0 0.0
        %661 = vmatprep.subr.mxu0 0.0
        %662 = vmatpush1.msra.mxu0 0.0
        %663 = vmatprep.subr.mxu0 0.0
        %664 = vmatpush1.msra.mxu0 0.0
        %665 = vmatprep.subr.mxu0 0.0
        %666 = vmatpush1.msra.mxu0 0.0
        %667 = vmatprep.subr.mxu0 0.0
        %668 = vmatpush1.msra.mxu0 0.0
        %669 = vmatprep.subr.mxu0 0.0
        %670 = vmatpush1.msra.mxu0 0.0
        %671 = vmatprep.mubr.f32.mxu0 0.0
        %672 = vmatmul.mubr.f32.gmra.mrb[0].mxu0 %v603
        %v673 = vpop.f32.mrb[0].mxu0
        %v674 = vadd.f32 0.0, %v673
        %v675 = vpop.f32.mrb[0].mxu0
        %676 = vmatprep.mubr.f32.mxu0 0.0
        %677 = vmatmul.mubr.f32.gmra.mrb[0].mxu0 %v605
        %v678 = vpop.f32.mrb[0].mxu0
        %v679 = vadd.f32 0.0, %v678
        %v680 = vpop.f32.mrb[0].mxu0
        %681 = vdwg.mxu0
        %v682 = vadd.f32 %v582, %v674
        %v683 = vadd.f32 %v587, %v679
        %v684 = vld [vmem:[#allocation2 + $0x1] sm:$0xff]
        %v685 = vld [vmem:[#allocation2 + $0x9] sm:$0xff]
        %s686 = scalar_lea.vmem %s1, 192
        %v687 = vld [vmem:[%s686] sm:$0xff]
        %v688 = vld [vmem:[%s686 + $0x8] sm:$0xff]
        %v689 = vld [vmem:[%s686 + $0x10] sm:$0xff]
        %v690 = vld [vmem:[%s686 + $0x18] sm:$0xff]
        %v691 = vld [vmem:[%s686 + $0x20] sm:$0xff]
        %v692 = vld [vmem:[%s686 + $0x28] sm:$0xff]
        %v693 = vld [vmem:[%s686 + $0x30] sm:$0xff]
        %v694 = vld [vmem:[%s686 + $0x38] sm:$0xff]
        %v696 = vsel %vm431, %v684, 0
        %v699 = vsel %vm431, %v685, 0
        %701 = vmatprep.subr.mxu0 0.0
        %702 = vmatpush1.msra.mxu0 %v687
        %703 = vmatprep.subr.mxu0 0.0
        %704 = vmatpush1.msra.mxu0 %v688
        %705 = vmatprep.subr.mxu0 0.0
        %706 = vmatpush1.msra.mxu0 %v689
        %707 = vmatprep.subr.mxu0 0.0
        %708 = vmatpush1.msra.mxu0 %v690
        %709 = vmatprep.subr.mxu0 0.0
        %710 = vmatpush1.msra.mxu0 %v691
        %711 = vmatprep.subr.mxu0 0.0
        %712 = vmatpush1.msra.mxu0 %v692
        %713 = vmatprep.subr.mxu0 0.0
        %714 = vmatpush1.msra.mxu0 %v693
        %715 = vmatprep.subr.mxu0 0.0
        %716 = vmatpush1.msra.mxu0 %v694
        %717 = vmatprep.subr.mxu0 0.0
        %718 = vmatpush1.msra.mxu0 0.0
        %719 = vmatprep.subr.mxu0 0.0
        %720 = vmatpush1.msra.mxu0 0.0
        %721 = vmatprep.subr.mxu0 0.0
        %722 = vmatpush1.msra.mxu0 0.0
        %723 = vmatprep.subr.mxu0 0.0
        %724 = vmatpush1.msra.mxu0 0.0
        %725 = vmatprep.subr.mxu0 0.0
        %726 = vmatpush1.msra.mxu0 0.0
        %727 = vmatprep.subr.mxu0 0.0
        %728 = vmatpush1.msra.mxu0 0.0
        %729 = vmatprep.subr.mxu0 0.0
        %730 = vmatpush1.msra.mxu0 0.0
        %731 = vmatprep.subr.mxu0 0.0
        %732 = vmatpush1.msra.mxu0 0.0
        %733 = vmatprep.subr.mxu0 0.0
        %734 = vmatpush1.msra.mxu0 0.0
        %735 = vmatprep.subr.mxu0 0.0
        %736 = vmatpush1.msra.mxu0 0.0
        %737 = vmatprep.subr.mxu0 0.0
        %738 = vmatpush1.msra.mxu0 0.0
        %739 = vmatprep.subr.mxu0 0.0
        %740 = vmatpush1.msra.mxu0 0.0
        %741 = vmatprep.subr.mxu0 0.0
        %742 = vmatpush1.msra.mxu0 0.0
        %743 = vmatprep.subr.mxu0 0.0
        %744 = vmatpush1.msra.mxu0 0.0
        %745 = vmatprep.subr.mxu0 0.0
        %746 = vmatpush1.msra.mxu0 0.0
        %747 = vmatprep.subr.mxu0 0.0
        %748 = vmatpush1.msra.mxu0 0.0
        %749 = vmatprep.subr.mxu0 0.0
        %750 = vmatpush1.msra.mxu0 0.0
        %751 = vmatprep.subr.mxu0 0.0
        %752 = vmatpush1.msra.mxu0 0.0
        %753 = vmatprep.subr.mxu0 0.0
        %754 = vmatpush1.msra.mxu0 0.0
        %755 = vmatprep.subr.mxu0 0.0
        %756 = vmatpush1.msra.mxu0 0.0
        %757 = vmatprep.subr.mxu0 0.0
        %758 = vmatpush1.msra.mxu0 0.0
        %759 = vmatprep.subr.mxu0 0.0
        %760 = vmatpush1.msra.mxu0 0.0
        %761 = vmatprep.subr.mxu0 0.0
        %762 = vmatpush1.msra.mxu0 0.0
        %763 = vmatprep.subr.mxu0 0.0
        %764 = vmatpush1.msra.mxu0 0.0
        %765 = vmatprep.mubr.f32.mxu0 0.0
        %766 = vmatmul.mubr.f32.gmra.mrb[0].mxu0 %v696
        %v767 = vpop.f32.mrb[0].mxu0
        %v768 = vadd.f32 0.0, %v767
        %v769 = vpop.f32.mrb[0].mxu0
        %770 = vmatprep.mubr.f32.mxu0 0.0
        %771 = vmatmul.mubr.f32.gmra.mrb[0].mxu0 %v699
        %v772 = vpop.f32.mrb[0].mxu0
        %v773 = vadd.f32 0.0, %v772
        %v774 = vpop.f32.mrb[0].mxu0
        %775 = vdwg.mxu0
        %v776 = vadd.f32 %v682, %v768
        %v777 = vadd.f32 %v683, %v773
        %s778 = scalar_lea.vmem %s1, 256
        %v779 = vld [vmem:[%s778] sm:$0xff]
        %v780 = vld [vmem:[%s778 + $0x8] sm:$0xff]
        %v781 = vld [vmem:[%s778 + $0x10] sm:$0xff]
        %v782 = vld [vmem:[%s778 + $0x18] sm:$0xff]
        %v783 = vld [vmem:[%s778 + $0x20] sm:$0xff]
        %v784 = vld [vmem:[%s778 + $0x28] sm:$0xff]
        %v785 = vld [vmem:[%s778 + $0x30] sm:$0xff]
        %v786 = vld [vmem:[%s778 + $0x38] sm:$0xff]
        %787 = vrot.lane.b32.xlu0 %v684, 124
        %v788 = vpop.permute.xlu0 %787
        %789 = vrot.lane.b32.xlu0 %v685, 124
        %v790 = vpop.permute.xlu0 %789
        %v791 = vsel %vm431, %v788, 0
        %v793 = vsel %vm431, %v790, 0
        %795 = vmatprep.subr.mxu0 0.0
        %796 = vmatpush1.msra.mxu0 %v779
        %797 = vmatprep.subr.mxu0 0.0
        %798 = vmatpush1.msra.mxu0 %v780
        %799 = vmatprep.subr.mxu0 0.0
        %800 = vmatpush1.msra.mxu0 %v781
        %801 = vmatprep.subr.mxu0 0.0
        %802 = vmatpush1.msra.mxu0 %v782
        %803 = vmatprep.subr.mxu0 0.0
        %804 = vmatpush1.msra.mxu0 %v783
        %805 = vmatprep.subr.mxu0 0.0
        %806 = vmatpush1.msra.mxu0 %v784
        %807 = vmatprep.subr.mxu0 0.0
        %808 = vmatpush1.msra.mxu0 %v785
        %809 = vmatprep.subr.mxu0 0.0
        %810 = vmatpush1.msra.mxu0 %v786
        %811 = vmatprep.subr.mxu0 0.0
        %812 = vmatpush1.msra.mxu0 0.0
        %813 = vmatprep.subr.mxu0 0.0
        %814 = vmatpush1.msra.mxu0 0.0
        %815 = vmatprep.subr.mxu0 0.0
        %816 = vmatpush1.msra.mxu0 0.0
        %817 = vmatprep.subr.mxu0 0.0
        %818 = vmatpush1.msra.mxu0 0.0
        %819 = vmatprep.subr.mxu0 0.0
        %820 = vmatpush1.msra.mxu0 0.0
        %821 = vmatprep.subr.mxu0 0.0
        %822 = vmatpush1.msra.mxu0 0.0
        %823 = vmatprep.subr.mxu0 0.0
        %824 = vmatpush1.msra.mxu0 0.0
        %825 = vmatprep.subr.mxu0 0.0
        %826 = vmatpush1.msra.mxu0 0.0
        %827 = vmatprep.subr.mxu0 0.0
        %828 = vmatpush1.msra.mxu0 0.0
        %829 = vmatprep.subr.mxu0 0.0
        %830 = vmatpush1.msra.mxu0 0.0
        %831 = vmatprep.subr.mxu0 0.0
        %832 = vmatpush1.msra.mxu0 0.0
        %833 = vmatprep.subr.mxu0 0.0
        %834 = vmatpush1.msra.mxu0 0.0
        %835 = vmatprep.subr.mxu0 0.0
        %836 = vmatpush1.msra.mxu0 0.0
        %837 = vmatprep.subr.mxu0 0.0
        %838 = vmatpush1.msra.mxu0 0.0
        %839 = vmatprep.subr.mxu0 0.0
        %840 = vmatpush1.msra.mxu0 0.0
        %841 = vmatprep.subr.mxu0 0.0
        %842 = vmatpush1.msra.mxu0 0.0
        %843 = vmatprep.subr.mxu0 0.0
        %844 = vmatpush1.msra.mxu0 0.0
        %845 = vmatprep.subr.mxu0 0.0
        %846 = vmatpush1.msra.mxu0 0.0
        %847 = vmatprep.subr.mxu0 0.0
        %848 = vmatpush1.msra.mxu0 0.0
        %849 = vmatprep.subr.mxu0 0.0
        %850 = vmatpush1.msra.mxu0 0.0
        %851 = vmatprep.subr.mxu0 0.0
        %852 = vmatpush1.msra.mxu0 0.0
        %853 = vmatprep.subr.mxu0 0.0
        %854 = vmatpush1.msra.mxu0 0.0
        %855 = vmatprep.subr.mxu0 0.0
        %856 = vmatpush1.msra.mxu0 0.0
        %857 = vmatprep.subr.mxu0 0.0
        %858 = vmatpush1.msra.mxu0 0.0
        %859 = vmatprep.mubr.f32.mxu0 0.0
        %860 = vmatmul.mubr.f32.gmra.mrb[0].mxu0 %v791
        %v861 = vpop.f32.mrb[0].mxu0
        %v862 = vadd.f32 0.0, %v861
        %v863 = vpop.f32.mrb[0].mxu0
        %864 = vmatprep.mubr.f32.mxu0 0.0
        %865 = vmatmul.mubr.f32.gmra.mrb[0].mxu0 %v793
        %v866 = vpop.f32.mrb[0].mxu0
        %v867 = vadd.f32 0.0, %v866
        %v868 = vpop.f32.mrb[0].mxu0
        %869 = vdwg.mxu0
        %v870 = vadd.f32 %v776, %v862
        %v871 = vadd.f32 %v777, %v867
        %s872 = scalar_lea.vmem %s1, 320
        %v873 = vld [vmem:[%s872] sm:$0xff]
        %v874 = vld [vmem:[%s872 + $0x8] sm:$0xff]
        %v875 = vld [vmem:[%s872 + $0x10] sm:$0xff]
        %v876 = vld [vmem:[%s872 + $0x18] sm:$0xff]
        %v877 = vld [vmem:[%s872 + $0x20] sm:$0xff]
        %v878 = vld [vmem:[%s872 + $0x28] sm:$0xff]
        %v879 = vld [vmem:[%s872 + $0x30] sm:$0xff]
        %v880 = vld [vmem:[%s872 + $0x38] sm:$0xff]
        %881 = vrot.lane.b32.xlu0 %v684, 120
        %v882 = vpop.permute.xlu0 %881
        %883 = vrot.lane.b32.xlu0 %v685, 120
        %v884 = vpop.permute.xlu0 %883
        %v885 = vsel %vm431, %v882, 0
        %v887 = vsel %vm431, %v884, 0
        %889 = vmatprep.subr.mxu0 0.0
        %890 = vmatpush1.msra.mxu0 %v873
        %891 = vmatprep.subr.mxu0 0.0
        %892 = vmatpush1.msra.mxu0 %v874
        %893 = vmatprep.subr.mxu0 0.0
        %894 = vmatpush1.msra.mxu0 %v875
        %895 = vmatprep.subr.mxu0 0.0
        %896 = vmatpush1.msra.mxu0 %v876
        %897 = vmatprep.subr.mxu0 0.0
        %898 = vmatpush1.msra.mxu0 %v877
        %899 = vmatprep.subr.mxu0 0.0
        %900 = vmatpush1.msra.mxu0 %v878
        %901 = vmatprep.subr.mxu0 0.0
        %902 = vmatpush1.msra.mxu0 %v879
        %903 = vmatprep.subr.mxu0 0.0
        %904 = vmatpush1.msra.mxu0 %v880
        %905 = vmatprep.subr.mxu0 0.0
        %906 = vmatpush1.msra.mxu0 0.0
        %907 = vmatprep.subr.mxu0 0.0
        %908 = vmatpush1.msra.mxu0 0.0
        %909 = vmatprep.subr.mxu0 0.0
        %910 = vmatpush1.msra.mxu0 0.0
        %911 = vmatprep.subr.mxu0 0.0
        %912 = vmatpush1.msra.mxu0 0.0
        %913 = vmatprep.subr.mxu0 0.0
        %914 = vmatpush1.msra.mxu0 0.0
        %915 = vmatprep.subr.mxu0 0.0
        %916 = vmatpush1.msra.mxu0 0.0
        %917 = vmatprep.subr.mxu0 0.0
        %918 = vmatpush1.msra.mxu0 0.0
        %919 = vmatprep.subr.mxu0 0.0
        %920 = vmatpush1.msra.mxu0 0.0
        %921 = vmatprep.subr.mxu0 0.0
        %922 = vmatpush1.msra.mxu0 0.0
        %923 = vmatprep.subr.mxu0 0.0
        %924 = vmatpush1.msra.mxu0 0.0
        %925 = vmatprep.subr.mxu0 0.0
        %926 = vmatpush1.msra.mxu0 0.0
        %927 = vmatprep.subr.mxu0 0.0
        %928 = vmatpush1.msra.mxu0 0.0
        %929 = vmatprep.subr.mxu0 0.0
        %930 = vmatpush1.msra.mxu0 0.0
        %931 = vmatprep.subr.mxu0 0.0
        %932 = vmatpush1.msra.mxu0 0.0
        %933 = vmatprep.subr.mxu0 0.0
        %934 = vmatpush1.msra.mxu0 0.0
        %935 = vmatprep.subr.mxu0 0.0
        %936 = vmatpush1.msra.mxu0 0.0
        %937 = vmatprep.subr.mxu0 0.0
        %938 = vmatpush1.msra.mxu0 0.0
        %939 = vmatprep.subr.mxu0 0.0
        %940 = vmatpush1.msra.mxu0 0.0
        %941 = vmatprep.subr.mxu0 0.0
        %942 = vmatpush1.msra.mxu0 0.0
        %943 = vmatprep.subr.mxu0 0.0
        %944 = vmatpush1.msra.mxu0 0.0
        %945 = vmatprep.subr.mxu0 0.0
        %946 = vmatpush1.msra.mxu0 0.0
        %947 = vmatprep.subr.mxu0 0.0
        %948 = vmatpush1.msra.mxu0 0.0
        %949 = vmatprep.subr.mxu0 0.0
        %950 = vmatpush1.msra.mxu0 0.0
        %951 = vmatprep.subr.mxu0 0.0
        %952 = vmatpush1.msra.mxu0 0.0
        %953 = vmatprep.mubr.f32.mxu0 0.0
        %954 = vmatmul.mubr.f32.gmra.mrb[0].mxu0 %v885
        %v955 = vpop.f32.mrb[0].mxu0
        %v956 = vadd.f32 0.0, %v955
        %v957 = vpop.f32.mrb[0].mxu0
        %958 = vmatprep.mubr.f32.mxu0 0.0
        %959 = vmatmul.mubr.f32.gmra.mrb[0].mxu0 %v887
        %v960 = vpop.f32.mrb[0].mxu0
        %v961 = vadd.f32 0.0, %v960
        %v962 = vpop.f32.mrb[0].mxu0
        %963 = vdwg.mxu0
        %v964 = vadd.f32 %v870, %v956
        %v965 = vadd.f32 %v871, %v961
        %v966 = vld [vmem:[#allocation2 + $0x2] sm:$0xff]
        %v967 = vld [vmem:[#allocation2 + $0xa] sm:$0xff]
        %s968 = scalar_lea.vmem %s1, 384
        %v969 = vld [vmem:[%s968] sm:$0xff]
        %v970 = vld [vmem:[%s968 + $0x8] sm:$0xff]
        %v971 = vld [vmem:[%s968 + $0x10] sm:$0xff]
        %v972 = vld [vmem:[%s968 + $0x18] sm:$0xff]
        %v973 = vld [vmem:[%s968 + $0x20] sm:$0xff]
        %v974 = vld [vmem:[%s968 + $0x28] sm:$0xff]
        %v975 = vld [vmem:[%s968 + $0x30] sm:$0xff]
        %v976 = vld [vmem:[%s968 + $0x38] sm:$0xff]
        %v978 = vsel %vm431, %v966, 0
        %v981 = vsel %vm431, %v967, 0
        %983 = vmatprep.subr.mxu0 0.0
        %984 = vmatpush1.msra.mxu0 %v969
        %985 = vmatprep.subr.mxu0 0.0
        %986 = vmatpush1.msra.mxu0 %v970
        %987 = vmatprep.subr.mxu0 0.0
        %988 = vmatpush1.msra.mxu0 %v971
        %989 = vmatprep.subr.mxu0 0.0
        %990 = vmatpush1.msra.mxu0 %v972
        %991 = vmatprep.subr.mxu0 0.0
        %992 = vmatpush1.msra.mxu0 %v973
        %993 = vmatprep.subr.mxu0 0.0
        %994 = vmatpush1.msra.mxu0 %v974
        %995 = vmatprep.subr.mxu0 0.0
        %996 = vmatpush1.msra.mxu0 %v975
        %997 = vmatprep.subr.mxu0 0.0
        %998 = vmatpush1.msra.mxu0 %v976
        %999 = vmatprep.subr.mxu0 0.0
        %1000 = vmatpush1.msra.mxu0 0.0
        %1001 = vmatprep.subr.mxu0 0.0
        %1002 = vmatpush1.msra.mxu0 0.0
        %1003 = vmatprep.subr.mxu0 0.0
        %1004 = vmatpush1.msra.mxu0 0.0
        %1005 = vmatprep.subr.mxu0 0.0
        %1006 = vmatpush1.msra.mxu0 0.0
        %1007 = vmatprep.subr.mxu0 0.0
        %1008 = vmatpush1.msra.mxu0 0.0
        %1009 = vmatprep.subr.mxu0 0.0
        %1010 = vmatpush1.msra.mxu0 0.0
        %1011 = vmatprep.subr.mxu0 0.0
        %1012 = vmatpush1.msra.mxu0 0.0
        %1013 = vmatprep.subr.mxu0 0.0
        %1014 = vmatpush1.msra.mxu0 0.0
        %1015 = vmatprep.subr.mxu0 0.0
        %1016 = vmatpush1.msra.mxu0 0.0
        %1017 = vmatprep.subr.mxu0 0.0
        %1018 = vmatpush1.msra.mxu0 0.0
        %1019 = vmatprep.subr.mxu0 0.0
        %1020 = vmatpush1.msra.mxu0 0.0
        %1021 = vmatprep.subr.mxu0 0.0
        %1022 = vmatpush1.msra.mxu0 0.0
        %1023 = vmatprep.subr.mxu0 0.0
        %1024 = vmatpush1.msra.mxu0 0.0
        %1025 = vmatprep.subr.mxu0 0.0
        %1026 = vmatpush1.msra.mxu0 0.0
        %1027 = vmatprep.subr.mxu0 0.0
        %1028 = vmatpush1.msra.mxu0 0.0
        %1029 = vmatprep.subr.mxu0 0.0
        %1030 = vmatpush1.msra.mxu0 0.0
        %1031 = vmatprep.subr.mxu0 0.0
        %1032 = vmatpush1.msra.mxu0 0.0
        %1033 = vmatprep.subr.mxu0 0.0
        %1034 = vmatpush1.msra.mxu0 0.0
        %1035 = vmatprep.subr.mxu0 0.0
        %1036 = vmatpush1.msra.mxu0 0.0
        %1037 = vmatprep.subr.mxu0 0.0
        %1038 = vmatpush1.msra.mxu0 0.0
        %1039 = vmatprep.subr.mxu0 0.0
        %1040 = vmatpush1.msra.mxu0 0.0
        %1041 = vmatprep.subr.mxu0 0.0
        %1042 = vmatpush1.msra.mxu0 0.0
        %1043 = vmatprep.subr.mxu0 0.0
        %1044 = vmatpush1.msra.mxu0 0.0
        %1045 = vmatprep.subr.mxu0 0.0
        %1046 = vmatpush1.msra.mxu0 0.0
        %1047 = vmatprep.mubr.f32.mxu0 0.0
        %1048 = vmatmul.mubr.f32.gmra.mrb[0].mxu0 %v978
        %v1049 = vpop.f32.mrb[0].mxu0
        %v1050 = vadd.f32 0.0, %v1049
        %v1051 = vpop.f32.mrb[0].mxu0
        %1052 = vmatprep.mubr.f32.mxu0 0.0
        %1053 = vmatmul.mubr.f32.gmra.mrb[0].mxu0 %v981
        %v1054 = vpop.f32.mrb[0].mxu0
        %v1055 = vadd.f32 0.0, %v1054
        %v1056 = vpop.f32.mrb[0].mxu0
        %1057 = vdwg.mxu0
        %v1058 = vadd.f32 %v964, %v1050
        %v1059 = vadd.f32 %v965, %v1055
        %s1060 = scalar_lea.vmem %s1, 448
        %v1061 = vld [vmem:[%s1060] sm:$0xff]
        %v1062 = vld [vmem:[%s1060 + $0x8] sm:$0xff]
        %v1063 = vld [vmem:[%s1060 + $0x10] sm:$0xff]
        %v1064 = vld [vmem:[%s1060 + $0x18] sm:$0xff]
        %v1065 = vld [vmem:[%s1060 + $0x20] sm:$0xff]
        %v1066 = vld [vmem:[%s1060 + $0x28] sm:$0xff]
        %v1067 = vld [vmem:[%s1060 + $0x30] sm:$0xff]
        %v1068 = vld [vmem:[%s1060 + $0x38] sm:$0xff]
        %1069 = vrot.lane.b32.xlu0 %v966, 124
        %v1070 = vpop.permute.xlu0 %1069
        %1071 = vrot.lane.b32.xlu0 %v967, 124
        %v1072 = vpop.permute.xlu0 %1071
        %v1073 = vsel %vm431, %v1070, 0
        %v1075 = vsel %vm431, %v1072, 0
        %1077 = vmatprep.subr.mxu0 0.0
        %1078 = vmatpush1.msra.mxu0 %v1061
        %1079 = vmatprep.subr.mxu0 0.0
        %1080 = vmatpush1.msra.mxu0 %v1062
        %1081 = vmatprep.subr.mxu0 0.0
        %1082 = vmatpush1.msra.mxu0 %v1063
        %1083 = vmatprep.subr.mxu0 0.0
        %1084 = vmatpush1.msra.mxu0 %v1064
        %1085 = vmatprep.subr.mxu0 0.0
        %1086 = vmatpush1.msra.mxu0 %v1065
        %1087 = vmatprep.subr.mxu0 0.0
        %1088 = vmatpush1.msra.mxu0 %v1066
        %1089 = vmatprep.subr.mxu0 0.0
        %1090 = vmatpush1.msra.mxu0 %v1067
        %1091 = vmatprep.subr.mxu0 0.0
        %1092 = vmatpush1.msra.mxu0 %v1068
        %1093 = vmatprep.subr.mxu0 0.0
        %1094 = vmatpush1.msra.mxu0 0.0
        %1095 = vmatprep.subr.mxu0 0.0
        %1096 = vmatpush1.msra.mxu0 0.0
        %1097 = vmatprep.subr.mxu0 0.0
        %1098 = vmatpush1.msra.mxu0 0.0
        %1099 = vmatprep.subr.mxu0 0.0
        %1100 = vmatpush1.msra.mxu0 0.0
        %1101 = vmatprep.subr.mxu0 0.0
        %1102 = vmatpush1.msra.mxu0 0.0
        %1103 = vmatprep.subr.mxu0 0.0
        %1104 = vmatpush1.msra.mxu0 0.0
        %1105 = vmatprep.subr.mxu0 0.0
        %1106 = vmatpush1.msra.mxu0 0.0
        %1107 = vmatprep.subr.mxu0 0.0
        %1108 = vmatpush1.msra.mxu0 0.0
        %1109 = vmatprep.subr.mxu0 0.0
        %1110 = vmatpush1.msra.mxu0 0.0
        %1111 = vmatprep.subr.mxu0 0.0
        %1112 = vmatpush1.msra.mxu0 0.0
        %1113 = vmatprep.subr.mxu0 0.0
        %1114 = vmatpush1.msra.mxu0 0.0
        %1115 = vmatprep.subr.mxu0 0.0
        %1116 = vmatpush1.msra.mxu0 0.0
        %1117 = vmatprep.subr.mxu0 0.0
        %1118 = vmatpush1.msra.mxu0 0.0
        %1119 = vmatprep.subr.mxu0 0.0
        %1120 = vmatpush1.msra.mxu0 0.0
        %1121 = vmatprep.subr.mxu0 0.0
        %1122 = vmatpush1.msra.mxu0 0.0
        %1123 = vmatprep.subr.mxu0 0.0
        %1124 = vmatpush1.msra.mxu0 0.0
        %1125 = vmatprep.subr.mxu0 0.0
        %1126 = vmatpush1.msra.mxu0 0.0
        %1127 = vmatprep.subr.mxu0 0.0
        %1128 = vmatpush1.msra.mxu0 0.0
        %1129 = vmatprep.subr.mxu0 0.0
        %1130 = vmatpush1.msra.mxu0 0.0
        %1131 = vmatprep.subr.mxu0 0.0
        %1132 = vmatpush1.msra.mxu0 0.0
        %1133 = vmatprep.subr.mxu0 0.0
        %1134 = vmatpush1.msra.mxu0 0.0
        %1135 = vmatprep.subr.mxu0 0.0
        %1136 = vmatpush1.msra.mxu0 0.0
        %1137 = vmatprep.subr.mxu0 0.0
        %1138 = vmatpush1.msra.mxu0 0.0
        %1139 = vmatprep.subr.mxu0 0.0
        %1140 = vmatpush1.msra.mxu0 0.0
        %1141 = vmatprep.mubr.f32.mxu0 0.0
        %1142 = vmatmul.mubr.f32.gmra.mrb[0].mxu0 %v1073
        %v1143 = vpop.f32.mrb[0].mxu0
        %v1144 = vadd.f32 0.0, %v1143
        %v1145 = vpop.f32.mrb[0].mxu0
        %1146 = vmatprep.mubr.f32.mxu0 0.0
        %1147 = vmatmul.mubr.f32.gmra.mrb[0].mxu0 %v1075
        %v1148 = vpop.f32.mrb[0].mxu0
        %v1149 = vadd.f32 0.0, %v1148
        %v1150 = vpop.f32.mrb[0].mxu0
        %1151 = vdwg.mxu0
        %v1152 = vadd.f32 %v1058, %v1144
        %v1153 = vadd.f32 %v1059, %v1149
        %s1154 = scalar_lea.vmem %s1, 512
        %v1155 = vld [vmem:[%s1154] sm:$0xff]
        %v1156 = vld [vmem:[%s1154 + $0x8] sm:$0xff]
        %v1157 = vld [vmem:[%s1154 + $0x10] sm:$0xff]
        %v1158 = vld [vmem:[%s1154 + $0x18] sm:$0xff]
        %v1159 = vld [vmem:[%s1154 + $0x20] sm:$0xff]
        %v1160 = vld [vmem:[%s1154 + $0x28] sm:$0xff]
        %v1161 = vld [vmem:[%s1154 + $0x30] sm:$0xff]
        %v1162 = vld [vmem:[%s1154 + $0x38] sm:$0xff]
        %1163 = vrot.lane.b32.xlu0 %v966, 120
        %v1164 = vpop.permute.xlu0 %1163
        %1165 = vrot.lane.b32.xlu0 %v967, 120
        %v1166 = vpop.permute.xlu0 %1165
        %v1167 = vsel %vm431, %v1164, 0
        %v1169 = vsel %vm431, %v1166, 0
        %1171 = vmatprep.subr.mxu0 0.0
        %1172 = vmatpush1.msra.mxu0 %v1155
        %1173 = vmatprep.subr.mxu0 0.0
        %1174 = vmatpush1.msra.mxu0 %v1156
        %1175 = vmatprep.subr.mxu0 0.0
        %1176 = vmatpush1.msra.mxu0 %v1157
        %1177 = vmatprep.subr.mxu0 0.0
        %1178 = vmatpush1.msra.mxu0 %v1158
        %1179 = vmatprep.subr.mxu0 0.0
        %1180 = vmatpush1.msra.mxu0 %v1159
        %1181 = vmatprep.subr.mxu0 0.0
        %1182 = vmatpush1.msra.mxu0 %v1160
        %1183 = vmatprep.subr.mxu0 0.0
        %1184 = vmatpush1.msra.mxu0 %v1161
        %1185 = vmatprep.subr.mxu0 0.0
        %1186 = vmatpush1.msra.mxu0 %v1162
        %1187 = vmatprep.subr.mxu0 0.0
        %1188 = vmatpush1.msra.mxu0 0.0
        %1189 = vmatprep.subr.mxu0 0.0
        %1190 = vmatpush1.msra.mxu0 0.0
        %1191 = vmatprep.subr.mxu0 0.0
        %1192 = vmatpush1.msra.mxu0 0.0
        %1193 = vmatprep.subr.mxu0 0.0
        %1194 = vmatpush1.msra.mxu0 0.0
        %1195 = vmatprep.subr.mxu0 0.0
        %1196 = vmatpush1.msra.mxu0 0.0
        %1197 = vmatprep.subr.mxu0 0.0
        %1198 = vmatpush1.msra.mxu0 0.0
        %1199 = vmatprep.subr.mxu0 0.0
        %1200 = vmatpush1.msra.mxu0 0.0
        %1201 = vmatprep.subr.mxu0 0.0
        %1202 = vmatpush1.msra.mxu0 0.0
        %1203 = vmatprep.subr.mxu0 0.0
        %1204 = vmatpush1.msra.mxu0 0.0
        %1205 = vmatprep.subr.mxu0 0.0
        %1206 = vmatpush1.msra.mxu0 0.0
        %1207 = vmatprep.subr.mxu0 0.0
        %1208 = vmatpush1.msra.mxu0 0.0
        %1209 = vmatprep.subr.mxu0 0.0
        %1210 = vmatpush1.msra.mxu0 0.0
        %1211 = vmatprep.subr.mxu0 0.0
        %1212 = vmatpush1.msra.mxu0 0.0
        %1213 = vmatprep.subr.mxu0 0.0
        %1214 = vmatpush1.msra.mxu0 0.0
        %1215 = vmatprep.subr.mxu0 0.0
        %1216 = vmatpush1.msra.mxu0 0.0
        %1217 = vmatprep.subr.mxu0 0.0
        %1218 = vmatpush1.msra.mxu0 0.0
        %1219 = vmatprep.subr.mxu0 0.0
        %1220 = vmatpush1.msra.mxu0 0.0
        %1221 = vmatprep.subr.mxu0 0.0
        %1222 = vmatpush1.msra.mxu0 0.0
        %1223 = vmatprep.subr.mxu0 0.0
        %1224 = vmatpush1.msra.mxu0 0.0
        %1225 = vmatprep.subr.mxu0 0.0
        %1226 = vmatpush1.msra.mxu0 0.0
        %1227 = vmatprep.subr.mxu0 0.0
        %1228 = vmatpush1.msra.mxu0 0.0
        %1229 = vmatprep.subr.mxu0 0.0
        %1230 = vmatpush1.msra.mxu0 0.0
        %1231 = vmatprep.subr.mxu0 0.0
        %1232 = vmatpush1.msra.mxu0 0.0
        %1233 = vmatprep.subr.mxu0 0.0
        %1234 = vmatpush1.msra.mxu0 0.0
        %1235 = vmatprep.mubr.f32.mxu0 0.0
        %1236 = vmatmul.mubr.f32.gmra.mrb[0].mxu0 %v1167
        %v1237 = vpop.f32.mrb[0].mxu0
        %v1238 = vadd.f32 0.0, %v1237
        %v1239 = vpop.f32.mrb[0].mxu0
        %1240 = vmatprep.mubr.f32.mxu0 0.0
        %1241 = vmatmul.mubr.f32.gmra.mrb[0].mxu0 %v1169
        %v1242 = vpop.f32.mrb[0].mxu0
        %v1243 = vadd.f32 0.0, %v1242
        %v1244 = vpop.f32.mrb[0].mxu0
        %1245 = vdwg.mxu0
        %v1246 = vadd.f32 %v1152, %v1238
        %v1247 = vadd.f32 %v1153, %v1243
        %v1248 = vld [vmem:[%s2] sm:$0x1]
        %v1250 = vlaneseq
        %v1251 = vshrl.u32 %v1250, 7
        %v1252 = vsub.s32 0, %v1251
        %v1253 = vrot.slane %v1248, %v1252
        %v1255 = vadd.f32 %v1246, %v1253
        %v1256 = vadd.f32 %v1247, %v1253
        %v1257 = vmax.f32 %v1255, 0.0
        %v1258 = vmax.f32 %v1256, 0.0
        %v1259 = vld [vmem:[%s5] sm:$0xff]
        %vm1260 = vcmask 130048
        %v1262 = vsel %vm1260, %v1259, 0
        %1264 = vmatprep.subr.mxu0 0.0
        %1265 = vmatpush1.msra.mxu0 %v1257
        %1266 = vmatprep.subr.mxu0 0.0
        %1267 = vmatpush1.msra.mxu0 %v1258
        %1268 = vmatprep.subr.mxu0 0.0
        %1269 = vmatpush1.msra.mxu0 0.0
        %1270 = vmatprep.subr.mxu0 0.0
        %1271 = vmatpush1.msra.mxu0 0.0
        %1272 = vmatprep.subr.mxu0 0.0
        %1273 = vmatpush1.msra.mxu0 0.0
        %1274 = vmatprep.subr.mxu0 0.0
        %1275 = vmatpush1.msra.mxu0 0.0
        %1276 = vmatprep.subr.mxu0 0.0
        %1277 = vmatpush1.msra.mxu0 0.0
        %1278 = vmatprep.subr.mxu0 0.0
        %1279 = vmatpush1.msra.mxu0 0.0
        %1280 = vmatprep.subr.mxu0 0.0
        %1281 = vmatpush1.msra.mxu0 0.0
        %1282 = vmatprep.subr.mxu0 0.0
        %1283 = vmatpush1.msra.mxu0 0.0
        %1284 = vmatprep.subr.mxu0 0.0
        %1285 = vmatpush1.msra.mxu0 0.0
        %1286 = vmatprep.subr.mxu0 0.0
        %1287 = vmatpush1.msra.mxu0 0.0
        %1288 = vmatprep.subr.mxu0 0.0
        %1289 = vmatpush1.msra.mxu0 0.0
        %1290 = vmatprep.subr.mxu0 0.0
        %1291 = vmatpush1.msra.mxu0 0.0
        %1292 = vmatprep.subr.mxu0 0.0
        %1293 = vmatpush1.msra.mxu0 0.0
        %1294 = vmatprep.subr.mxu0 0.0
        %1295 = vmatpush1.msra.mxu0 0.0
        %1296 = vmatprep.subr.mxu0 0.0
        %1297 = vmatpush1.msra.mxu0 0.0
        %1298 = vmatprep.subr.mxu0 0.0
        %1299 = vmatpush1.msra.mxu0 0.0
        %1300 = vmatprep.subr.mxu0 0.0
        %1301 = vmatpush1.msra.mxu0 0.0
        %1302 = vmatprep.subr.mxu0 0.0
        %1303 = vmatpush1.msra.mxu0 0.0
        %1304 = vmatprep.subr.mxu0 0.0
        %1305 = vmatpush1.msra.mxu0 0.0
        %1306 = vmatprep.subr.mxu0 0.0
        %1307 = vmatpush1.msra.mxu0 0.0
        %1308 = vmatprep.subr.mxu0 0.0
        %1309 = vmatpush1.msra.mxu0 0.0
        %1310 = vmatprep.subr.mxu0 0.0
        %1311 = vmatpush1.msra.mxu0 0.0
        %1312 = vmatprep.subr.mxu0 0.0
        %1313 = vmatpush1.msra.mxu0 0.0
        %1314 = vmatprep.subr.mxu0 0.0
        %1315 = vmatpush1.msra.mxu0 0.0
        %1316 = vmatprep.subr.mxu0 0.0
        %1317 = vmatpush1.msra.mxu0 0.0
        %1318 = vmatprep.subr.mxu0 0.0
        %1319 = vmatpush1.msra.mxu0 0.0
        %1320 = vmatprep.subr.mxu0 0.0
        %1321 = vmatpush1.msra.mxu0 0.0
        %1322 = vmatprep.subr.mxu0 0.0
        %1323 = vmatpush1.msra.mxu0 0.0
        %1324 = vmatprep.subr.mxu0 0.0
        %1325 = vmatpush1.msra.mxu0 0.0
        %1326 = vmatprep.subr.mxu0 0.0
        %1327 = vmatpush1.msra.mxu0 0.0
        %1328 = vmatprep.mubr.f32.mxu0 0.0
        %1329 = vmatmul.mubr.f32.gmra.mrb[0].mxu0 %v1262
        %v1330 = vpop.f32.mrb[0].mxu0
        %v1331 = vadd.f32 0.0, %v1330
        %v1332 = vpop.f32.mrb[0].mxu0
        %1333 = vdwg.mxu0
        %s1334 = scalar_lea.vmem %s5, 8
        %v1335 = vld [vmem:[%s1334] sm:$0xff]
        %v1337 = vsel %vm1260, %v1335, 0
        %1339 = vmatprep.subr.mxu0 0.0
        %1340 = vmatpush1.msra.mxu0 %v1257
        %1341 = vmatprep.subr.mxu0 0.0
        %1342 = vmatpush1.msra.mxu0 %v1258
        %1343 = vmatprep.subr.mxu0 0.0
        %1344 = vmatpush1.msra.mxu0 0.0
        %1345 = vmatprep.subr.mxu0 0.0
        %1346 = vmatpush1.msra.mxu0 0.0
        %1347 = vmatprep.subr.mxu0 0.0
        %1348 = vmatpush1.msra.mxu0 0.0
        %1349 = vmatprep.subr.mxu0 0.0
        %1350 = vmatpush1.msra.mxu0 0.0
        %1351 = vmatprep.subr.mxu0 0.0
        %1352 = vmatpush1.msra.mxu0 0.0
        %1353 = vmatprep.subr.mxu0 0.0
        %1354 = vmatpush1.msra.mxu0 0.0
        %1355 = vmatprep.subr.mxu0 0.0
        %1356 = vmatpush1.msra.mxu0 0.0
        %1357 = vmatprep.subr.mxu0 0.0
        %1358 = vmatpush1.msra.mxu0 0.0
        %1359 = vmatprep.subr.mxu0 0.0
        %1360 = vmatpush1.msra.mxu0 0.0
        %1361 = vmatprep.subr.mxu0 0.0
        %1362 = vmatpush1.msra.mxu0 0.0
        %1363 = vmatprep.subr.mxu0 0.0
        %1364 = vmatpush1.msra.mxu0 0.0
        %1365 = vmatprep.subr.mxu0 0.0
        %1366 = vmatpush1.msra.mxu0 0.0
        %1367 = vmatprep.subr.mxu0 0.0
        %1368 = vmatpush1.msra.mxu0 0.0
        %1369 = vmatprep.subr.mxu0 0.0
        %1370 = vmatpush1.msra.mxu0 0.0
        %1371 = vmatprep.subr.mxu0 0.0
        %1372 = vmatpush1.msra.mxu0 0.0
        %1373 = vmatprep.subr.mxu0 0.0
        %1374 = vmatpush1.msra.mxu0 0.0
        %1375 = vmatprep.subr.mxu0 0.0
        %1376 = vmatpush1.msra.mxu0 0.0
        %1377 = vmatprep.subr.mxu0 0.0
        %1378 = vmatpush1.msra.mxu0 0.0
        %1379 = vmatprep.subr.mxu0 0.0
        %1380 = vmatpush1.msra.mxu0 0.0
        %1381 = vmatprep.subr.mxu0 0.0
        %1382 = vmatpush1.msra.mxu0 0.0
        %1383 = vmatprep.subr.mxu0 0.0
        %1384 = vmatpush1.msra.mxu0 0.0
        %1385 = vmatprep.subr.mxu0 0.0
        %1386 = vmatpush1.msra.mxu0 0.0
        %1387 = vmatprep.subr.mxu0 0.0
        %1388 = vmatpush1.msra.mxu0 0.0
        %1389 = vmatprep.subr.mxu0 0.0
        %1390 = vmatpush1.msra.mxu0 0.0
        %1391 = vmatprep.subr.mxu0 0.0
        %1392 = vmatpush1.msra.mxu0 0.0
        %1393 = vmatprep.subr.mxu0 0.0
        %1394 = vmatpush1.msra.mxu0 0.0
        %1395 = vmatprep.subr.mxu0 0.0
        %1396 = vmatpush1.msra.mxu0 0.0
        %1397 = vmatprep.subr.mxu0 0.0
        %1398 = vmatpush1.msra.mxu0 0.0
        %1399 = vmatprep.subr.mxu0 0.0
        %1400 = vmatpush1.msra.mxu0 0.0
        %1401 = vmatprep.subr.mxu0 0.0
        %1402 = vmatpush1.msra.mxu0 0.0
        %1403 = vmatprep.mubr.f32.mxu0 0.0
        %1404 = vmatmul.mubr.f32.gmra.mrb[0].mxu0 %v1337
        %v1405 = vpop.f32.mrb[0].mxu0
        %v1406 = vadd.f32 0.0, %v1405
        %v1407 = vpop.f32.mrb[0].mxu0
        %1408 = vdwg.mxu0
        %v1409 = vmax.f32 %v1331, %v1406
        %v1410 = vld [vmem:[%s6] sm:$0xff]
        %v1411 = vld [vmem:[%s6 + $0x8] sm:$0xff]
        %v1412 = vld [vmem:[%s6 + $0x10] sm:$0xff]
        %v1413 = vld [vmem:[%s6 + $0x18] sm:$0xff]
        %v1414 = vld [vmem:[%s6 + $0x20] sm:$0xff]
        %v1415 = vld [vmem:[%s6 + $0x28] sm:$0xff]
        %v1416 = vld [vmem:[%s6 + $0x30] sm:$0xff]
        %v1417 = vld [vmem:[%s6 + $0x38] sm:$0xff]
        %v1418 = vld [vmem:[%s6 + $0x40] sm:$0xff]
        %v1419 = vld [vmem:[%s6 + $0x48] sm:$0xff]
        %v1420 = vld [vmem:[%s6 + $0x50] sm:$0xff]
        %v1421 = vld [vmem:[%s6 + $0x58] sm:$0xff]
        %v1422 = vld [vmem:[%s6 + $0x60] sm:$0xff]
        %v1423 = vld [vmem:[%s6 + $0x68] sm:$0xff]
        %v1424 = vld [vmem:[%s6 + $0x70] sm:$0xff]
        %v1425 = vld [vmem:[%s6 + $0x78] sm:$0xff]
        %1426 = vmatprep.subr.mxu0 0.0
        %1427 = vmatpush1.msra.mxu0 %v1410
        %1428 = vmatprep.subr.mxu0 0.0
        %1429 = vmatpush1.msra.mxu0 %v1411
        %1430 = vmatprep.subr.mxu0 0.0
        %1431 = vmatpush1.msra.mxu0 %v1412
        %1432 = vmatprep.subr.mxu0 0.0
        %1433 = vmatpush1.msra.mxu0 %v1413
        %1434 = vmatprep.subr.mxu0 0.0
        %1435 = vmatpush1.msra.mxu0 %v1414
        %1436 = vmatprep.subr.mxu0 0.0
        %1437 = vmatpush1.msra.mxu0 %v1415
        %1438 = vmatprep.subr.mxu0 0.0
        %1439 = vmatpush1.msra.mxu0 %v1416
        %1440 = vmatprep.subr.mxu0 0.0
        %1441 = vmatpush1.msra.mxu0 %v1417
        %1442 = vmatprep.subr.mxu0 0.0
        %1443 = vmatpush1.msra.mxu0 %v1418
        %1444 = vmatprep.subr.mxu0 0.0
        %1445 = vmatpush1.msra.mxu0 %v1419
        %1446 = vmatprep.subr.mxu0 0.0
        %1447 = vmatpush1.msra.mxu0 %v1420
        %1448 = vmatprep.subr.mxu0 0.0
        %1449 = vmatpush1.msra.mxu0 %v1421
        %1450 = vmatprep.subr.mxu0 0.0
        %1451 = vmatpush1.msra.mxu0 %v1422
        %1452 = vmatprep.subr.mxu0 0.0
        %1453 = vmatpush1.msra.mxu0 %v1423
        %1454 = vmatprep.subr.mxu0 0.0
        %1455 = vmatpush1.msra.mxu0 %v1424
        %1456 = vmatprep.subr.mxu0 0.0
        %1457 = vmatpush1.msra.mxu0 %v1425
        %1458 = vmatprep.subr.mxu0 0.0
        %1459 = vmatpush1.msra.mxu0 0.0
        %1460 = vmatprep.subr.mxu0 0.0
        %1461 = vmatpush1.msra.mxu0 0.0
        %1462 = vmatprep.subr.mxu0 0.0
        %1463 = vmatpush1.msra.mxu0 0.0
        %1464 = vmatprep.subr.mxu0 0.0
        %1465 = vmatpush1.msra.mxu0 0.0
        %1466 = vmatprep.subr.mxu0 0.0
        %1467 = vmatpush1.msra.mxu0 0.0
        %1468 = vmatprep.subr.mxu0 0.0
        %1469 = vmatpush1.msra.mxu0 0.0
        %1470 = vmatprep.subr.mxu0 0.0
        %1471 = vmatpush1.msra.mxu0 0.0
        %1472 = vmatprep.subr.mxu0 0.0
        %1473 = vmatpush1.msra.mxu0 0.0
        %1474 = vmatprep.subr.mxu0 0.0
        %1475 = vmatpush1.msra.mxu0 0.0
        %1476 = vmatprep.subr.mxu0 0.0
        %1477 = vmatpush1.msra.mxu0 0.0
        %1478 = vmatprep.subr.mxu0 0.0
        %1479 = vmatpush1.msra.mxu0 0.0
        %1480 = vmatprep.subr.mxu0 0.0
        %1481 = vmatpush1.msra.mxu0 0.0
        %1482 = vmatprep.subr.mxu0 0.0
        %1483 = vmatpush1.msra.mxu0 0.0
        %1484 = vmatprep.subr.mxu0 0.0
        %1485 = vmatpush1.msra.mxu0 0.0
        %1486 = vmatprep.subr.mxu0 0.0
        %1487 = vmatpush1.msra.mxu0 0.0
        %1488 = vmatprep.subr.mxu0 0.0
        %1489 = vmatpush1.msra.mxu0 0.0
        %1490 = vmatprep.mubr.f32.mxu0 0.0
        %1491 = vmatmul.mubr.f32.gmra.mrb[0].mxu0 %v1409
        %v1492 = vpop.f32.mrb[0].mxu0
        %v1493 = vadd.f32 0.0, %v1492
        %v1494 = vpop.f32.mrb[0].mxu0
        %1495 = vdwg.mxu0
        %s1496 = scalar_lea.vmem %s6, 128
        %v1497 = vld [vmem:[%s1496] sm:$0xff]
        %v1498 = vld [vmem:[%s1496 + $0x8] sm:$0xff]
        %v1499 = vld [vmem:[%s1496 + $0x10] sm:$0xff]
        %v1500 = vld [vmem:[%s1496 + $0x18] sm:$0xff]
        %v1501 = vld [vmem:[%s1496 + $0x20] sm:$0xff]
        %v1502 = vld [vmem:[%s1496 + $0x28] sm:$0xff]
        %v1503 = vld [vmem:[%s1496 + $0x30] sm:$0xff]
        %v1504 = vld [vmem:[%s1496 + $0x38] sm:$0xff]
        %v1505 = vld [vmem:[%s1496 + $0x40] sm:$0xff]
        %v1506 = vld [vmem:[%s1496 + $0x48] sm:$0xff]
        %v1507 = vld [vmem:[%s1496 + $0x50] sm:$0xff]
        %v1508 = vld [vmem:[%s1496 + $0x58] sm:$0xff]
        %v1509 = vld [vmem:[%s1496 + $0x60] sm:$0xff]
        %v1510 = vld [vmem:[%s1496 + $0x68] sm:$0xff]
        %v1511 = vld [vmem:[%s1496 + $0x70] sm:$0xff]
        %v1512 = vld [vmem:[%s1496 + $0x78] sm:$0xff]
        %1513 = vmatprep.subr.mxu0 0.0
        %1514 = vmatpush1.msra.mxu0 %v1497
        %1515 = vmatprep.subr.mxu0 0.0
        %1516 = vmatpush1.msra.mxu0 %v1498
        %1517 = vmatprep.subr.mxu0 0.0
        %1518 = vmatpush1.msra.mxu0 %v1499
        %1519 = vmatprep.subr.mxu0 0.0
        %1520 = vmatpush1.msra.mxu0 %v1500
        %1521 = vmatprep.subr.mxu0 0.0
        %1522 = vmatpush1.msra.mxu0 %v1501
        %1523 = vmatprep.subr.mxu0 0.0
        %1524 = vmatpush1.msra.mxu0 %v1502
        %1525 = vmatprep.subr.mxu0 0.0
        %1526 = vmatpush1.msra.mxu0 %v1503
        %1527 = vmatprep.subr.mxu0 0.0
        %1528 = vmatpush1.msra.mxu0 %v1504
        %1529 = vmatprep.subr.mxu0 0.0
        %1530 = vmatpush1.msra.mxu0 %v1505
        %1531 = vmatprep.subr.mxu0 0.0
        %1532 = vmatpush1.msra.mxu0 %v1506
        %1533 = vmatprep.subr.mxu0 0.0
        %1534 = vmatpush1.msra.mxu0 %v1507
        %1535 = vmatprep.subr.mxu0 0.0
        %1536 = vmatpush1.msra.mxu0 %v1508
        %1537 = vmatprep.subr.mxu0 0.0
        %1538 = vmatpush1.msra.mxu0 %v1509
        %1539 = vmatprep.subr.mxu0 0.0
        %1540 = vmatpush1.msra.mxu0 %v1510
        %1541 = vmatprep.subr.mxu0 0.0
        %1542 = vmatpush1.msra.mxu0 %v1511
        %1543 = vmatprep.subr.mxu0 0.0
        %1544 = vmatpush1.msra.mxu0 %v1512
        %1545 = vmatprep.subr.mxu0 0.0
        %1546 = vmatpush1.msra.mxu0 0.0
        %1547 = vmatprep.subr.mxu0 0.0
        %1548 = vmatpush1.msra.mxu0 0.0
        %1549 = vmatprep.subr.mxu0 0.0
        %1550 = vmatpush1.msra.mxu0 0.0
        %1551 = vmatprep.subr.mxu0 0.0
        %1552 = vmatpush1.msra.mxu0 0.0
        %1553 = vmatprep.subr.mxu0 0.0
        %1554 = vmatpush1.msra.mxu0 0.0
        %1555 = vmatprep.subr.mxu0 0.0
        %1556 = vmatpush1.msra.mxu0 0.0
        %1557 = vmatprep.subr.mxu0 0.0
        %1558 = vmatpush1.msra.mxu0 0.0
        %1559 = vmatprep.subr.mxu0 0.0
        %1560 = vmatpush1.msra.mxu0 0.0
        %1561 = vmatprep.subr.mxu0 0.0
        %1562 = vmatpush1.msra.mxu0 0.0
        %1563 = vmatprep.subr.mxu0 0.0
        %1564 = vmatpush1.msra.mxu0 0.0
        %1565 = vmatprep.subr.mxu0 0.0
        %1566 = vmatpush1.msra.mxu0 0.0
        %1567 = vmatprep.subr.mxu0 0.0
        %1568 = vmatpush1.msra.mxu0 0.0
        %1569 = vmatprep.subr.mxu0 0.0
        %1570 = vmatpush1.msra.mxu0 0.0
        %1571 = vmatprep.subr.mxu0 0.0
        %1572 = vmatpush1.msra.mxu0 0.0
        %1573 = vmatprep.subr.mxu0 0.0
        %1574 = vmatpush1.msra.mxu0 0.0
        %1575 = vmatprep.subr.mxu0 0.0
        %1576 = vmatpush1.msra.mxu0 0.0
        %1577 = vmatprep.mubr.f32.mxu0 0.0
        %1578 = vmatmul.mubr.f32.gmra.mrb[0].mxu0 %v1409
        %v1579 = vpop.f32.mrb[0].mxu0
        %v1580 = vadd.f32 0.0, %v1579
        %v1581 = vpop.f32.mrb[0].mxu0
        %1582 = vdwg.mxu0
        %v1583 = vmax.f32 %v1493, %v1580
        %1585 = vrot.lane.b32.xlu0 %v1583, 8
        %v1586 = vpop.permute.xlu0 %1585
        %vm1588 = vcmask 588864
        %1589 = vst.msk [vmem:[#allocation3 + $0x1] sm:$0xff] %vm1588, %v1586
        %v1590 = vld [vmem:[#allocation3] sm:$0xff]
        %v1591 = vld [vmem:[%s3] sm:$0xff]
        %v1592 = vld [vmem:[%s3 + $0x8] sm:$0xff]
        %v1593 = vld [vmem:[%s3 + $0x10] sm:$0xff]
        %v1594 = vld [vmem:[%s3 + $0x18] sm:$0xff]
        %v1595 = vld [vmem:[%s3 + $0x20] sm:$0xff]
        %v1596 = vld [vmem:[%s3 + $0x28] sm:$0xff]
        %v1597 = vld [vmem:[%s3 + $0x30] sm:$0xff]
        %v1598 = vld [vmem:[%s3 + $0x38] sm:$0xff]
        %s1599 = scalar_lea.vmem %s3, 64
        %v1600 = vld [vmem:[%s1599] sm:$0xff]
        %v1601 = vld [vmem:[%s1599 + $0x8] sm:$0xff]
        %v1602 = vld [vmem:[%s1599 + $0x10] sm:$0xff]
        %v1603 = vld [vmem:[%s1599 + $0x18] sm:$0xff]
        %v1604 = vld [vmem:[%s1599 + $0x20] sm:$0xff]
        %v1605 = vld [vmem:[%s1599 + $0x28] sm:$0xff]
        %v1606 = vld [vmem:[%s1599 + $0x30] sm:$0xff]
        %v1607 = vld [vmem:[%s1599 + $0x38] sm:$0xff]
        %1609 = vrot.lane.b32.xlu0 %v1590, 120
        %v1610 = vpop.permute.xlu0 %1609
        %v1611 = vsel %vm431, %v1610, 0
        %1613 = vmatprep.subr.mxu0 0.0
        %1614 = vmatpush1.msra.mxu0 %v1600
        %1615 = vmatprep.subr.mxu0 0.0
        %1616 = vmatpush1.msra.mxu0 %v1601
        %1617 = vmatprep.subr.mxu0 0.0
        %1618 = vmatpush1.msra.mxu0 %v1602
        %1619 = vmatprep.subr.mxu0 0.0
        %1620 = vmatpush1.msra.mxu0 %v1603
        %1621 = vmatprep.subr.mxu0 0.0
        %1622 = vmatpush1.msra.mxu0 %v1604
        %1623 = vmatprep.subr.mxu0 0.0
        %1624 = vmatpush1.msra.mxu0 %v1605
        %1625 = vmatprep.subr.mxu0 0.0
        %1626 = vmatpush1.msra.mxu0 %v1606
        %1627 = vmatprep.subr.mxu0 0.0
        %1628 = vmatpush1.msra.mxu0 %v1607
        %1629 = vmatprep.subr.mxu0 0.0
        %1630 = vmatpush1.msra.mxu0 0.0
        %1631 = vmatprep.subr.mxu0 0.0
        %1632 = vmatpush1.msra.mxu0 0.0
        %1633 = vmatprep.subr.mxu0 0.0
        %1634 = vmatpush1.msra.mxu0 0.0
        %1635 = vmatprep.subr.mxu0 0.0
        %1636 = vmatpush1.msra.mxu0 0.0
        %1637 = vmatprep.subr.mxu0 0.0
        %1638 = vmatpush1.msra.mxu0 0.0
        %1639 = vmatprep.subr.mxu0 0.0
        %1640 = vmatpush1.msra.mxu0 0.0
        %1641 = vmatprep.subr.mxu0 0.0
        %1642 = vmatpush1.msra.mxu0 0.0
        %1643 = vmatprep.subr.mxu0 0.0
        %1644 = vmatpush1.msra.mxu0 0.0
        %1645 = vmatprep.subr.mxu0 0.0
        %1646 = vmatpush1.msra.mxu0 0.0
        %1647 = vmatprep.subr.mxu0 0.0
        %1648 = vmatpush1.msra.mxu0 0.0
        %1649 = vmatprep.subr.mxu0 0.0
        %1650 = vmatpush1.msra.mxu0 0.0
        %1651 = vmatprep.subr.mxu0 0.0
        %1652 = vmatpush1.msra.mxu0 0.0
        %1653 = vmatprep.subr.mxu0 0.0
        %1654 = vmatpush1.msra.mxu0 0.0
        %1655 = vmatprep.subr.mxu0 0.0
        %1656 = vmatpush1.msra.mxu0 0.0
        %1657 = vmatprep.subr.mxu0 0.0
        %1658 = vmatpush1.msra.mxu0 0.0
        %1659 = vmatprep.subr.mxu0 0.0
        %1660 = vmatpush1.msra.mxu0 0.0
        %1661 = vmatprep.subr.mxu0 0.0
        %1662 = vmatpush1.msra.mxu0 0.0
        %1663 = vmatprep.subr.mxu0 0.0
        %1664 = vmatpush1.msra.mxu0 0.0
        %1665 = vmatprep.subr.mxu0 0.0
        %1666 = vmatpush1.msra.mxu0 0.0
        %1667 = vmatprep.subr.mxu0 0.0
        %1668 = vmatpush1.msra.mxu0 0.0
        %1669 = vmatprep.subr.mxu0 0.0
        %1670 = vmatpush1.msra.mxu0 0.0
        %1671 = vmatprep.subr.mxu0 0.0
        %1672 = vmatpush1.msra.mxu0 0.0
        %1673 = vmatprep.subr.mxu0 0.0
        %1674 = vmatpush1.msra.mxu0 0.0
        %1675 = vmatprep.subr.mxu0 0.0
        %1676 = vmatpush1.msra.mxu0 0.0
        %1677 = vmatprep.mubr.f32.mxu0 0.0
        %1678 = vmatmul.mubr.f32.gmra.mrb[0].mxu0 %v1611
        %v1679 = vpop.f32.mrb[0].mxu0
        %v1680 = vadd.f32 0.0, %v1679
        %v1681 = vpop.f32.mrb[0].mxu0
        %1682 = vdwg.mxu0
        %v1683 = vsel %vm431, %v1590, 0
        %1685 = vmatprep.subr.mxu0 0.0
        %1686 = vmatpush1.msra.mxu0 %v1591
        %1687 = vmatprep.subr.mxu0 0.0
        %1688 = vmatpush1.msra.mxu0 %v1592
        %1689 = vmatprep.subr.mxu0 0.0
        %1690 = vmatpush1.msra.mxu0 %v1593
        %1691 = vmatprep.subr.mxu0 0.0
        %1692 = vmatpush1.msra.mxu0 %v1594
        %1693 = vmatprep.subr.mxu0 0.0
        %1694 = vmatpush1.msra.mxu0 %v1595
        %1695 = vmatprep.subr.mxu0 0.0
        %1696 = vmatpush1.msra.mxu0 %v1596
        %1697 = vmatprep.subr.mxu0 0.0
        %1698 = vmatpush1.msra.mxu0 %v1597
        %1699 = vmatprep.subr.mxu0 0.0
        %1700 = vmatpush1.msra.mxu0 %v1598
        %1701 = vmatprep.subr.mxu0 0.0
        %1702 = vmatpush1.msra.mxu0 0.0
        %1703 = vmatprep.subr.mxu0 0.0
        %1704 = vmatpush1.msra.mxu0 0.0
        %1705 = vmatprep.subr.mxu0 0.0
        %1706 = vmatpush1.msra.mxu0 0.0
        %1707 = vmatprep.subr.mxu0 0.0
        %1708 = vmatpush1.msra.mxu0 0.0
        %1709 = vmatprep.subr.mxu0 0.0
        %1710 = vmatpush1.msra.mxu0 0.0
        %1711 = vmatprep.subr.mxu0 0.0
        %1712 = vmatpush1.msra.mxu0 0.0
        %1713 = vmatprep.subr.mxu0 0.0
        %1714 = vmatpush1.msra.mxu0 0.0
        %1715 = vmatprep.subr.mxu0 0.0
        %1716 = vmatpush1.msra.mxu0 0.0
        %1717 = vmatprep.subr.mxu0 0.0
        %1718 = vmatpush1.msra.mxu0 0.0
        %1719 = vmatprep.subr.mxu0 0.0
        %1720 = vmatpush1.msra.mxu0 0.0
        %1721 = vmatprep.subr.mxu0 0.0
        %1722 = vmatpush1.msra.mxu0 0.0
        %1723 = vmatprep.subr.mxu0 0.0
        %1724 = vmatpush1.msra.mxu0 0.0
        %1725 = vmatprep.subr.mxu0 0.0
        %1726 = vmatpush1.msra.mxu0 0.0
        %1727 = vmatprep.subr.mxu0 0.0
        %1728 = vmatpush1.msra.mxu0 0.0
        %1729 = vmatprep.subr.mxu0 0.0
        %1730 = vmatpush1.msra.mxu0 0.0
        %1731 = vmatprep.subr.mxu0 0.0
        %1732 = vmatpush1.msra.mxu0 0.0
        %1733 = vmatprep.subr.mxu0 0.0
        %1734 = vmatpush1.msra.mxu0 0.0
        %1735 = vmatprep.subr.mxu0 0.0
        %1736 = vmatpush1.msra.mxu0 0.0
        %1737 = vmatprep.subr.mxu0 0.0
        %1738 = vmatpush1.msra.mxu0 0.0
        %1739 = vmatprep.subr.mxu0 0.0
        %1740 = vmatpush1.msra.mxu0 0.0
        %1741 = vmatprep.subr.mxu0 0.0
        %1742 = vmatpush1.msra.mxu0 0.0
        %1743 = vmatprep.subr.mxu0 0.0
        %1744 = vmatpush1.msra.mxu0 0.0
        %1745 = vmatprep.subr.mxu0 0.0
        %1746 = vmatpush1.msra.mxu0 0.0
        %1747 = vmatprep.subr.mxu0 0.0
        %1748 = vmatpush1.msra.mxu0 0.0
        %1749 = vmatprep.mubr.f32.mxu0 0.0
        %1750 = vmatmul.mubr.f32.gmra.mrb[0].mxu0 %v1683
        %v1751 = vpop.f32.mrb[0].mxu0
        %v1752 = vadd.f32 %v1680, %v1751
        %v1753 = vpop.f32.mrb[0].mxu0
        %1754 = vdwg.mxu0
        %s1755 = scalar_lea.vmem %s3, 128
        %v1756 = vld [vmem:[%s1755] sm:$0xff]
        %v1757 = vld [vmem:[%s1755 + $0x8] sm:$0xff]
        %v1758 = vld [vmem:[%s1755 + $0x10] sm:$0xff]
        %v1759 = vld [vmem:[%s1755 + $0x18] sm:$0xff]
        %v1760 = vld [vmem:[%s1755 + $0x20] sm:$0xff]
        %v1761 = vld [vmem:[%s1755 + $0x28] sm:$0xff]
        %v1762 = vld [vmem:[%s1755 + $0x30] sm:$0xff]
        %v1763 = vld [vmem:[%s1755 + $0x38] sm:$0xff]
        %1764 = vrot.lane.b32.xlu0 %v1590, 112
        %v1765 = vpop.permute.xlu0 %1764
        %v1766 = vsel %vm431, %v1765, 0
        %1768 = vmatprep.subr.mxu0 0.0
        %1769 = vmatpush1.msra.mxu0 %v1756
        %1770 = vmatprep.subr.mxu0 0.0
        %1771 = vmatpush1.msra.mxu0 %v1757
        %1772 = vmatprep.subr.mxu0 0.0
        %1773 = vmatpush1.msra.mxu0 %v1758
        %1774 = vmatprep.subr.mxu0 0.0
        %1775 = vmatpush1.msra.mxu0 %v1759
        %1776 = vmatprep.subr.mxu0 0.0
        %1777 = vmatpush1.msra.mxu0 %v1760
        %1778 = vmatprep.subr.mxu0 0.0
        %1779 = vmatpush1.msra.mxu0 %v1761
        %1780 = vmatprep.subr.mxu0 0.0
        %1781 = vmatpush1.msra.mxu0 %v1762
        %1782 = vmatprep.subr.mxu0 0.0
        %1783 = vmatpush1.msra.mxu0 %v1763
        %1784 = vmatprep.subr.mxu0 0.0
        %1785 = vmatpush1.msra.mxu0 0.0
        %1786 = vmatprep.subr.mxu0 0.0
        %1787 = vmatpush1.msra.mxu0 0.0
        %1788 = vmatprep.subr.mxu0 0.0
        %1789 = vmatpush1.msra.mxu0 0.0
        %1790 = vmatprep.subr.mxu0 0.0
        %1791 = vmatpush1.msra.mxu0 0.0
        %1792 = vmatprep.subr.mxu0 0.0
        %1793 = vmatpush1.msra.mxu0 0.0
        %1794 = vmatprep.subr.mxu0 0.0
        %1795 = vmatpush1.msra.mxu0 0.0
        %1796 = vmatprep.subr.mxu0 0.0
        %1797 = vmatpush1.msra.mxu0 0.0
        %1798 = vmatprep.subr.mxu0 0.0
        %1799 = vmatpush1.msra.mxu0 0.0
        %1800 = vmatprep.subr.mxu0 0.0
        %1801 = vmatpush1.msra.mxu0 0.0
        %1802 = vmatprep.subr.mxu0 0.0
        %1803 = vmatpush1.msra.mxu0 0.0
        %1804 = vmatprep.subr.mxu0 0.0
        %1805 = vmatpush1.msra.mxu0 0.0
        %1806 = vmatprep.subr.mxu0 0.0
        %1807 = vmatpush1.msra.mxu0 0.0
        %1808 = vmatprep.subr.mxu0 0.0
        %1809 = vmatpush1.msra.mxu0 0.0
        %1810 = vmatprep.subr.mxu0 0.0
        %1811 = vmatpush1.msra.mxu0 0.0
        %1812 = vmatprep.subr.mxu0 0.0
        %1813 = vmatpush1.msra.mxu0 0.0
        %1814 = vmatprep.subr.mxu0 0.0
        %1815 = vmatpush1.msra.mxu0 0.0
        %1816 = vmatprep.subr.mxu0 0.0
        %1817 = vmatpush1.msra.mxu0 0.0
        %1818 = vmatprep.subr.mxu0 0.0
        %1819 = vmatpush1.msra.mxu0 0.0
        %1820 = vmatprep.subr.mxu0 0.0
        %1821 = vmatpush1.msra.mxu0 0.0
        %1822 = vmatprep.subr.mxu0 0.0
        %1823 = vmatpush1.msra.mxu0 0.0
        %1824 = vmatprep.subr.mxu0 0.0
        %1825 = vmatpush1.msra.mxu0 0.0
        %1826 = vmatprep.subr.mxu0 0.0
        %1827 = vmatpush1.msra.mxu0 0.0
        %1828 = vmatprep.subr.mxu0 0.0
        %1829 = vmatpush1.msra.mxu0 0.0
        %1830 = vmatprep.subr.mxu0 0.0
        %1831 = vmatpush1.msra.mxu0 0.0
        %1832 = vmatprep.mubr.f32.mxu0 0.0
        %1833 = vmatmul.mubr.f32.gmra.mrb[0].mxu0 %v1766
        %v1834 = vpop.f32.mrb[0].mxu0
        %v1835 = vadd.f32 0.0, %v1834
        %v1836 = vpop.f32.mrb[0].mxu0
        %1837 = vdwg.mxu0
        %v1838 = vadd.f32 %v1752, %v1835
        %v1839 = vld [vmem:[#allocation3 + $0x1] sm:$0xff]
        %s1840 = scalar_lea.vmem %s3, 192
        %v1841 = vld [vmem:[%s1840] sm:$0xff]
        %v1842 = vld [vmem:[%s1840 + $0x8] sm:$0xff]
        %v1843 = vld [vmem:[%s1840 + $0x10] sm:$0xff]
        %v1844 = vld [vmem:[%s1840 + $0x18] sm:$0xff]
        %v1845 = vld [vmem:[%s1840 + $0x20] sm:$0xff]
        %v1846 = vld [vmem:[%s1840 + $0x28] sm:$0xff]
        %v1847 = vld [vmem:[%s1840 + $0x30] sm:$0xff]
        %v1848 = vld [vmem:[%s1840 + $0x38] sm:$0xff]
        %v1850 = vsel %vm431, %v1839, 0
        %1852 = vmatprep.subr.mxu0 0.0
        %1853 = vmatpush1.msra.mxu0 %v1841
        %1854 = vmatprep.subr.mxu0 0.0
        %1855 = vmatpush1.msra.mxu0 %v1842
        %1856 = vmatprep.subr.mxu0 0.0
        %1857 = vmatpush1.msra.mxu0 %v1843
        %1858 = vmatprep.subr.mxu0 0.0
        %1859 = vmatpush1.msra.mxu0 %v1844
        %1860 = vmatprep.subr.mxu0 0.0
        %1861 = vmatpush1.msra.mxu0 %v1845
        %1862 = vmatprep.subr.mxu0 0.0
        %1863 = vmatpush1.msra.mxu0 %v1846
        %1864 = vmatprep.subr.mxu0 0.0
        %1865 = vmatpush1.msra.mxu0 %v1847
        %1866 = vmatprep.subr.mxu0 0.0
        %1867 = vmatpush1.msra.mxu0 %v1848
        %1868 = vmatprep.subr.mxu0 0.0
        %1869 = vmatpush1.msra.mxu0 0.0
        %1870 = vmatprep.subr.mxu0 0.0
        %1871 = vmatpush1.msra.mxu0 0.0
        %1872 = vmatprep.subr.mxu0 0.0
        %1873 = vmatpush1.msra.mxu0 0.0
        %1874 = vmatprep.subr.mxu0 0.0
        %1875 = vmatpush1.msra.mxu0 0.0
        %1876 = vmatprep.subr.mxu0 0.0
        %1877 = vmatpush1.msra.mxu0 0.0
        %1878 = vmatprep.subr.mxu0 0.0
        %1879 = vmatpush1.msra.mxu0 0.0
        %1880 = vmatprep.subr.mxu0 0.0
        %1881 = vmatpush1.msra.mxu0 0.0
        %1882 = vmatprep.subr.mxu0 0.0
        %1883 = vmatpush1.msra.mxu0 0.0
        %1884 = vmatprep.subr.mxu0 0.0
        %1885 = vmatpush1.msra.mxu0 0.0
        %1886 = vmatprep.subr.mxu0 0.0
        %1887 = vmatpush1.msra.mxu0 0.0
        %1888 = vmatprep.subr.mxu0 0.0
        %1889 = vmatpush1.msra.mxu0 0.0
        %1890 = vmatprep.subr.mxu0 0.0
        %1891 = vmatpush1.msra.mxu0 0.0
        %1892 = vmatprep.subr.mxu0 0.0
        %1893 = vmatpush1.msra.mxu0 0.0
        %1894 = vmatprep.subr.mxu0 0.0
        %1895 = vmatpush1.msra.mxu0 0.0
        %1896 = vmatprep.subr.mxu0 0.0
        %1897 = vmatpush1.msra.mxu0 0.0
        %1898 = vmatprep.subr.mxu0 0.0
        %1899 = vmatpush1.msra.mxu0 0.0
        %1900 = vmatprep.subr.mxu0 0.0
        %1901 = vmatpush1.msra.mxu0 0.0
        %1902 = vmatprep.subr.mxu0 0.0
        %1903 = vmatpush1.msra.mxu0 0.0
        %1904 = vmatprep.subr.mxu0 0.0
        %1905 = vmatpush1.msra.mxu0 0.0
        %1906 = vmatprep.subr.mxu0 0.0
        %1907 = vmatpush1.msra.mxu0 0.0
        %1908 = vmatprep.subr.mxu0 0.0
        %1909 = vmatpush1.msra.mxu0 0.0
        %1910 = vmatprep.subr.mxu0 0.0
        %1911 = vmatpush1.msra.mxu0 0.0
        %1912 = vmatprep.subr.mxu0 0.0
        %1913 = vmatpush1.msra.mxu0 0.0
        %1914 = vmatprep.subr.mxu0 0.0
        %1915 = vmatpush1.msra.mxu0 0.0
        %1916 = vmatprep.mubr.f32.mxu0 0.0
        %1917 = vmatmul.mubr.f32.gmra.mrb[0].mxu0 %v1850
        %v1918 = vpop.f32.mrb[0].mxu0
        %v1919 = vadd.f32 0.0, %v1918
        %v1920 = vpop.f32.mrb[0].mxu0
        %1921 = vdwg.mxu0
        %v1922 = vadd.f32 %v1838, %v1919
        %s1923 = scalar_lea.vmem %s3, 256
        %v1924 = vld [vmem:[%s1923] sm:$0xff]
        %v1925 = vld [vmem:[%s1923 + $0x8] sm:$0xff]
        %v1926 = vld [vmem:[%s1923 + $0x10] sm:$0xff]
        %v1927 = vld [vmem:[%s1923 + $0x18] sm:$0xff]
        %v1928 = vld [vmem:[%s1923 + $0x20] sm:$0xff]
        %v1929 = vld [vmem:[%s1923 + $0x28] sm:$0xff]
        %v1930 = vld [vmem:[%s1923 + $0x30] sm:$0xff]
        %v1931 = vld [vmem:[%s1923 + $0x38] sm:$0xff]
        %1932 = vrot.lane.b32.xlu0 %v1839, 120
        %v1933 = vpop.permute.xlu0 %1932
        %v1934 = vsel %vm431, %v1933, 0
        %1936 = vmatprep.subr.mxu0 0.0
        %1937 = vmatpush1.msra.mxu0 %v1924
        %1938 = vmatprep.subr.mxu0 0.0
        %1939 = vmatpush1.msra.mxu0 %v1925
        %1940 = vmatprep.subr.mxu0 0.0
        %1941 = vmatpush1.msra.mxu0 %v1926
        %1942 = vmatprep.subr.mxu0 0.0
        %1943 = vmatpush1.msra.mxu0 %v1927
        %1944 = vmatprep.subr.mxu0 0.0
        %1945 = vmatpush1.msra.mxu0 %v1928
        %1946 = vmatprep.subr.mxu0 0.0
        %1947 = vmatpush1.msra.mxu0 %v1929
        %1948 = vmatprep.subr.mxu0 0.0
        %1949 = vmatpush1.msra.mxu0 %v1930
        %1950 = vmatprep.subr.mxu0 0.0
        %1951 = vmatpush1.msra.mxu0 %v1931
        %1952 = vmatprep.subr.mxu0 0.0
        %1953 = vmatpush1.msra.mxu0 0.0
        %1954 = vmatprep.subr.mxu0 0.0
        %1955 = vmatpush1.msra.mxu0 0.0
        %1956 = vmatprep.subr.mxu0 0.0
        %1957 = vmatpush1.msra.mxu0 0.0
        %1958 = vmatprep.subr.mxu0 0.0
        %1959 = vmatpush1.msra.mxu0 0.0
        %1960 = vmatprep.subr.mxu0 0.0
        %1961 = vmatpush1.msra.mxu0 0.0
        %1962 = vmatprep.subr.mxu0 0.0
        %1963 = vmatpush1.msra.mxu0 0.0
        %1964 = vmatprep.subr.mxu0 0.0
        %1965 = vmatpush1.msra.mxu0 0.0
        %1966 = vmatprep.subr.mxu0 0.0
        %1967 = vmatpush1.msra.mxu0 0.0
        %1968 = vmatprep.subr.mxu0 0.0
        %1969 = vmatpush1.msra.mxu0 0.0
        %1970 = vmatprep.subr.mxu0 0.0
        %1971 = vmatpush1.msra.mxu0 0.0
        %1972 = vmatprep.subr.mxu0 0.0
        %1973 = vmatpush1.msra.mxu0 0.0
        %1974 = vmatprep.subr.mxu0 0.0
        %1975 = vmatpush1.msra.mxu0 0.0
        %1976 = vmatprep.subr.mxu0 0.0
        %1977 = vmatpush1.msra.mxu0 0.0
        %1978 = vmatprep.subr.mxu0 0.0
        %1979 = vmatpush1.msra.mxu0 0.0
        %1980 = vmatprep.subr.mxu0 0.0
        %1981 = vmatpush1.msra.mxu0 0.0
        %1982 = vmatprep.subr.mxu0 0.0
        %1983 = vmatpush1.msra.mxu0 0.0
        %1984 = vmatprep.subr.mxu0 0.0
        %1985 = vmatpush1.msra.mxu0 0.0
        %1986 = vmatprep.subr.mxu0 0.0
        %1987 = vmatpush1.msra.mxu0 0.0
        %1988 = vmatprep.subr.mxu0 0.0
        %1989 = vmatpush1.msra.mxu0 0.0
        %1990 = vmatprep.subr.mxu0 0.0
        %1991 = vmatpush1.msra.mxu0 0.0
        %1992 = vmatprep.subr.mxu0 0.0
        %1993 = vmatpush1.msra.mxu0 0.0
        %1994 = vmatprep.subr.mxu0 0.0
        %1995 = vmatpush1.msra.mxu0 0.0
        %1996 = vmatprep.subr.mxu0 0.0
        %1997 = vmatpush1.msra.mxu0 0.0
        %1998 = vmatprep.subr.mxu0 0.0
        %1999 = vmatpush1.msra.mxu0 0.0
        %2000 = vmatprep.mubr.f32.mxu0 0.0
        %2001 = vmatmul.mubr.f32.gmra.mrb[0].mxu0 %v1934
        %v2002 = vpop.f32.mrb[0].mxu0
        %v2003 = vadd.f32 0.0, %v2002
        %v2004 = vpop.f32.mrb[0].mxu0
        %2005 = vdwg.mxu0
        %v2006 = vadd.f32 %v1922, %v2003
        %s2007 = scalar_lea.vmem %s3, 320
        %v2008 = vld [vmem:[%s2007] sm:$0xff]
        %v2009 = vld [vmem:[%s2007 + $0x8] sm:$0xff]
        %v2010 = vld [vmem:[%s2007 + $0x10] sm:$0xff]
        %v2011 = vld [vmem:[%s2007 + $0x18] sm:$0xff]
        %v2012 = vld [vmem:[%s2007 + $0x20] sm:$0xff]
        %v2013 = vld [vmem:[%s2007 + $0x28] sm:$0xff]
        %v2014 = vld [vmem:[%s2007 + $0x30] sm:$0xff]
        %v2015 = vld [vmem:[%s2007 + $0x38] sm:$0xff]
        %2016 = vrot.lane.b32.xlu0 %v1839, 112
        %v2017 = vpop.permute.xlu0 %2016
        %v2018 = vsel %vm431, %v2017, 0
        %2020 = vmatprep.subr.mxu0 0.0
        %2021 = vmatpush1.msra.mxu0 %v2008
        %2022 = vmatprep.subr.mxu0 0.0
        %2023 = vmatpush1.msra.mxu0 %v2009
        %2024 = vmatprep.subr.mxu0 0.0
        %2025 = vmatpush1.msra.mxu0 %v2010
        %2026 = vmatprep.subr.mxu0 0.0
        %2027 = vmatpush1.msra.mxu0 %v2011
        %2028 = vmatprep.subr.mxu0 0.0
        %2029 = vmatpush1.msra.mxu0 %v2012
        %2030 = vmatprep.subr.mxu0 0.0
        %2031 = vmatpush1.msra.mxu0 %v2013
        %2032 = vmatprep.subr.mxu0 0.0
        %2033 = vmatpush1.msra.mxu0 %v2014
        %2034 = vmatprep.subr.mxu0 0.0
        %2035 = vmatpush1.msra.mxu0 %v2015
        %2036 = vmatprep.subr.mxu0 0.0
        %2037 = vmatpush1.msra.mxu0 0.0
        %2038 = vmatprep.subr.mxu0 0.0
        %2039 = vmatpush1.msra.mxu0 0.0
        %2040 = vmatprep.subr.mxu0 0.0
        %2041 = vmatpush1.msra.mxu0 0.0
        %2042 = vmatprep.subr.mxu0 0.0
        %2043 = vmatpush1.msra.mxu0 0.0
        %2044 = vmatprep.subr.mxu0 0.0
        %2045 = vmatpush1.msra.mxu0 0.0
        %2046 = vmatprep.subr.mxu0 0.0
        %2047 = vmatpush1.msra.mxu0 0.0
        %2048 = vmatprep.subr.mxu0 0.0
        %2049 = vmatpush1.msra.mxu0 0.0
        %2050 = vmatprep.subr.mxu0 0.0
        %2051 = vmatpush1.msra.mxu0 0.0
        %2052 = vmatprep.subr.mxu0 0.0
        %2053 = vmatpush1.msra.mxu0 0.0
        %2054 = vmatprep.subr.mxu0 0.0
        %2055 = vmatpush1.msra.mxu0 0.0
        %2056 = vmatprep.subr.mxu0 0.0
        %2057 = vmatpush1.msra.mxu0 0.0
        %2058 = vmatprep.subr.mxu0 0.0
        %2059 = vmatpush1.msra.mxu0 0.0
        %2060 = vmatprep.subr.mxu0 0.0
        %2061 = vmatpush1.msra.mxu0 0.0
        %2062 = vmatprep.subr.mxu0 0.0
        %2063 = vmatpush1.msra.mxu0 0.0
        %2064 = vmatprep.subr.mxu0 0.0
        %2065 = vmatpush1.msra.mxu0 0.0
        %2066 = vmatprep.subr.mxu0 0.0
        %2067 = vmatpush1.msra.mxu0 0.0
        %2068 = vmatprep.subr.mxu0 0.0
        %2069 = vmatpush1.msra.mxu0 0.0
        %2070 = vmatprep.subr.mxu0 0.0
        %2071 = vmatpush1.msra.mxu0 0.0
        %2072 = vmatprep.subr.mxu0 0.0
        %2073 = vmatpush1.msra.mxu0 0.0
        %2074 = vmatprep.subr.mxu0 0.0
        %2075 = vmatpush1.msra.mxu0 0.0
        %2076 = vmatprep.subr.mxu0 0.0
        %2077 = vmatpush1.msra.mxu0 0.0
        %2078 = vmatprep.subr.mxu0 0.0
        %2079 = vmatpush1.msra.mxu0 0.0
        %2080 = vmatprep.subr.mxu0 0.0
        %2081 = vmatpush1.msra.mxu0 0.0
        %2082 = vmatprep.subr.mxu0 0.0
        %2083 = vmatpush1.msra.mxu0 0.0
        %2084 = vmatprep.mubr.f32.mxu0 0.0
        %2085 = vmatmul.mubr.f32.gmra.mrb[0].mxu0 %v2018
        %v2086 = vpop.f32.mrb[0].mxu0
        %v2087 = vadd.f32 0.0, %v2086
        %v2088 = vpop.f32.mrb[0].mxu0
        %2089 = vdwg.mxu0
        %v2090 = vadd.f32 %v2006, %v2087
        %v2091 = vld [vmem:[#allocation3 + $0x2] sm:$0xff]
        %s2092 = scalar_lea.vmem %s3, 384
        %v2093 = vld [vmem:[%s2092] sm:$0xff]
        %v2094 = vld [vmem:[%s2092 + $0x8] sm:$0xff]
        %v2095 = vld [vmem:[%s2092 + $0x10] sm:$0xff]
        %v2096 = vld [vmem:[%s2092 + $0x18] sm:$0xff]
        %v2097 = vld [vmem:[%s2092 + $0x20] sm:$0xff]
        %v2098 = vld [vmem:[%s2092 + $0x28] sm:$0xff]
        %v2099 = vld [vmem:[%s2092 + $0x30] sm:$0xff]
        %v2100 = vld [vmem:[%s2092 + $0x38] sm:$0xff]
        %v2102 = vsel %vm431, %v2091, 0
        %2104 = vmatprep.subr.mxu0 0.0
        %2105 = vmatpush1.msra.mxu0 %v2093
        %2106 = vmatprep.subr.mxu0 0.0
        %2107 = vmatpush1.msra.mxu0 %v2094
        %2108 = vmatprep.subr.mxu0 0.0
        %2109 = vmatpush1.msra.mxu0 %v2095
        %2110 = vmatprep.subr.mxu0 0.0
        %2111 = vmatpush1.msra.mxu0 %v2096
        %2112 = vmatprep.subr.mxu0 0.0
        %2113 = vmatpush1.msra.mxu0 %v2097
        %2114 = vmatprep.subr.mxu0 0.0
        %2115 = vmatpush1.msra.mxu0 %v2098
        %2116 = vmatprep.subr.mxu0 0.0
        %2117 = vmatpush1.msra.mxu0 %v2099
        %2118 = vmatprep.subr.mxu0 0.0
        %2119 = vmatpush1.msra.mxu0 %v2100
        %2120 = vmatprep.subr.mxu0 0.0
        %2121 = vmatpush1.msra.mxu0 0.0
        %2122 = vmatprep.subr.mxu0 0.0
        %2123 = vmatpush1.msra.mxu0 0.0
        %2124 = vmatprep.subr.mxu0 0.0
        %2125 = vmatpush1.msra.mxu0 0.0
        %2126 = vmatprep.subr.mxu0 0.0
        %2127 = vmatpush1.msra.mxu0 0.0
        %2128 = vmatprep.subr.mxu0 0.0
        %2129 = vmatpush1.msra.mxu0 0.0
        %2130 = vmatprep.subr.mxu0 0.0
        %2131 = vmatpush1.msra.mxu0 0.0
        %2132 = vmatprep.subr.mxu0 0.0
        %2133 = vmatpush1.msra.mxu0 0.0
        %2134 = vmatprep.subr.mxu0 0.0
        %2135 = vmatpush1.msra.mxu0 0.0
        %2136 = vmatprep.subr.mxu0 0.0
        %2137 = vmatpush1.msra.mxu0 0.0
        %2138 = vmatprep.subr.mxu0 0.0
        %2139 = vmatpush1.msra.mxu0 0.0
        %2140 = vmatprep.subr.mxu0 0.0
        %2141 = vmatpush1.msra.mxu0 0.0
        %2142 = vmatprep.subr.mxu0 0.0
        %2143 = vmatpush1.msra.mxu0 0.0
        %2144 = vmatprep.subr.mxu0 0.0
        %2145 = vmatpush1.msra.mxu0 0.0
        %2146 = vmatprep.subr.mxu0 0.0
        %2147 = vmatpush1.msra.mxu0 0.0
        %2148 = vmatprep.subr.mxu0 0.0
        %2149 = vmatpush1.msra.mxu0 0.0
        %2150 = vmatprep.subr.mxu0 0.0
        %2151 = vmatpush1.msra.mxu0 0.0
        %2152 = vmatprep.subr.mxu0 0.0
        %2153 = vmatpush1.msra.mxu0 0.0
        %2154 = vmatprep.subr.mxu0 0.0
        %2155 = vmatpush1.msra.mxu0 0.0
        %2156 = vmatprep.subr.mxu0 0.0
        %2157 = vmatpush1.msra.mxu0 0.0
        %2158 = vmatprep.subr.mxu0 0.0
        %2159 = vmatpush1.msra.mxu0 0.0
        %2160 = vmatprep.subr.mxu0 0.0
        %2161 = vmatpush1.msra.mxu0 0.0
        %2162 = vmatprep.subr.mxu0 0.0
        %2163 = vmatpush1.msra.mxu0 0.0
        %2164 = vmatprep.subr.mxu0 0.0
        %2165 = vmatpush1.msra.mxu0 0.0
        %2166 = vmatprep.subr.mxu0 0.0
        %2167 = vmatpush1.msra.mxu0 0.0
        %2168 = vmatprep.mubr.f32.mxu0 0.0
        %2169 = vmatmul.mubr.f32.gmra.mrb[0].mxu0 %v2102
        %v2170 = vpop.f32.mrb[0].mxu0
        %v2171 = vadd.f32 0.0, %v2170
        %v2172 = vpop.f32.mrb[0].mxu0
        %2173 = vdwg.mxu0
        %v2174 = vadd.f32 %v2090, %v2171
        %s2175 = scalar_lea.vmem %s3, 448
        %v2176 = vld [vmem:[%s2175] sm:$0xff]
        %v2177 = vld [vmem:[%s2175 + $0x8] sm:$0xff]
        %v2178 = vld [vmem:[%s2175 + $0x10] sm:$0xff]
        %v2179 = vld [vmem:[%s2175 + $0x18] sm:$0xff]
        %v2180 = vld [vmem:[%s2175 + $0x20] sm:$0xff]
        %v2181 = vld [vmem:[%s2175 + $0x28] sm:$0xff]
        %v2182 = vld [vmem:[%s2175 + $0x30] sm:$0xff]
        %v2183 = vld [vmem:[%s2175 + $0x38] sm:$0xff]
        %2184 = vrot.lane.b32.xlu0 %v2091, 120
        %v2185 = vpop.permute.xlu0 %2184
        %v2186 = vsel %vm431, %v2185, 0
        %2188 = vmatprep.subr.mxu0 0.0
        %2189 = vmatpush1.msra.mxu0 %v2176
        %2190 = vmatprep.subr.mxu0 0.0
        %2191 = vmatpush1.msra.mxu0 %v2177
        %2192 = vmatprep.subr.mxu0 0.0
        %2193 = vmatpush1.msra.mxu0 %v2178
        %2194 = vmatprep.subr.mxu0 0.0
        %2195 = vmatpush1.msra.mxu0 %v2179
        %2196 = vmatprep.subr.mxu0 0.0
        %2197 = vmatpush1.msra.mxu0 %v2180
        %2198 = vmatprep.subr.mxu0 0.0
        %2199 = vmatpush1.msra.mxu0 %v2181
        %2200 = vmatprep.subr.mxu0 0.0
        %2201 = vmatpush1.msra.mxu0 %v2182
        %2202 = vmatprep.subr.mxu0 0.0
        %2203 = vmatpush1.msra.mxu0 %v2183
        %2204 = vmatprep.subr.mxu0 0.0
        %2205 = vmatpush1.msra.mxu0 0.0
        %2206 = vmatprep.subr.mxu0 0.0
        %2207 = vmatpush1.msra.mxu0 0.0
        %2208 = vmatprep.subr.mxu0 0.0
        %2209 = vmatpush1.msra.mxu0 0.0
        %2210 = vmatprep.subr.mxu0 0.0
        %2211 = vmatpush1.msra.mxu0 0.0
        %2212 = vmatprep.subr.mxu0 0.0
        %2213 = vmatpush1.msra.mxu0 0.0
        %2214 = vmatprep.subr.mxu0 0.0
        %2215 = vmatpush1.msra.mxu0 0.0
        %2216 = vmatprep.subr.mxu0 0.0
        %2217 = vmatpush1.msra.mxu0 0.0
        %2218 = vmatprep.subr.mxu0 0.0
        %2219 = vmatpush1.msra.mxu0 0.0
        %2220 = vmatprep.subr.mxu0 0.0
        %2221 = vmatpush1.msra.mxu0 0.0
        %2222 = vmatprep.subr.mxu0 0.0
        %2223 = vmatpush1.msra.mxu0 0.0
        %2224 = vmatprep.subr.mxu0 0.0
        %2225 = vmatpush1.msra.mxu0 0.0
        %2226 = vmatprep.subr.mxu0 0.0
        %2227 = vmatpush1.msra.mxu0 0.0
        %2228 = vmatprep.subr.mxu0 0.0
        %2229 = vmatpush1.msra.mxu0 0.0
        %2230 = vmatprep.subr.mxu0 0.0
        %2231 = vmatpush1.msra.mxu0 0.0
        %2232 = vmatprep.subr.mxu0 0.0
        %2233 = vmatpush1.msra.mxu0 0.0
        %2234 = vmatprep.subr.mxu0 0.0
        %2235 = vmatpush1.msra.mxu0 0.0
        %2236 = vmatprep.subr.mxu0 0.0
        %2237 = vmatpush1.msra.mxu0 0.0
        %2238 = vmatprep.subr.mxu0 0.0
        %2239 = vmatpush1.msra.mxu0 0.0
        %2240 = vmatprep.subr.mxu0 0.0
        %2241 = vmatpush1.msra.mxu0 0.0
        %2242 = vmatprep.subr.mxu0 0.0
        %2243 = vmatpush1.msra.mxu0 0.0
        %2244 = vmatprep.subr.mxu0 0.0
        %2245 = vmatpush1.msra.mxu0 0.0
        %2246 = vmatprep.subr.mxu0 0.0
        %2247 = vmatpush1.msra.mxu0 0.0
        %2248 = vmatprep.subr.mxu0 0.0
        %2249 = vmatpush1.msra.mxu0 0.0
        %2250 = vmatprep.subr.mxu0 0.0
        %2251 = vmatpush1.msra.mxu0 0.0
        %2252 = vmatprep.mubr.f32.mxu0 0.0
        %2253 = vmatmul.mubr.f32.gmra.mrb[0].mxu0 %v2186
        %v2254 = vpop.f32.mrb[0].mxu0
        %v2255 = vadd.f32 0.0, %v2254
        %v2256 = vpop.f32.mrb[0].mxu0
        %2257 = vdwg.mxu0
        %v2258 = vadd.f32 %v2174, %v2255
        %s2259 = scalar_lea.vmem %s3, 512
        %v2260 = vld [vmem:[%s2259] sm:$0xff]
        %v2261 = vld [vmem:[%s2259 + $0x8] sm:$0xff]
        %v2262 = vld [vmem:[%s2259 + $0x10] sm:$0xff]
        %v2263 = vld [vmem:[%s2259 + $0x18] sm:$0xff]
        %v2264 = vld [vmem:[%s2259 + $0x20] sm:$0xff]
        %v2265 = vld [vmem:[%s2259 + $0x28] sm:$0xff]
        %v2266 = vld [vmem:[%s2259 + $0x30] sm:$0xff]
        %v2267 = vld [vmem:[%s2259 + $0x38] sm:$0xff]
        %2268 = vrot.lane.b32.xlu0 %v2091, 112
        %v2269 = vpop.permute.xlu0 %2268
        %v2270 = vsel %vm431, %v2269, 0
        %2272 = vmatprep.subr.mxu0 0.0
        %2273 = vmatpush1.msra.mxu0 %v2260
        %2274 = vmatprep.subr.mxu0 0.0
        %2275 = vmatpush1.msra.mxu0 %v2261
        %2276 = vmatprep.subr.mxu0 0.0
        %2277 = vmatpush1.msra.mxu0 %v2262
        %2278 = vmatprep.subr.mxu0 0.0
        %2279 = vmatpush1.msra.mxu0 %v2263
        %2280 = vmatprep.subr.mxu0 0.0
        %2281 = vmatpush1.msra.mxu0 %v2264
        %2282 = vmatprep.subr.mxu0 0.0
        %2283 = vmatpush1.msra.mxu0 %v2265
        %2284 = vmatprep.subr.mxu0 0.0
        %2285 = vmatpush1.msra.mxu0 %v2266
        %2286 = vmatprep.subr.mxu0 0.0
        %2287 = vmatpush1.msra.mxu0 %v2267
        %2288 = vmatprep.subr.mxu0 0.0
        %2289 = vmatpush1.msra.mxu0 0.0
        %2290 = vmatprep.subr.mxu0 0.0
        %2291 = vmatpush1.msra.mxu0 0.0
        %2292 = vmatprep.subr.mxu0 0.0
        %2293 = vmatpush1.msra.mxu0 0.0
        %2294 = vmatprep.subr.mxu0 0.0
        %2295 = vmatpush1.msra.mxu0 0.0
        %2296 = vmatprep.subr.mxu0 0.0
        %2297 = vmatpush1.msra.mxu0 0.0
        %2298 = vmatprep.subr.mxu0 0.0
        %2299 = vmatpush1.msra.mxu0 0.0
        %2300 = vmatprep.subr.mxu0 0.0
        %2301 = vmatpush1.msra.mxu0 0.0
        %2302 = vmatprep.subr.mxu0 0.0
        %2303 = vmatpush1.msra.mxu0 0.0
        %2304 = vmatprep.subr.mxu0 0.0
        %2305 = vmatpush1.msra.mxu0 0.0
        %2306 = vmatprep.subr.mxu0 0.0
        %2307 = vmatpush1.msra.mxu0 0.0
        %2308 = vmatprep.subr.mxu0 0.0
        %2309 = vmatpush1.msra.mxu0 0.0
        %2310 = vmatprep.subr.mxu0 0.0
        %2311 = vmatpush1.msra.mxu0 0.0
        %2312 = vmatprep.subr.mxu0 0.0
        %2313 = vmatpush1.msra.mxu0 0.0
        %2314 = vmatprep.subr.mxu0 0.0
        %2315 = vmatpush1.msra.mxu0 0.0
        %2316 = vmatprep.subr.mxu0 0.0
        %2317 = vmatpush1.msra.mxu0 0.0
        %2318 = vmatprep.subr.mxu0 0.0
        %2319 = vmatpush1.msra.mxu0 0.0
        %2320 = vmatprep.subr.mxu0 0.0
        %2321 = vmatpush1.msra.mxu0 0.0
        %2322 = vmatprep.subr.mxu0 0.0
        %2323 = vmatpush1.msra.mxu0 0.0
        %2324 = vmatprep.subr.mxu0 0.0
        %2325 = vmatpush1.msra.mxu0 0.0
        %2326 = vmatprep.subr.mxu0 0.0
        %2327 = vmatpush1.msra.mxu0 0.0
        %2328 = vmatprep.subr.mxu0 0.0
        %2329 = vmatpush1.msra.mxu0 0.0
        %2330 = vmatprep.subr.mxu0 0.0
        %2331 = vmatpush1.msra.mxu0 0.0
        %2332 = vmatprep.subr.mxu0 0.0
        %2333 = vmatpush1.msra.mxu0 0.0
        %2334 = vmatprep.subr.mxu0 0.0
        %2335 = vmatpush1.msra.mxu0 0.0
        %2336 = vmatprep.mubr.f32.mxu0 0.0
        %2337 = vmatmul.mubr.f32.gmra.mrb[0].mxu0 %v2270
        %v2338 = vpop.f32.mrb[0].mxu0
        %v2339 = vadd.f32 0.0, %v2338
        %v2340 = vpop.f32.mrb[0].mxu0
        %2341 = vdwg.mxu0
        %v2342 = vadd.f32 %v2258, %v2339
        %v2343 = vld [vmem:[%s4] sm:$0x1]
        %v2345 = vlaneseq
        %v2346 = vshrl.u32 %v2345, 7
        %v2347 = vsub.s32 0, %v2346
        %v2348 = vrot.slane %v2343, %v2347
        %v2350 = vadd.f32 %v2342, %v2348
        %v2351 = vmax.f32 %v2350, 0.0
        %v2352 = vld [vmem:[%s7] sm:$0xf]
        %vm2353 = vcmask 64512
        %v2355 = vsel %vm2353, %v2352, 0
        %2357 = vmatprep.subr.mxu0 0.0
        %2358 = vmatpush1.msra.mxu0 %v2351
        %2359 = vmatprep.subr.mxu0 0.0
        %2360 = vmatpush1.msra.mxu0 0.0
        %2361 = vmatprep.subr.mxu0 0.0
        %2362 = vmatpush1.msra.mxu0 0.0
        %2363 = vmatprep.subr.mxu0 0.0
        %2364 = vmatpush1.msra.mxu0 0.0
        %2365 = vmatprep.subr.mxu0 0.0
        %2366 = vmatpush1.msra.mxu0 0.0
        %2367 = vmatprep.subr.mxu0 0.0
        %2368 = vmatpush1.msra.mxu0 0.0
        %2369 = vmatprep.subr.mxu0 0.0
        %2370 = vmatpush1.msra.mxu0 0.0
        %2371 = vmatprep.subr.mxu0 0.0
        %2372 = vmatpush1.msra.mxu0 0.0
        %2373 = vmatprep.subr.mxu0 0.0
        %2374 = vmatpush1.msra.mxu0 0.0
        %2375 = vmatprep.subr.mxu0 0.0
        %2376 = vmatpush1.msra.mxu0 0.0
        %2377 = vmatprep.subr.mxu0 0.0
        %2378 = vmatpush1.msra.mxu0 0.0
        %2379 = vmatprep.subr.mxu0 0.0
        %2380 = vmatpush1.msra.mxu0 0.0
        %2381 = vmatprep.subr.mxu0 0.0
        %2382 = vmatpush1.msra.mxu0 0.0
        %2383 = vmatprep.subr.mxu0 0.0
        %2384 = vmatpush1.msra.mxu0 0.0
        %2385 = vmatprep.subr.mxu0 0.0
        %2386 = vmatpush1.msra.mxu0 0.0
        %2387 = vmatprep.subr.mxu0 0.0
        %2388 = vmatpush1.msra.mxu0 0.0
        %2389 = vmatprep.subr.mxu0 0.0
        %2390 = vmatpush1.msra.mxu0 0.0
        %2391 = vmatprep.subr.mxu0 0.0
        %2392 = vmatpush1.msra.mxu0 0.0
        %2393 = vmatprep.subr.mxu0 0.0
        %2394 = vmatpush1.msra.mxu0 0.0
        %2395 = vmatprep.subr.mxu0 0.0
        %2396 = vmatpush1.msra.mxu0 0.0
        %2397 = vmatprep.subr.mxu0 0.0
        %2398 = vmatpush1.msra.mxu0 0.0
        %2399 = vmatprep.subr.mxu0 0.0
        %2400 = vmatpush1.msra.mxu0 0.0
        %2401 = vmatprep.subr.mxu0 0.0
        %2402 = vmatpush1.msra.mxu0 0.0
        %2403 = vmatprep.subr.mxu0 0.0
        %2404 = vmatpush1.msra.mxu0 0.0
        %2405 = vmatprep.subr.mxu0 0.0
        %2406 = vmatpush1.msra.mxu0 0.0
        %2407 = vmatprep.subr.mxu0 0.0
        %2408 = vmatpush1.msra.mxu0 0.0
        %2409 = vmatprep.subr.mxu0 0.0
        %2410 = vmatpush1.msra.mxu0 0.0
        %2411 = vmatprep.subr.mxu0 0.0
        %2412 = vmatpush1.msra.mxu0 0.0
        %2413 = vmatprep.subr.mxu0 0.0
        %2414 = vmatpush1.msra.mxu0 0.0
        %2415 = vmatprep.subr.mxu0 0.0
        %2416 = vmatpush1.msra.mxu0 0.0
        %2417 = vmatprep.subr.mxu0 0.0
        %2418 = vmatpush1.msra.mxu0 0.0
        %2419 = vmatprep.subr.mxu0 0.0
        %2420 = vmatpush1.msra.mxu0 0.0
        %2421 = vmatprep.mubr.f32.mxu0 0.0
        %2422 = vmatmul.mubr.f32.gmra.mrb[0].mxu0 %v2355
        %v2423 = vpop.f32.mrb[0].mxu0
        %v2424 = vadd.f32 0.0, %v2423
        %v2425 = vpop.f32.mrb[0].mxu0
        %2426 = vdwg.mxu0
        %s2427 = scalar_lea.vmem %s7, 4
        %v2428 = vld [vmem:[%s2427] sm:$0xf]
        %v2430 = vsel %vm2353, %v2428, 0
        %2432 = vmatprep.subr.mxu0 0.0
        %2433 = vmatpush1.msra.mxu0 %v2351
        %2434 = vmatprep.subr.mxu0 0.0
        %2435 = vmatpush1.msra.mxu0 0.0
        %2436 = vmatprep.subr.mxu0 0.0
        %2437 = vmatpush1.msra.mxu0 0.0
        %2438 = vmatprep.subr.mxu0 0.0
        %2439 = vmatpush1.msra.mxu0 0.0
        %2440 = vmatprep.subr.mxu0 0.0
        %2441 = vmatpush1.msra.mxu0 0.0
        %2442 = vmatprep.subr.mxu0 0.0
        %2443 = vmatpush1.msra.mxu0 0.0
        %2444 = vmatprep.subr.mxu0 0.0
        %2445 = vmatpush1.msra.mxu0 0.0
        %2446 = vmatprep.subr.mxu0 0.0
        %2447 = vmatpush1.msra.mxu0 0.0
        %2448 = vmatprep.subr.mxu0 0.0
        %2449 = vmatpush1.msra.mxu0 0.0
        %2450 = vmatprep.subr.mxu0 0.0
        %2451 = vmatpush1.msra.mxu0 0.0
        %2452 = vmatprep.subr.mxu0 0.0
        %2453 = vmatpush1.msra.mxu0 0.0
        %2454 = vmatprep.subr.mxu0 0.0
        %2455 = vmatpush1.msra.mxu0 0.0
        %2456 = vmatprep.subr.mxu0 0.0
        %2457 = vmatpush1.msra.mxu0 0.0
        %2458 = vmatprep.subr.mxu0 0.0
        %2459 = vmatpush1.msra.mxu0 0.0
        %2460 = vmatprep.subr.mxu0 0.0
        %2461 = vmatpush1.msra.mxu0 0.0
        %2462 = vmatprep.subr.mxu0 0.0
        %2463 = vmatpush1.msra.mxu0 0.0
        %2464 = vmatprep.subr.mxu0 0.0
        %2465 = vmatpush1.msra.mxu0 0.0
        %2466 = vmatprep.subr.mxu0 0.0
        %2467 = vmatpush1.msra.mxu0 0.0
        %2468 = vmatprep.subr.mxu0 0.0
        %2469 = vmatpush1.msra.mxu0 0.0
        %2470 = vmatprep.subr.mxu0 0.0
        %2471 = vmatpush1.msra.mxu0 0.0
        %2472 = vmatprep.subr.mxu0 0.0
        %2473 = vmatpush1.msra.mxu0 0.0
        %2474 = vmatprep.subr.mxu0 0.0
        %2475 = vmatpush1.msra.mxu0 0.0
        %2476 = vmatprep.subr.mxu0 0.0
        %2477 = vmatpush1.msra.mxu0 0.0
        %2478 = vmatprep.subr.mxu0 0.0
        %2479 = vmatpush1.msra.mxu0 0.0
        %2480 = vmatprep.subr.mxu0 0.0
        %2481 = vmatpush1.msra.mxu0 0.0
        %2482 = vmatprep.subr.mxu0 0.0
        %2483 = vmatpush1.msra.mxu0 0.0
        %2484 = vmatprep.subr.mxu0 0.0
        %2485 = vmatpush1.msra.mxu0 0.0
        %2486 = vmatprep.subr.mxu0 0.0
        %2487 = vmatpush1.msra.mxu0 0.0
        %2488 = vmatprep.subr.mxu0 0.0
        %2489 = vmatpush1.msra.mxu0 0.0
        %2490 = vmatprep.subr.mxu0 0.0
        %2491 = vmatpush1.msra.mxu0 0.0
        %2492 = vmatprep.subr.mxu0 0.0
        %2493 = vmatpush1.msra.mxu0 0.0
        %2494 = vmatprep.subr.mxu0 0.0
        %2495 = vmatpush1.msra.mxu0 0.0
        %2496 = vmatprep.mubr.f32.mxu0 0.0
        %2497 = vmatmul.mubr.f32.gmra.mrb[0].mxu0 %v2430
        %v2498 = vpop.f32.mrb[0].mxu0
        %v2499 = vadd.f32 0.0, %v2498
        %v2500 = vpop.f32.mrb[0].mxu0
        %2501 = vdwg.mxu0
        %v2502 = vmax.f32 %v2424, %v2499
        %v2503 = vld [vmem:[%s8] sm:$0xff]
        %v2504 = vld [vmem:[%s8 + $0x8] sm:$0xff]
        %v2505 = vld [vmem:[%s8 + $0x10] sm:$0xff]
        %v2506 = vld [vmem:[%s8 + $0x18] sm:$0xff]
        %v2507 = vld [vmem:[%s8 + $0x20] sm:$0xff]
        %v2508 = vld [vmem:[%s8 + $0x28] sm:$0xff]
        %v2509 = vld [vmem:[%s8 + $0x30] sm:$0xff]
        %v2510 = vld [vmem:[%s8 + $0x38] sm:$0xff]
        %v2511 = vld [vmem:[%s8 + $0x40] sm:$0xff]
        %v2512 = vld [vmem:[%s8 + $0x48] sm:$0xff]
        %v2513 = vld [vmem:[%s8 + $0x50] sm:$0xff]
        %v2514 = vld [vmem:[%s8 + $0x58] sm:$0xff]
        %v2515 = vld [vmem:[%s8 + $0x60] sm:$0xff]
        %v2516 = vld [vmem:[%s8 + $0x68] sm:$0xff]
        %v2517 = vld [vmem:[%s8 + $0x70] sm:$0xff]
        %v2518 = vld [vmem:[%s8 + $0x78] sm:$0xff]
        %2519 = vmatprep.subr.mxu0 0.0
        %2520 = vmatpush1.msra.mxu0 %v2503
        %2521 = vmatprep.subr.mxu0 0.0
        %2522 = vmatpush1.msra.mxu0 %v2504
        %2523 = vmatprep.subr.mxu0 0.0
        %2524 = vmatpush1.msra.mxu0 %v2505
        %2525 = vmatprep.subr.mxu0 0.0
        %2526 = vmatpush1.msra.mxu0 %v2506
        %2527 = vmatprep.subr.mxu0 0.0
        %2528 = vmatpush1.msra.mxu0 %v2507
        %2529 = vmatprep.subr.mxu0 0.0
        %2530 = vmatpush1.msra.mxu0 %v2508
        %2531 = vmatprep.subr.mxu0 0.0
        %2532 = vmatpush1.msra.mxu0 %v2509
        %2533 = vmatprep.subr.mxu0 0.0
        %2534 = vmatpush1.msra.mxu0 %v2510
        %2535 = vmatprep.subr.mxu0 0.0
        %2536 = vmatpush1.msra.mxu0 %v2511
        %2537 = vmatprep.subr.mxu0 0.0
        %2538 = vmatpush1.msra.mxu0 %v2512
        %2539 = vmatprep.subr.mxu0 0.0
        %2540 = vmatpush1.msra.mxu0 %v2513
        %2541 = vmatprep.subr.mxu0 0.0
        %2542 = vmatpush1.msra.mxu0 %v2514
        %2543 = vmatprep.subr.mxu0 0.0
        %2544 = vmatpush1.msra.mxu0 %v2515
        %2545 = vmatprep.subr.mxu0 0.0
        %2546 = vmatpush1.msra.mxu0 %v2516
        %2547 = vmatprep.subr.mxu0 0.0
        %2548 = vmatpush1.msra.mxu0 %v2517
        %2549 = vmatprep.subr.mxu0 0.0
        %2550 = vmatpush1.msra.mxu0 %v2518
        %2551 = vmatprep.subr.mxu0 0.0
        %2552 = vmatpush1.msra.mxu0 0.0
        %2553 = vmatprep.subr.mxu0 0.0
        %2554 = vmatpush1.msra.mxu0 0.0
        %2555 = vmatprep.subr.mxu0 0.0
        %2556 = vmatpush1.msra.mxu0 0.0
        %2557 = vmatprep.subr.mxu0 0.0
        %2558 = vmatpush1.msra.mxu0 0.0
        %2559 = vmatprep.subr.mxu0 0.0
        %2560 = vmatpush1.msra.mxu0 0.0
        %2561 = vmatprep.subr.mxu0 0.0
        %2562 = vmatpush1.msra.mxu0 0.0
        %2563 = vmatprep.subr.mxu0 0.0
        %2564 = vmatpush1.msra.mxu0 0.0
        %2565 = vmatprep.subr.mxu0 0.0
        %2566 = vmatpush1.msra.mxu0 0.0
        %2567 = vmatprep.subr.mxu0 0.0
        %2568 = vmatpush1.msra.mxu0 0.0
        %2569 = vmatprep.subr.mxu0 0.0
        %2570 = vmatpush1.msra.mxu0 0.0
        %2571 = vmatprep.subr.mxu0 0.0
        %2572 = vmatpush1.msra.mxu0 0.0
        %2573 = vmatprep.subr.mxu0 0.0
        %2574 = vmatpush1.msra.mxu0 0.0
        %2575 = vmatprep.subr.mxu0 0.0
        %2576 = vmatpush1.msra.mxu0 0.0
        %2577 = vmatprep.subr.mxu0 0.0
        %2578 = vmatpush1.msra.mxu0 0.0
        %2579 = vmatprep.subr.mxu0 0.0
        %2580 = vmatpush1.msra.mxu0 0.0
        %2581 = vmatprep.subr.mxu0 0.0
        %2582 = vmatpush1.msra.mxu0 0.0
        %2583 = vmatprep.mubr.f32.mxu0 0.0
        %2584 = vmatmul.mubr.f32.gmra.mrb[0].mxu0 %v2502
        %v2585 = vpop.f32.mrb[0].mxu0
        %v2586 = vadd.f32 0.0, %v2585
        %v2587 = vpop.f32.mrb[0].mxu0
        %2588 = vdwg.mxu0
        %s2589 = scalar_lea.vmem %s8, 128
        %v2590 = vld [vmem:[%s2589] sm:$0xff]
        %v2591 = vld [vmem:[%s2589 + $0x8] sm:$0xff]
        %v2592 = vld [vmem:[%s2589 + $0x10] sm:$0xff]
        %v2593 = vld [vmem:[%s2589 + $0x18] sm:$0xff]
        %v2594 = vld [vmem:[%s2589 + $0x20] sm:$0xff]
        %v2595 = vld [vmem:[%s2589 + $0x28] sm:$0xff]
        %v2596 = vld [vmem:[%s2589 + $0x30] sm:$0xff]
        %v2597 = vld [vmem:[%s2589 + $0x38] sm:$0xff]
        %v2598 = vld [vmem:[%s2589 + $0x40] sm:$0xff]
        %v2599 = vld [vmem:[%s2589 + $0x48] sm:$0xff]
        %v2600 = vld [vmem:[%s2589 + $0x50] sm:$0xff]
        %v2601 = vld [vmem:[%s2589 + $0x58] sm:$0xff]
        %v2602 = vld [vmem:[%s2589 + $0x60] sm:$0xff]
        %v2603 = vld [vmem:[%s2589 + $0x68] sm:$0xff]
        %v2604 = vld [vmem:[%s2589 + $0x70] sm:$0xff]
        %v2605 = vld [vmem:[%s2589 + $0x78] sm:$0xff]
        %2606 = vmatprep.subr.mxu0 0.0
        %2607 = vmatpush1.msra.mxu0 %v2590
        %2608 = vmatprep.subr.mxu0 0.0
        %2609 = vmatpush1.msra.mxu0 %v2591
        %2610 = vmatprep.subr.mxu0 0.0
        %2611 = vmatpush1.msra.mxu0 %v2592
        %2612 = vmatprep.subr.mxu0 0.0
        %2613 = vmatpush1.msra.mxu0 %v2593
        %2614 = vmatprep.subr.mxu0 0.0
        %2615 = vmatpush1.msra.mxu0 %v2594
        %2616 = vmatprep.subr.mxu0 0.0
        %2617 = vmatpush1.msra.mxu0 %v2595
        %2618 = vmatprep.subr.mxu0 0.0
        %2619 = vmatpush1.msra.mxu0 %v2596
        %2620 = vmatprep.subr.mxu0 0.0
        %2621 = vmatpush1.msra.mxu0 %v2597
        %2622 = vmatprep.subr.mxu0 0.0
        %2623 = vmatpush1.msra.mxu0 %v2598
        %2624 = vmatprep.subr.mxu0 0.0
        %2625 = vmatpush1.msra.mxu0 %v2599
        %2626 = vmatprep.subr.mxu0 0.0
        %2627 = vmatpush1.msra.mxu0 %v2600
        %2628 = vmatprep.subr.mxu0 0.0
        %2629 = vmatpush1.msra.mxu0 %v2601
        %2630 = vmatprep.subr.mxu0 0.0
        %2631 = vmatpush1.msra.mxu0 %v2602
        %2632 = vmatprep.subr.mxu0 0.0
        %2633 = vmatpush1.msra.mxu0 %v2603
        %2634 = vmatprep.subr.mxu0 0.0
        %2635 = vmatpush1.msra.mxu0 %v2604
        %2636 = vmatprep.subr.mxu0 0.0
        %2637 = vmatpush1.msra.mxu0 %v2605
        %2638 = vmatprep.subr.mxu0 0.0
        %2639 = vmatpush1.msra.mxu0 0.0
        %2640 = vmatprep.subr.mxu0 0.0
        %2641 = vmatpush1.msra.mxu0 0.0
        %2642 = vmatprep.subr.mxu0 0.0
        %2643 = vmatpush1.msra.mxu0 0.0
        %2644 = vmatprep.subr.mxu0 0.0
        %2645 = vmatpush1.msra.mxu0 0.0
        %2646 = vmatprep.subr.mxu0 0.0
        %2647 = vmatpush1.msra.mxu0 0.0
        %2648 = vmatprep.subr.mxu0 0.0
        %2649 = vmatpush1.msra.mxu0 0.0
        %2650 = vmatprep.subr.mxu0 0.0
        %2651 = vmatpush1.msra.mxu0 0.0
        %2652 = vmatprep.subr.mxu0 0.0
        %2653 = vmatpush1.msra.mxu0 0.0
        %2654 = vmatprep.subr.mxu0 0.0
        %2655 = vmatpush1.msra.mxu0 0.0
        %2656 = vmatprep.subr.mxu0 0.0
        %2657 = vmatpush1.msra.mxu0 0.0
        %2658 = vmatprep.subr.mxu0 0.0
        %2659 = vmatpush1.msra.mxu0 0.0
        %2660 = vmatprep.subr.mxu0 0.0
        %2661 = vmatpush1.msra.mxu0 0.0
        %2662 = vmatprep.subr.mxu0 0.0
        %2663 = vmatpush1.msra.mxu0 0.0
        %2664 = vmatprep.subr.mxu0 0.0
        %2665 = vmatpush1.msra.mxu0 0.0
        %2666 = vmatprep.subr.mxu0 0.0
        %2667 = vmatpush1.msra.mxu0 0.0
        %2668 = vmatprep.subr.mxu0 0.0
        %2669 = vmatpush1.msra.mxu0 0.0
        %2670 = vmatprep.mubr.f32.mxu0 0.0
        %2671 = vmatmul.mubr.f32.gmra.mrb[0].mxu0 %v2502
        %v2672 = vpop.f32.mrb[0].mxu0
        %v2673 = vadd.f32 0.0, %v2672
        %v2674 = vpop.f32.mrb[0].mxu0
        %2675 = vdwg.mxu0
        %v2676 = vmax.f32 %v2586, %v2673
        %v2677 = vld [vmem:[%s10] sm:$0x1]
        %v2678 = vld [vmem:[%s9] sm:$0xff]
        %v2679 = vld [vmem:[%s9 + $0x8] sm:$0xff]
        %v2680 = vld [vmem:[%s9 + $0x10] sm:$0xff]
        %v2681 = vld [vmem:[%s9 + $0x18] sm:$0xff]
        %v2682 = vld [vmem:[%s9 + $0x20] sm:$0xff]
        %v2683 = vld [vmem:[%s9 + $0x28] sm:$0xff]
        %v2684 = vld [vmem:[%s9 + $0x30] sm:$0xff]
        %v2685 = vld [vmem:[%s9 + $0x38] sm:$0xff]
        %v2687 = vsel %vm431, %v2676, 0
        %2689 = vmatprep.subr.mxu0 0.0
        %2690 = vmatpush1.msra.mxu0 %v2678
        %2691 = vmatprep.subr.mxu0 0.0
        %2692 = vmatpush1.msra.mxu0 %v2679
        %2693 = vmatprep.subr.mxu0 0.0
        %2694 = vmatpush1.msra.mxu0 %v2680
        %2695 = vmatprep.subr.mxu0 0.0
        %2696 = vmatpush1.msra.mxu0 %v2681
        %2697 = vmatprep.subr.mxu0 0.0
        %2698 = vmatpush1.msra.mxu0 %v2682
        %2699 = vmatprep.subr.mxu0 0.0
        %2700 = vmatpush1.msra.mxu0 %v2683
        %2701 = vmatprep.subr.mxu0 0.0
        %2702 = vmatpush1.msra.mxu0 %v2684
        %2703 = vmatprep.subr.mxu0 0.0
        %2704 = vmatpush1.msra.mxu0 %v2685
        %2705 = vmatprep.subr.mxu0 0.0
        %2706 = vmatpush1.msra.mxu0 0.0
        %2707 = vmatprep.subr.mxu0 0.0
        %2708 = vmatpush1.msra.mxu0 0.0
        %2709 = vmatprep.subr.mxu0 0.0
        %2710 = vmatpush1.msra.mxu0 0.0
        %2711 = vmatprep.subr.mxu0 0.0
        %2712 = vmatpush1.msra.mxu0 0.0
        %2713 = vmatprep.subr.mxu0 0.0
        %2714 = vmatpush1.msra.mxu0 0.0
        %2715 = vmatprep.subr.mxu0 0.0
        %2716 = vmatpush1.msra.mxu0 0.0
        %2717 = vmatprep.subr.mxu0 0.0
        %2718 = vmatpush1.msra.mxu0 0.0
        %2719 = vmatprep.subr.mxu0 0.0
        %2720 = vmatpush1.msra.mxu0 0.0
        %2721 = vmatprep.subr.mxu0 0.0
        %2722 = vmatpush1.msra.mxu0 0.0
        %2723 = vmatprep.subr.mxu0 0.0
        %2724 = vmatpush1.msra.mxu0 0.0
        %2725 = vmatprep.subr.mxu0 0.0
        %2726 = vmatpush1.msra.mxu0 0.0
        %2727 = vmatprep.subr.mxu0 0.0
        %2728 = vmatpush1.msra.mxu0 0.0
        %2729 = vmatprep.subr.mxu0 0.0
        %2730 = vmatpush1.msra.mxu0 0.0
        %2731 = vmatprep.subr.mxu0 0.0
        %2732 = vmatpush1.msra.mxu0 0.0
        %2733 = vmatprep.subr.mxu0 0.0
        %2734 = vmatpush1.msra.mxu0 0.0
        %2735 = vmatprep.subr.mxu0 0.0
        %2736 = vmatpush1.msra.mxu0 0.0
        %2737 = vmatprep.subr.mxu0 0.0
        %2738 = vmatpush1.msra.mxu0 0.0
        %2739 = vmatprep.subr.mxu0 0.0
        %2740 = vmatpush1.msra.mxu0 0.0
        %2741 = vmatprep.subr.mxu0 0.0
        %2742 = vmatpush1.msra.mxu0 0.0
        %2743 = vmatprep.subr.mxu0 0.0
        %2744 = vmatpush1.msra.mxu0 0.0
        %2745 = vmatprep.subr.mxu0 0.0
        %2746 = vmatpush1.msra.mxu0 0.0
        %2747 = vmatprep.subr.mxu0 0.0
        %2748 = vmatpush1.msra.mxu0 0.0
        %2749 = vmatprep.subr.mxu0 0.0
        %2750 = vmatpush1.msra.mxu0 0.0
        %2751 = vmatprep.subr.mxu0 0.0
        %2752 = vmatpush1.msra.mxu0 0.0
        %2753 = vmatprep.mubr.f32.mxu0 0.0
        %2754 = vmatmul.mubr.f32.gmra.mrb[0].mxu0 %v2687
        %v2755 = vpop.f32.mrb[0].mxu0
        %v2756 = vadd.f32 0.0, %v2755
        %v2757 = vpop.f32.mrb[0].mxu0
        %2758 = vdwg.mxu0
        %v2759 = vadd.f32 %v2677, %v2756
        %s2760 = scalar_lea.vmem %s9, 64
        %v2761 = vld [vmem:[%s2760] sm:$0xff]
        %v2762 = vld [vmem:[%s2760 + $0x8] sm:$0xff]
        %v2763 = vld [vmem:[%s2760 + $0x10] sm:$0xff]
        %v2764 = vld [vmem:[%s2760 + $0x18] sm:$0xff]
        %v2765 = vld [vmem:[%s2760 + $0x20] sm:$0xff]
        %v2766 = vld [vmem:[%s2760 + $0x28] sm:$0xff]
        %v2767 = vld [vmem:[%s2760 + $0x30] sm:$0xff]
        %v2768 = vld [vmem:[%s2760 + $0x38] sm:$0xff]
        %v2769 = vrot.slane %v2676, 1
        %v2770 = vsel %vm431, %v2769, 0
        %2772 = vmatprep.subr.mxu0 0.0
        %2773 = vmatpush1.msra.mxu0 %v2761
        %2774 = vmatprep.subr.mxu0 0.0
        %2775 = vmatpush1.msra.mxu0 %v2762
        %2776 = vmatprep.subr.mxu0 0.0
        %2777 = vmatpush1.msra.mxu0 %v2763
        %2778 = vmatprep.subr.mxu0 0.0
        %2779 = vmatpush1.msra.mxu0 %v2764
        %2780 = vmatprep.subr.mxu0 0.0
        %2781 = vmatpush1.msra.mxu0 %v2765
        %2782 = vmatprep.subr.mxu0 0.0
        %2783 = vmatpush1.msra.mxu0 %v2766
        %2784 = vmatprep.subr.mxu0 0.0
        %2785 = vmatpush1.msra.mxu0 %v2767
        %2786 = vmatprep.subr.mxu0 0.0
        %2787 = vmatpush1.msra.mxu0 %v2768
        %2788 = vmatprep.subr.mxu0 0.0
        %2789 = vmatpush1.msra.mxu0 0.0
        %2790 = vmatprep.subr.mxu0 0.0
        %2791 = vmatpush1.msra.mxu0 0.0
        %2792 = vmatprep.subr.mxu0 0.0
        %2793 = vmatpush1.msra.mxu0 0.0
        %2794 = vmatprep.subr.mxu0 0.0
        %2795 = vmatpush1.msra.mxu0 0.0
        %2796 = vmatprep.subr.mxu0 0.0
        %2797 = vmatpush1.msra.mxu0 0.0
        %2798 = vmatprep.subr.mxu0 0.0
        %2799 = vmatpush1.msra.mxu0 0.0
        %2800 = vmatprep.subr.mxu0 0.0
        %2801 = vmatpush1.msra.mxu0 0.0
        %2802 = vmatprep.subr.mxu0 0.0
        %2803 = vmatpush1.msra.mxu0 0.0
        %2804 = vmatprep.subr.mxu0 0.0
        %2805 = vmatpush1.msra.mxu0 0.0
        %2806 = vmatprep.subr.mxu0 0.0
        %2807 = vmatpush1.msra.mxu0 0.0
        %2808 = vmatprep.subr.mxu0 0.0
        %2809 = vmatpush1.msra.mxu0 0.0
        %2810 = vmatprep.subr.mxu0 0.0
        %2811 = vmatpush1.msra.mxu0 0.0
        %2812 = vmatprep.subr.mxu0 0.0
        %2813 = vmatpush1.msra.mxu0 0.0
        %2814 = vmatprep.subr.mxu0 0.0
        %2815 = vmatpush1.msra.mxu0 0.0
        %2816 = vmatprep.subr.mxu0 0.0
        %2817 = vmatpush1.msra.mxu0 0.0
        %2818 = vmatprep.subr.mxu0 0.0
        %2819 = vmatpush1.msra.mxu0 0.0
        %2820 = vmatprep.subr.mxu0 0.0
        %2821 = vmatpush1.msra.mxu0 0.0
        %2822 = vmatprep.subr.mxu0 0.0
        %2823 = vmatpush1.msra.mxu0 0.0
        %2824 = vmatprep.subr.mxu0 0.0
        %2825 = vmatpush1.msra.mxu0 0.0
        %2826 = vmatprep.subr.mxu0 0.0
        %2827 = vmatpush1.msra.mxu0 0.0
        %2828 = vmatprep.subr.mxu0 0.0
        %2829 = vmatpush1.msra.mxu0 0.0
        %2830 = vmatprep.subr.mxu0 0.0
        %2831 = vmatpush1.msra.mxu0 0.0
        %2832 = vmatprep.subr.mxu0 0.0
        %2833 = vmatpush1.msra.mxu0 0.0
        %2834 = vmatprep.subr.mxu0 0.0
        %2835 = vmatpush1.msra.mxu0 0.0
        %2836 = vmatprep.mubr.f32.mxu0 0.0
        %2837 = vmatmul.mubr.f32.gmra.mrb[0].mxu0 %v2770
        %v2838 = vpop.f32.mrb[0].mxu0
        %v2839 = vadd.f32 0.0, %v2838
        %v2840 = vpop.f32.mrb[0].mxu0
        %2841 = vdwg.mxu0
        %v2842 = vadd.f32 %v2759, %v2839
        %s2843 = scalar_lea.vmem %s9, 128
        %v2844 = vld [vmem:[%s2843] sm:$0xff]
        %v2845 = vld [vmem:[%s2843 + $0x8] sm:$0xff]
        %v2846 = vld [vmem:[%s2843 + $0x10] sm:$0xff]
        %v2847 = vld [vmem:[%s2843 + $0x18] sm:$0xff]
        %v2848 = vld [vmem:[%s2843 + $0x20] sm:$0xff]
        %v2849 = vld [vmem:[%s2843 + $0x28] sm:$0xff]
        %v2850 = vld [vmem:[%s2843 + $0x30] sm:$0xff]
        %v2851 = vld [vmem:[%s2843 + $0x38] sm:$0xff]
        %v2852 = vrot.slane %v2676, 2
        %v2853 = vsel %vm431, %v2852, 0
        %2855 = vmatprep.subr.mxu0 0.0
        %2856 = vmatpush1.msra.mxu0 %v2844
        %2857 = vmatprep.subr.mxu0 0.0
        %2858 = vmatpush1.msra.mxu0 %v2845
        %2859 = vmatprep.subr.mxu0 0.0
        %2860 = vmatpush1.msra.mxu0 %v2846
        %2861 = vmatprep.subr.mxu0 0.0
        %2862 = vmatpush1.msra.mxu0 %v2847
        %2863 = vmatprep.subr.mxu0 0.0
        %2864 = vmatpush1.msra.mxu0 %v2848
        %2865 = vmatprep.subr.mxu0 0.0
        %2866 = vmatpush1.msra.mxu0 %v2849
        %2867 = vmatprep.subr.mxu0 0.0
        %2868 = vmatpush1.msra.mxu0 %v2850
        %2869 = vmatprep.subr.mxu0 0.0
        %2870 = vmatpush1.msra.mxu0 %v2851
        %2871 = vmatprep.subr.mxu0 0.0
        %2872 = vmatpush1.msra.mxu0 0.0
        %2873 = vmatprep.subr.mxu0 0.0
        %2874 = vmatpush1.msra.mxu0 0.0
        %2875 = vmatprep.subr.mxu0 0.0
        %2876 = vmatpush1.msra.mxu0 0.0
        %2877 = vmatprep.subr.mxu0 0.0
        %2878 = vmatpush1.msra.mxu0 0.0
        %2879 = vmatprep.subr.mxu0 0.0
        %2880 = vmatpush1.msra.mxu0 0.0
        %2881 = vmatprep.subr.mxu0 0.0
        %2882 = vmatpush1.msra.mxu0 0.0
        %2883 = vmatprep.subr.mxu0 0.0
        %2884 = vmatpush1.msra.mxu0 0.0
        %2885 = vmatprep.subr.mxu0 0.0
        %2886 = vmatpush1.msra.mxu0 0.0
        %2887 = vmatprep.subr.mxu0 0.0
        %2888 = vmatpush1.msra.mxu0 0.0
        %2889 = vmatprep.subr.mxu0 0.0
        %2890 = vmatpush1.msra.mxu0 0.0
        %2891 = vmatprep.subr.mxu0 0.0
        %2892 = vmatpush1.msra.mxu0 0.0
        %2893 = vmatprep.subr.mxu0 0.0
        %2894 = vmatpush1.msra.mxu0 0.0
        %2895 = vmatprep.subr.mxu0 0.0
        %2896 = vmatpush1.msra.mxu0 0.0
        %2897 = vmatprep.subr.mxu0 0.0
        %2898 = vmatpush1.msra.mxu0 0.0
        %2899 = vmatprep.subr.mxu0 0.0
        %2900 = vmatpush1.msra.mxu0 0.0
        %2901 = vmatprep.subr.mxu0 0.0
        %2902 = vmatpush1.msra.mxu0 0.0
        %2903 = vmatprep.subr.mxu0 0.0
        %2904 = vmatpush1.msra.mxu0 0.0
        %2905 = vmatprep.subr.mxu0 0.0
        %2906 = vmatpush1.msra.mxu0 0.0
        %2907 = vmatprep.subr.mxu0 0.0
        %2908 = vmatpush1.msra.mxu0 0.0
        %2909 = vmatprep.subr.mxu0 0.0
        %2910 = vmatpush1.msra.mxu0 0.0
        %2911 = vmatprep.subr.mxu0 0.0
        %2912 = vmatpush1.msra.mxu0 0.0
        %2913 = vmatprep.subr.mxu0 0.0
        %2914 = vmatpush1.msra.mxu0 0.0
        %2915 = vmatprep.subr.mxu0 0.0
        %2916 = vmatpush1.msra.mxu0 0.0
        %2917 = vmatprep.subr.mxu0 0.0
        %2918 = vmatpush1.msra.mxu0 0.0
        %2919 = vmatprep.mubr.f32.mxu0 0.0
        %2920 = vmatmul.mubr.f32.gmra.mrb[0].mxu0 %v2853
        %v2921 = vpop.f32.mrb[0].mxu0
        %v2922 = vadd.f32 0.0, %v2921
        %v2923 = vpop.f32.mrb[0].mxu0
        %2924 = vdwg.mxu0
        %v2925 = vadd.f32 %v2842, %v2922
        %s2926 = scalar_lea.vmem %s9, 192
        %v2927 = vld [vmem:[%s2926] sm:$0xff]
        %v2928 = vld [vmem:[%s2926 + $0x8] sm:$0xff]
        %v2929 = vld [vmem:[%s2926 + $0x10] sm:$0xff]
        %v2930 = vld [vmem:[%s2926 + $0x18] sm:$0xff]
        %v2931 = vld [vmem:[%s2926 + $0x20] sm:$0xff]
        %v2932 = vld [vmem:[%s2926 + $0x28] sm:$0xff]
        %v2933 = vld [vmem:[%s2926 + $0x30] sm:$0xff]
        %v2934 = vld [vmem:[%s2926 + $0x38] sm:$0xff]
        %v2935 = vrot.slane %v2676, 3
        %v2936 = vsel %vm431, %v2935, 0
        %2938 = vmatprep.subr.mxu0 0.0
        %2939 = vmatpush1.msra.mxu0 %v2927
        %2940 = vmatprep.subr.mxu0 0.0
        %2941 = vmatpush1.msra.mxu0 %v2928
        %2942 = vmatprep.subr.mxu0 0.0
        %2943 = vmatpush1.msra.mxu0 %v2929
        %2944 = vmatprep.subr.mxu0 0.0
        %2945 = vmatpush1.msra.mxu0 %v2930
        %2946 = vmatprep.subr.mxu0 0.0
        %2947 = vmatpush1.msra.mxu0 %v2931
        %2948 = vmatprep.subr.mxu0 0.0
        %2949 = vmatpush1.msra.mxu0 %v2932
        %2950 = vmatprep.subr.mxu0 0.0
        %2951 = vmatpush1.msra.mxu0 %v2933
        %2952 = vmatprep.subr.mxu0 0.0
        %2953 = vmatpush1.msra.mxu0 %v2934
        %2954 = vmatprep.subr.mxu0 0.0
        %2955 = vmatpush1.msra.mxu0 0.0
        %2956 = vmatprep.subr.mxu0 0.0
        %2957 = vmatpush1.msra.mxu0 0.0
        %2958 = vmatprep.subr.mxu0 0.0
        %2959 = vmatpush1.msra.mxu0 0.0
        %2960 = vmatprep.subr.mxu0 0.0
        %2961 = vmatpush1.msra.mxu0 0.0
        %2962 = vmatprep.subr.mxu0 0.0
        %2963 = vmatpush1.msra.mxu0 0.0
        %2964 = vmatprep.subr.mxu0 0.0
        %2965 = vmatpush1.msra.mxu0 0.0
        %2966 = vmatprep.subr.mxu0 0.0
        %2967 = vmatpush1.msra.mxu0 0.0
        %2968 = vmatprep.subr.mxu0 0.0
        %2969 = vmatpush1.msra.mxu0 0.0
        %2970 = vmatprep.subr.mxu0 0.0
        %2971 = vmatpush1.msra.mxu0 0.0
        %2972 = vmatprep.subr.mxu0 0.0
        %2973 = vmatpush1.msra.mxu0 0.0
        %2974 = vmatprep.subr.mxu0 0.0
        %2975 = vmatpush1.msra.mxu0 0.0
        %2976 = vmatprep.subr.mxu0 0.0
        %2977 = vmatpush1.msra.mxu0 0.0
        %2978 = vmatprep.subr.mxu0 0.0
        %2979 = vmatpush1.msra.mxu0 0.0
        %2980 = vmatprep.subr.mxu0 0.0
        %2981 = vmatpush1.msra.mxu0 0.0
        %2982 = vmatprep.subr.mxu0 0.0
        %2983 = vmatpush1.msra.mxu0 0.0
        %2984 = vmatprep.subr.mxu0 0.0
        %2985 = vmatpush1.msra.mxu0 0.0
        %2986 = vmatprep.subr.mxu0 0.0
        %2987 = vmatpush1.msra.mxu0 0.0
        %2988 = vmatprep.subr.mxu0 0.0
        %2989 = vmatpush1.msra.mxu0 0.0
        %2990 = vmatprep.subr.mxu0 0.0
        %2991 = vmatpush1.msra.mxu0 0.0
        %2992 = vmatprep.subr.mxu0 0.0
        %2993 = vmatpush1.msra.mxu0 0.0
        %2994 = vmatprep.subr.mxu0 0.0
        %2995 = vmatpush1.msra.mxu0 0.0
        %2996 = vmatprep.subr.mxu0 0.0
        %2997 = vmatpush1.msra.mxu0 0.0
        %2998 = vmatprep.subr.mxu0 0.0
        %2999 = vmatpush1.msra.mxu0 0.0
        %3000 = vmatprep.subr.mxu0 0.0
        %3001 = vmatpush1.msra.mxu0 0.0
        %3002 = vmatprep.mubr.f32.mxu0 0.0
        %3003 = vmatmul.mubr.f32.gmra.mrb[0].mxu0 %v2936
        %v3004 = vpop.f32.mrb[0].mxu0
        %v3005 = vadd.f32 0.0, %v3004
        %v3006 = vpop.f32.mrb[0].mxu0
        %3007 = vdwg.mxu0
        %v3008 = vadd.f32 %v2925, %v3005
        %vm3009 = vcmask 73728
        %v3010 = vsel %vm3009, %v3008, -inf
        %3011 = vmax.xlane.f32.xlu0 %v3010
        %v3012 = vpop.xlane.xlu0 %3011
        %v3013 = vsub.f32 %v3008, %v3012
        %v3014 = vmul.f32 %v3013, 1.442695
        %v3015 = vpow.pop %v3014
        %v3016 = vsel %vm3009, %v3015, 0.0
        %3017 = vadd.xlane.f32.xlu0 %v3016
        %v3018 = vpop.xlane.xlu0 %3017
        %v3019 = vlog2.pop %v3018
        %v3020 = vmul.f32 %v3019, 0.6931472
        %v3021 = vsub.f32 %v3013, %v3020
        %3022 = vst.msk [vmem:[%s378] sm:$0x1] %vm3009, %v3021
        %s3023 = sand.u32 %s269, 1
        %s3024 = scalar_lea.sflag [#allocation5], %s3023
        %s3025 = sand.u32 %s269, 1
        %s3026 = scalar_lea.vmem [#allocation4], %s3025
        // Predicated region
        $region65: #{project_network_forward.1} parent=63 // pred_check
          %p3027 = pneg %p279
        $region66: #{project_network_forward.1} parent=63 // pred_check_branch
          %3029 = sbr.rel (%p3027) target = $region68
        $region67: #{project_network_forward.1} parent=63 // pred_region
          %s3031 = ssub.s32 16, 16
          %3032 = vsyncadd %s3024, %s3031
          %s3033 = smul.addr %s25, 16
          %s3034 = scalar_lea.hbm %s11, %s3033
          %s3036 = sshll.u32 %s3026, 4
          %s3037 = int_to_ptr.vmem [resolvable:$true] %s3036
          %3039 = dma.vmem_to_hbm [thread:$0]  %s3037, 16, %s3034, %s3024
        $region68: #{project_network_forward.1} parent=63 // pred_fallthru
          _
      $region64: #{project_network_forward.1} parent=5 // pred_fallthru
        _
      %p3040 = scmp.le.s32.totalorder 2, %s20
      // Predicated region
      $region69: #{project_network_forward.1} parent=5 // pred_check
        %p3041 = pneg %p3040
      $region70: #{project_network_forward.1} parent=5 // pred_check_branch
        %3043 = sbr.rel (%p3041) target = $region72
      $region71: #{project_network_forward.1} parent=5 // pred_region
        %s3044 = ssub.s32 %s20, 2
        // Predicated region
        $region73: #{project_network_forward.1} parent=71 // pred_check
          %p3045 = pneg %p285
        $region74: #{project_network_forward.1} parent=71 // pred_check_branch
          %3047 = sbr.rel (%p3045) target = $region76
        $region75: #{project_network_forward.1} parent=71 // pred_region
          %s3048 = sand.u32 %s270, 1
          %s3049 = scalar_lea.sflag [#allocation5], %s3048
          %s3050 = sand.u32 %s270, 1
          %s3051 = scalar_lea.vmem [#allocation4], %s3050
          %3052 = dma.done %s3049, 16
        $region76: #{project_network_forward.1} parent=71 // pred_fallthru
          _
      $region72: #{project_network_forward.1} parent=5 // pred_fallthru
        _
    $region6: #{project_network_forward.1} parent=1 // loop_footer
      %s24 = sadd.s32 1, %s20
    $region7: #{project_network_forward.1} parent=1 // loop_footer_branch
      %19 = sbr.rel target = $region3
    $region8: #{project_network_forward.1} parent=1 // loop_exit
      _
    %3053 = vsyncpa [#allocation5], 1
    %s3054 = scalar_lea.sflag [#allocation5], 1
    %3055 = vsyncpa %s3054, 1

</llo_original>
